<compile_context>
chip_gen: v7x
topology: tpu7x:2x2x1
jax: 0.10.0
libtpu: 0.0.40
codegen_flags: <defaults>
</compile_context>

<pallas_src>
import numpy as np
import jax
import jax.numpy as jnp
from jax.experimental import pallas as pl
from jax.experimental.pallas import tpu as pltpu

_VMEM_LIMIT = 32 * 1024 * 1024   # safe on v5e/v6e/v7x
_NEG_BIG = -1e30                 # "-inf" (kept in f32) for padded softmax lanes


def _round_up(x, m):
    return ((x + m - 1) // m) * m


def _gather_mats(tb, gh, gw, k, s, dst_batch_major=True):
    """Per-tap 0/1 gather matrices for in-kernel im2col-by-matmul.

    Shape (k*k, tb*gh*gw, tb*oh*ow).  Source columns are ordered (b, h, w);
    destination columns are (b, oh, ow) if dst_batch_major else (oh, ow, b).
    """
    oh = (gh - k) // s + 1
    ow = (gw - k) // s + 1
    g = np.zeros((k * k, tb * gh * gw, tb * oh * ow), np.float32)
    for i in range(k):
        for j in range(k):
            t = i * k + j
            for b in range(tb):
                for p in range(oh):
                    for q in range(ow):
                        src = b * gh * gw + (p * s + i) * gw + (q * s + j)
                        if dst_batch_major:
                            dst = b * oh * ow + p * ow + q
                        else:
                            dst = (p * ow + q) * tb + b
                        g[t, src, dst] = 1.0
    return g


# ----------------------------------------------------------------------------
# Fused kernel: conv1+ReLU, conv2+ReLU, conv3+ReLU, fc1+ReLU, fc2, softmax.
# One grid step processes `tb` images end to end; all weights resident.
# ----------------------------------------------------------------------------
def _fused_actor_kernel(xp_ref, g1_ref, g2_ref, g3_ref,
                        w1_ref, b1_ref, w2_ref, b2_ref, w3_ref, b3_ref,
                        wf1_ref, bf1_ref, wf2_ref, bf2_ref, o_ref):
    f32, bf16 = jnp.float32, jnp.bfloat16
    tb = o_ref.shape[1]

    def conv_relu(act, g_ref, w_ref, b_ref):
        # act: (Cin, M_in) bf16.  Per-tap gather matmuls build the im2col
        # patches entirely in VMEM/vregs (exact 0/1 selection of bf16 values).
        taps = g_ref.shape[0]
        cols = [jnp.dot(act, g_ref[t], preferred_element_type=f32).astype(bf16)
                for t in range(taps)]
        patches = jnp.concatenate(cols, axis=0)             # (taps*Cin, M_out)
        out = jnp.dot(w_ref[...], patches, preferred_element_type=f32)
        return jnp.maximum(out + b_ref[...], 0.0).astype(bf16)   # (OutC, M_out)

    a0 = xp_ref[0]                                   # (C*16, tb*Gh*Gw) bf16
    a1 = conv_relu(a0, g1_ref, w1_ref, b1_ref)       # (32, tb*OH1*OW1)
    a2 = conv_relu(a1, g2_ref, w2_ref, b2_ref)       # (64, tb*OH2*OW2)
    a3 = conv_relu(a2, g3_ref, w3_ref, b3_ref)       # (64, OH3*OW3*tb), cols (p, b)

    # fc1 + ReLU.  Dropout(0.5) is inference-mode identity (no-op here).
    ohw = wf1_ref.shape[0]                           # conv3 spatial positions
    h = jnp.dot(wf1_ref[0], a3[:, 0:tb], preferred_element_type=f32)
    for p in range(1, ohw):
        h = h + jnp.dot(wf1_ref[p], a3[:, p * tb:(p + 1) * tb],
                        preferred_element_type=f32)
    h = jnp.maximum(h + bf1_ref[...], 0.0).astype(bf16)          # (512, tb)

    # fc2 + softmax (padded action lanes carry a -1e30 f32 bias -> prob 0).
    logits_t = jnp.dot(wf2_ref[...], h, preferred_element_type=f32) + bf2_ref[...]
    logits = logits_t.T                                           # (tb, NA_pad)
    m = jnp.max(logits, axis=-1, keepdims=True)
    e = jnp.exp(logits - m)
    s = jnp.sum(e, axis=-1, keepdims=True)
    o_ref[0] = e * pl.reciprocal(s, approx=False)


# ----------------------------------------------------------------------------
# Wrapper: byte-preserving layout prep in XLA + one fused pallas_call
# ----------------------------------------------------------------------------
def actor_forward(params, x, *, tile_b=None):
    """x: (B, C, H, W) f32 (PyTorch NCHW) -> (B, num_actions) f32 softmax."""
    B, C, H, W = x.shape
    OH1, OW1 = (H - 8) // 4 + 1, (W - 8) // 4 + 1
    OH2, OW2 = (OH1 - 4) // 2 + 1, (OW1 - 4) // 2 + 1
    OH3, OW3 = OH2 - 2, OW2 - 2
    Gh, Gw = OH1 + 1, OW1 + 1            # space-to-depth (4x4 block) grid
    ohw3 = OH3 * OW3
    f32, bf16 = jnp.float32, jnp.bfloat16

    NA = params["wfc2"].shape[1]
    NA_pad = _round_up(max(NA, 128), 128)

    # >= 2 grid steps whenever B >= 2 (lets a v7x megacore use both cores).
    tb = tile_b if tile_b is not None else min(8, max(1, B // 2))
    B_pad = _round_up(B, tb)
    nsteps = B_pad // tb
    if B_pad != B:
        x = jnp.pad(x, ((0, B_pad - B), (0, 0), (0, 0), (0, 0)))

    # ---- byte-preserving space-to-depth: NCHW -> (step, C*16, tb*Gh*Gw) ----
    # xp[s, c*16+a*4+d, lb*Gh*Gw+gh*Gw+gw] = x[s*tb+lb, c, 4*gh+a, 4*gw+d]
    xc = x[:, :, :4 * Gh, :4 * Gw].astype(bf16)
    xp = xc.reshape(nsteps, tb, C, Gh, 4, Gw, 4)
    xp = xp.transpose(0, 2, 4, 6, 1, 3, 5).reshape(nsteps, C * 16, tb * Gh * Gw)

    # ---- tiny constant gather matrices (built once at trace time) ----------
    g1 = jnp.asarray(_gather_mats(tb, Gh, Gw, 2, 1), bf16)       # conv1 as 2x2/s1
    g2 = jnp.asarray(_gather_mats(tb, OH1, OW1, 4, 2), bf16)     # conv2 4x4/s2
    g3 = jnp.asarray(_gather_mats(tb, OH2, OW2, 3, 1, dst_batch_major=False), bf16)

    # ---- weights, re-ordered to match the in-kernel patch row order --------
    oc1, cin = params["w1"].shape[:2]
    w1r = (params["w1"].reshape(oc1, cin, 2, 4, 2, 4)
           .transpose(0, 2, 4, 1, 3, 5).reshape(oc1, 4 * cin * 16).astype(bf16))
    oc2, c2, k2, _ = params["w2"].shape
    w2r = params["w2"].transpose(0, 2, 3, 1).reshape(oc2, k2 * k2 * c2).astype(bf16)
    oc3, c3, k3, _ = params["w3"].shape
    w3r = params["w3"].transpose(0, 2, 3, 1).reshape(oc3, k3 * k3 * c3).astype(bf16)
    b1c = params["b1"].astype(f32).reshape(-1, 1)
    b2c = params["b2"].astype(f32).reshape(-1, 1)
    b3c = params["b3"].astype(f32).reshape(-1, 1)

    n1 = params["wfc1"].shape[1]
    wf1t = params["wfc1"].reshape(oc3, ohw3, n1).transpose(1, 2, 0).astype(bf16)
    bf1c = params["bfc1"].astype(f32).reshape(-1, 1)                       # (512, 1)
    wf2t = jnp.pad(params["wfc2"], ((0, 0), (0, NA_pad - NA))).T.astype(bf16)
    bf2c = jnp.pad(params["bfc2"].astype(f32), (0, NA_pad - NA),
                   constant_values=_NEG_BIG).reshape(-1, 1)                # f32!

    def _resident_spec(arr):
        zeros = (0,) * arr.ndim
        return pl.BlockSpec(arr.shape, lambda i: zeros)

    out = pl.pallas_call(
        _fused_actor_kernel,
        out_shape=jax.ShapeDtypeStruct((nsteps, tb, NA_pad), jnp.float32),
        grid=(nsteps,),
        in_specs=[
            pl.BlockSpec((1, C * 16, tb * Gh * Gw), lambda i: (i, 0, 0)),
            _resident_spec(g1), _resident_spec(g2), _resident_spec(g3),
            _resident_spec(w1r), _resident_spec(b1c),
            _resident_spec(w2r), _resident_spec(b2c),
            _resident_spec(w3r), _resident_spec(b3c),
            _resident_spec(wf1t), _resident_spec(bf1c),
            _resident_spec(wf2t), _resident_spec(bf2c),
        ],
        out_specs=pl.BlockSpec((1, tb, NA_pad), lambda i: (i, 0, 0)),
        compiler_params=pltpu.CompilerParams(
            dimension_semantics=("parallel",),
            vmem_limit_bytes=_VMEM_LIMIT),
    )(xp, g1, g2, g3, w1r, b1c, w2r, b2c, w3r, b3c, wf1t, bf1c, wf2t, bf2c)

    return out.reshape(B_pad, NA_pad)[:B, :NA]


# ----------------------------------------------------------------------------
# Pure-JAX reference (f32) for correctness checking
# ----------------------------------------------------------------------------
def actor_forward_reference(params, x):
    def conv(y, w, b, stride):
        y = jax.lax.conv_general_dilated(
            y, w, window_strides=(stride, stride), padding="VALID",
            dimension_numbers=("NCHW", "OIHW", "NCHW"))
        return jax.nn.relu(y + b.reshape(1, -1, 1, 1))

    y = conv(x, params["w1"], params["b1"], 4)
    y = conv(y, params["w2"], params["b2"], 2)
    y = conv(y, params["w3"], params["b3"], 1)
    y = y.reshape(y.shape[0], -1)
    h = jax.nn.relu(y @ params["wfc1"] + params["bfc1"])
    logits = h @ params["wfc2"] + params["bfc2"]
    return jax.nn.softmax(logits, axis=-1)


# ----------------------------------------------------------------------------
# Deterministic parameter init (uniform(-1/sqrt(fan_in), 1/sqrt(fan_in)))
# ----------------------------------------------------------------------------
def init_params(key, obs_shape, num_actions, conv_out_size):
    c, _, _ = obs_shape
    keys = jax.random.split(key, 10)

    def uni(k, shape, fan_in):
        bound = 1.0 / jnp.sqrt(jnp.float32(fan_in))
        return jax.random.uniform(k, shape, jnp.float32, -bound, bound)

    return {
        "w1": uni(keys[0], (32, c, 8, 8), c * 8 * 8),
        "b1": uni(keys[1], (32,), c * 8 * 8),
        "w2": uni(keys[2], (64, 32, 4, 4), 32 * 4 * 4),
        "b2": uni(keys[3], (64,), 32 * 4 * 4),
        "w3": uni(keys[4], (64, 64, 3, 3), 64 * 3 * 3),
        "b3": uni(keys[5], (64,), 64 * 3 * 3),
        "wfc1": uni(keys[6], (conv_out_size, 512), conv_out_size),
        "bfc1": uni(keys[7], (512,), conv_out_size),
        "wfc2": uni(keys[8], (512, num_actions), 512),
        "bfc2": uni(keys[9], (num_actions,), 512),
    }


if __name__ == "__main__":
    # obs = (C=4, H=36, W=36): conv stack gives 8x8 -> 3x3 -> 1x1, so
    # conv_out_size = 64 (matches the module's _get_conv_out).
    B, C, H, W = 2, 4, 36, 36
    NUM_ACTIONS = 6

    oh = (H - 8) // 4 + 1
    oh = (oh - 4) // 2 + 1
    oh = (oh - 3) // 1 + 1
    conv_out_size = 64 * oh * oh  # = 64

    key = jax.random.PRNGKey(0)
    pkey, xkey = jax.random.split(key)
    params = init_params(pkey, (C, H, W), NUM_ACTIONS, conv_out_size)
    x = jax.random.uniform(xkey, (B, C, H, W), jnp.float32)

    fwd = jax.jit(actor_forward)
    probs = fwd(params, x)
    jax.block_until_ready(probs)

    ref = jax.jit(actor_forward_reference)(params, x)
    jax.block_until_ready(ref)

    assert probs.shape == (B, NUM_ACTIONS)
    assert bool(jnp.all(jnp.isfinite(probs)))
    assert bool(jnp.all(probs >= 0.0))
    assert bool(jnp.allclose(jnp.sum(probs, axis=-1), 1.0, atol=1e-5))
    # bf16 MXU inputs vs f32 reference: allow a loose absolute tolerance.
    assert bool(jnp.allclose(probs, ref, atol=2e-2))
    print("KERNEL_OK")
</pallas_src>

<mosaic_0001>
module attributes {stable_mosaic.version = 11 : i64} {
  func.func @_fused_actor_kernel(%arg0: i32, %arg1: memref<1x64x81xbf16, #tpu.memory_space<vmem>>, %arg2: memref<4x81x64xbf16, #tpu.memory_space<vmem>>, %arg3: memref<16x64x9xbf16, #tpu.memory_space<vmem>>, %arg4: memref<9x9x1xbf16, #tpu.memory_space<vmem>>, %arg5: memref<32x256xbf16, #tpu.memory_space<vmem>>, %arg6: memref<32x1xf32, #tpu.memory_space<vmem>>, %arg7: memref<64x512xbf16, #tpu.memory_space<vmem>>, %arg8: memref<64x1xf32, #tpu.memory_space<vmem>>, %arg9: memref<64x576xbf16, #tpu.memory_space<vmem>>, %arg10: memref<64x1xf32, #tpu.memory_space<vmem>>, %arg11: memref<1x512x64xbf16, #tpu.memory_space<vmem>>, %arg12: memref<512x1xf32, #tpu.memory_space<vmem>>, %arg13: memref<128x512xbf16, #tpu.memory_space<vmem>>, %arg14: memref<128x1xf32, #tpu.memory_space<vmem>>, %arg15: memref<1x1x128xf32, #tpu.memory_space<vmem>>) attributes {dimension_semantics = [#tpu.dimension_semantics<parallel>], iteration_bounds = array<i64: 2>, scalar_prefetch = 0 : i64, scratch_operands = 0 : i64, tpu.core_type = #tpu.core_type<tc>, window_params = [{transform_indices = @transform_0, window_bounds = array<i64: 1, 64, 81>}, {pipeline_mode = #tpu.pipeline_mode<synchronous>, transform_indices = @transform_1, window_bounds = array<i64: 4, 81, 64>}, {pipeline_mode = #tpu.pipeline_mode<synchronous>, transform_indices = @transform_2, window_bounds = array<i64: 16, 64, 9>}, {pipeline_mode = #tpu.pipeline_mode<synchronous>, transform_indices = @transform_3, window_bounds = array<i64: 9, 9, 1>}, {pipeline_mode = #tpu.pipeline_mode<synchronous>, transform_indices = @transform_4, window_bounds = array<i64: 32, 256>}, {pipeline_mode = #tpu.pipeline_mode<synchronous>, transform_indices = @transform_5, window_bounds = array<i64: 32, 1>}, {pipeline_mode = #tpu.pipeline_mode<synchronous>, transform_indices = @transform_6, window_bounds = array<i64: 64, 512>}, {pipeline_mode = #tpu.pipeline_mode<synchronous>, transform_indices = @transform_7, window_bounds = array<i64: 64, 1>}, {pipeline_mode = #tpu.pipeline_mode<synchronous>, transform_indices = @transform_8, window_bounds = array<i64: 64, 576>}, {pipeline_mode = #tpu.pipeline_mode<synchronous>, transform_indices = @transform_9, window_bounds = array<i64: 64, 1>}, {pipeline_mode = #tpu.pipeline_mode<synchronous>, transform_indices = @transform_10, window_bounds = array<i64: 1, 512, 64>}, {pipeline_mode = #tpu.pipeline_mode<synchronous>, transform_indices = @transform_11, window_bounds = array<i64: 512, 1>}, {pipeline_mode = #tpu.pipeline_mode<synchronous>, transform_indices = @transform_12, window_bounds = array<i64: 128, 512>}, {pipeline_mode = #tpu.pipeline_mode<synchronous>, transform_indices = @transform_13, window_bounds = array<i64: 128, 1>}, {transform_indices = @transform_14, window_bounds = array<i64: 1, 1, 128>}]} {
    %c0 = arith.constant 0 : index
    %c0_0 = arith.constant 0 : index
    %c0_1 = arith.constant 0 : index
    %0 = vector.load %arg1[%c0, %c0_0, %c0_1] : memref<1x64x81xbf16, #tpu.memory_space<vmem>>, vector<1x64x81xbf16>
    %1 = vector.shape_cast %0 : vector<1x64x81xbf16> to vector<64x81xbf16>
    %c0_2 = arith.constant 0 : index
    %c0_3 = arith.constant 0 : index
    %c0_4 = arith.constant 0 : index
    %2 = vector.load %arg2[%c0_2, %c0_3, %c0_4] : memref<4x81x64xbf16, #tpu.memory_space<vmem>>, vector<1x81x64xbf16>
    %3 = vector.shape_cast %2 : vector<1x81x64xbf16> to vector<81x64xbf16>
    %cst = arith.constant dense<0.000000e+00> : vector<64x64xf32>
    %4 = tpu.matmul %1, %3, %cst {dimension_numbers = #tpu.dot_dimension_numbers<[1], [0], [0], [1], [0, 0, 1, 1], [], []>} : vector<64x81xbf16>, vector<81x64xbf16>, vector<64x64xf32> -> vector<64x64xf32>
    %5 = arith.truncf %4 : vector<64x64xf32> to vector<64x64xbf16>
    %c1 = arith.constant 1 : index
    %c0_5 = arith.constant 0 : index
    %c0_6 = arith.constant 0 : index
    %6 = vector.load %arg2[%c1, %c0_5, %c0_6] : memref<4x81x64xbf16, #tpu.memory_space<vmem>>, vector<1x81x64xbf16>
    %7 = vector.shape_cast %6 : vector<1x81x64xbf16> to vector<81x64xbf16>
    %cst_7 = arith.constant dense<0.000000e+00> : vector<64x64xf32>
    %8 = tpu.matmul %1, %7, %cst_7 {dimension_numbers = #tpu.dot_dimension_numbers<[1], [0], [0], [1], [0, 0, 1, 1], [], []>} : vector<64x81xbf16>, vector<81x64xbf16>, vector<64x64xf32> -> vector<64x64xf32>
    %9 = arith.truncf %8 : vector<64x64xf32> to vector<64x64xbf16>
    %c2 = arith.constant 2 : index
    %c0_8 = arith.constant 0 : index
    %c0_9 = arith.constant 0 : index
    %10 = vector.load %arg2[%c2, %c0_8, %c0_9] : memref<4x81x64xbf16, #tpu.memory_space<vmem>>, vector<1x81x64xbf16>
    %11 = vector.shape_cast %10 : vector<1x81x64xbf16> to vector<81x64xbf16>
    %cst_10 = arith.constant dense<0.000000e+00> : vector<64x64xf32>
    %12 = tpu.matmul %1, %11, %cst_10 {dimension_numbers = #tpu.dot_dimension_numbers<[1], [0], [0], [1], [0, 0, 1, 1], [], []>} : vector<64x81xbf16>, vector<81x64xbf16>, vector<64x64xf32> -> vector<64x64xf32>
    %13 = arith.truncf %12 : vector<64x64xf32> to vector<64x64xbf16>
    %c3 = arith.constant 3 : index
    %c0_11 = arith.constant 0 : index
    %c0_12 = arith.constant 0 : index
    %14 = vector.load %arg2[%c3, %c0_11, %c0_12] : memref<4x81x64xbf16, #tpu.memory_space<vmem>>, vector<1x81x64xbf16>
    %15 = vector.shape_cast %14 : vector<1x81x64xbf16> to vector<81x64xbf16>
    %cst_13 = arith.constant dense<0.000000e+00> : vector<64x64xf32>
    %16 = tpu.matmul %1, %15, %cst_13 {dimension_numbers = #tpu.dot_dimension_numbers<[1], [0], [0], [1], [0, 0, 1, 1], [], []>} : vector<64x81xbf16>, vector<81x64xbf16>, vector<64x64xf32> -> vector<64x64xf32>
    %17 = arith.truncf %16 : vector<64x64xf32> to vector<64x64xbf16>
    %18 = tpu.concatenate %5, %9, %13, %17 in 0 : vector<64x64xbf16>, vector<64x64xbf16>, vector<64x64xbf16>, vector<64x64xbf16> -> vector<256x64xbf16>
    %c0_14 = arith.constant 0 : index
    %c0_15 = arith.constant 0 : index
    %19 = vector.load %arg5[%c0_14, %c0_15] : memref<32x256xbf16, #tpu.memory_space<vmem>>, vector<32x256xbf16>
    %cst_16 = arith.constant dense<0.000000e+00> : vector<32x64xf32>
    %20 = tpu.matmul %19, %18, %cst_16 {dimension_numbers = #tpu.dot_dimension_numbers<[1], [0], [0], [1], [0, 0, 1, 1], [], []>} : vector<32x256xbf16>, vector<256x64xbf16>, vector<32x64xf32> -> vector<32x64xf32>
    %c0_17 = arith.constant 0 : index
    %c0_18 = arith.constant 0 : index
    %21 = vector.load %arg6[%c0_17, %c0_18] : memref<32x1xf32, #tpu.memory_space<vmem>>, vector<32x1xf32>
    %22 = vector.broadcast %21 : vector<32x1xf32> to vector<32x64xf32>
    %23 = arith.addf %20, %22 : vector<32x64xf32>
    %cst_19 = arith.constant 0.000000e+00 : f32
    %24 = vector.broadcast %cst_19 : f32 to vector<32x64xf32>
    %25 = arith.maximumf %23, %24 : vector<32x64xf32>
    %26 = arith.truncf %25 : vector<32x64xf32> to vector<32x64xbf16>
    %c0_20 = arith.constant 0 : index
    %c0_21 = arith.constant 0 : index
    %c0_22 = arith.constant 0 : index
    %27 = vector.load %arg3[%c0_20, %c0_21, %c0_22] : memref<16x64x9xbf16, #tpu.memory_space<vmem>>, vector<1x64x9xbf16>
    %28 = vector.shape_cast %27 : vector<1x64x9xbf16> to vector<64x9xbf16>
    %cst_23 = arith.constant dense<0.000000e+00> : vector<32x9xf32>
    %29 = tpu.matmul %26, %28, %cst_23 {dimension_numbers = #tpu.dot_dimension_numbers<[1], [0], [0], [1], [0, 0, 1, 1], [], []>} : vector<32x64xbf16>, vector<64x9xbf16>, vector<32x9xf32> -> vector<32x9xf32>
    %30 = arith.truncf %29 : vector<32x9xf32> to vector<32x9xbf16>
    %c1_24 = arith.constant 1 : index
    %c0_25 = arith.constant 0 : index
    %c0_26 = arith.constant 0 : index
    %31 = vector.load %arg3[%c1_24, %c0_25, %c0_26] : memref<16x64x9xbf16, #tpu.memory_space<vmem>>, vector<1x64x9xbf16>
    %32 = vector.shape_cast %31 : vector<1x64x9xbf16> to vector<64x9xbf16>
    %cst_27 = arith.constant dense<0.000000e+00> : vector<32x9xf32>
    %33 = tpu.matmul %26, %32, %cst_27 {dimension_numbers = #tpu.dot_dimension_numbers<[1], [0], [0], [1], [0, 0, 1, 1], [], []>} : vector<32x64xbf16>, vector<64x9xbf16>, vector<32x9xf32> -> vector<32x9xf32>
    %34 = arith.truncf %33 : vector<32x9xf32> to vector<32x9xbf16>
    %c2_28 = arith.constant 2 : index
    %c0_29 = arith.constant 0 : index
    %c0_30 = arith.constant 0 : index
    %35 = vector.load %arg3[%c2_28, %c0_29, %c0_30] : memref<16x64x9xbf16, #tpu.memory_space<vmem>>, vector<1x64x9xbf16>
    %36 = vector.shape_cast %35 : vector<1x64x9xbf16> to vector<64x9xbf16>
    %cst_31 = arith.constant dense<0.000000e+00> : vector<32x9xf32>
    %37 = tpu.matmul %26, %36, %cst_31 {dimension_numbers = #tpu.dot_dimension_numbers<[1], [0], [0], [1], [0, 0, 1, 1], [], []>} : vector<32x64xbf16>, vector<64x9xbf16>, vector<32x9xf32> -> vector<32x9xf32>
    %38 = arith.truncf %37 : vector<32x9xf32> to vector<32x9xbf16>
    %c3_32 = arith.constant 3 : index
    %c0_33 = arith.constant 0 : index
    %c0_34 = arith.constant 0 : index
    %39 = vector.load %arg3[%c3_32, %c0_33, %c0_34] : memref<16x64x9xbf16, #tpu.memory_space<vmem>>, vector<1x64x9xbf16>
    %40 = vector.shape_cast %39 : vector<1x64x9xbf16> to vector<64x9xbf16>
    %cst_35 = arith.constant dense<0.000000e+00> : vector<32x9xf32>
    %41 = tpu.matmul %26, %40, %cst_35 {dimension_numbers = #tpu.dot_dimension_numbers<[1], [0], [0], [1], [0, 0, 1, 1], [], []>} : vector<32x64xbf16>, vector<64x9xbf16>, vector<32x9xf32> -> vector<32x9xf32>
    %42 = arith.truncf %41 : vector<32x9xf32> to vector<32x9xbf16>
    %c4 = arith.constant 4 : index
    %c0_36 = arith.constant 0 : index
    %c0_37 = arith.constant 0 : index
    %43 = vector.load %arg3[%c4, %c0_36, %c0_37] : memref<16x64x9xbf16, #tpu.memory_space<vmem>>, vector<1x64x9xbf16>
    %44 = vector.shape_cast %43 : vector<1x64x9xbf16> to vector<64x9xbf16>
    %cst_38 = arith.constant dense<0.000000e+00> : vector<32x9xf32>
    %45 = tpu.matmul %26, %44, %cst_38 {dimension_numbers = #tpu.dot_dimension_numbers<[1], [0], [0], [1], [0, 0, 1, 1], [], []>} : vector<32x64xbf16>, vector<64x9xbf16>, vector<32x9xf32> -> vector<32x9xf32>
    %46 = arith.truncf %45 : vector<32x9xf32> to vector<32x9xbf16>
    %c5 = arith.constant 5 : index
    %c0_39 = arith.constant 0 : index
    %c0_40 = arith.constant 0 : index
    %47 = vector.load %arg3[%c5, %c0_39, %c0_40] : memref<16x64x9xbf16, #tpu.memory_space<vmem>>, vector<1x64x9xbf16>
    %48 = vector.shape_cast %47 : vector<1x64x9xbf16> to vector<64x9xbf16>
    %cst_41 = arith.constant dense<0.000000e+00> : vector<32x9xf32>
    %49 = tpu.matmul %26, %48, %cst_41 {dimension_numbers = #tpu.dot_dimension_numbers<[1], [0], [0], [1], [0, 0, 1, 1], [], []>} : vector<32x64xbf16>, vector<64x9xbf16>, vector<32x9xf32> -> vector<32x9xf32>
    %50 = arith.truncf %49 : vector<32x9xf32> to vector<32x9xbf16>
    %c6 = arith.constant 6 : index
    %c0_42 = arith.constant 0 : index
    %c0_43 = arith.constant 0 : index
    %51 = vector.load %arg3[%c6, %c0_42, %c0_43] : memref<16x64x9xbf16, #tpu.memory_space<vmem>>, vector<1x64x9xbf16>
    %52 = vector.shape_cast %51 : vector<1x64x9xbf16> to vector<64x9xbf16>
    %cst_44 = arith.constant dense<0.000000e+00> : vector<32x9xf32>
    %53 = tpu.matmul %26, %52, %cst_44 {dimension_numbers = #tpu.dot_dimension_numbers<[1], [0], [0], [1], [0, 0, 1, 1], [], []>} : vector<32x64xbf16>, vector<64x9xbf16>, vector<32x9xf32> -> vector<32x9xf32>
    %54 = arith.truncf %53 : vector<32x9xf32> to vector<32x9xbf16>
    %c7 = arith.constant 7 : index
    %c0_45 = arith.constant 0 : index
    %c0_46 = arith.constant 0 : index
    %55 = vector.load %arg3[%c7, %c0_45, %c0_46] : memref<16x64x9xbf16, #tpu.memory_space<vmem>>, vector<1x64x9xbf16>
    %56 = vector.shape_cast %55 : vector<1x64x9xbf16> to vector<64x9xbf16>
    %cst_47 = arith.constant dense<0.000000e+00> : vector<32x9xf32>
    %57 = tpu.matmul %26, %56, %cst_47 {dimension_numbers = #tpu.dot_dimension_numbers<[1], [0], [0], [1], [0, 0, 1, 1], [], []>} : vector<32x64xbf16>, vector<64x9xbf16>, vector<32x9xf32> -> vector<32x9xf32>
    %58 = arith.truncf %57 : vector<32x9xf32> to vector<32x9xbf16>
    %c8 = arith.constant 8 : index
    %c0_48 = arith.constant 0 : index
    %c0_49 = arith.constant 0 : index
    %59 = vector.load %arg3[%c8, %c0_48, %c0_49] : memref<16x64x9xbf16, #tpu.memory_space<vmem>>, vector<1x64x9xbf16>
    %60 = vector.shape_cast %59 : vector<1x64x9xbf16> to vector<64x9xbf16>
    %cst_50 = arith.constant dense<0.000000e+00> : vector<32x9xf32>
    %61 = tpu.matmul %26, %60, %cst_50 {dimension_numbers = #tpu.dot_dimension_numbers<[1], [0], [0], [1], [0, 0, 1, 1], [], []>} : vector<32x64xbf16>, vector<64x9xbf16>, vector<32x9xf32> -> vector<32x9xf32>
    %62 = arith.truncf %61 : vector<32x9xf32> to vector<32x9xbf16>
    %c9 = arith.constant 9 : index
    %c0_51 = arith.constant 0 : index
    %c0_52 = arith.constant 0 : index
    %63 = vector.load %arg3[%c9, %c0_51, %c0_52] : memref<16x64x9xbf16, #tpu.memory_space<vmem>>, vector<1x64x9xbf16>
    %64 = vector.shape_cast %63 : vector<1x64x9xbf16> to vector<64x9xbf16>
    %cst_53 = arith.constant dense<0.000000e+00> : vector<32x9xf32>
    %65 = tpu.matmul %26, %64, %cst_53 {dimension_numbers = #tpu.dot_dimension_numbers<[1], [0], [0], [1], [0, 0, 1, 1], [], []>} : vector<32x64xbf16>, vector<64x9xbf16>, vector<32x9xf32> -> vector<32x9xf32>
    %66 = arith.truncf %65 : vector<32x9xf32> to vector<32x9xbf16>
    %c10 = arith.constant 10 : index
    %c0_54 = arith.constant 0 : index
    %c0_55 = arith.constant 0 : index
    %67 = vector.load %arg3[%c10, %c0_54, %c0_55] : memref<16x64x9xbf16, #tpu.memory_space<vmem>>, vector<1x64x9xbf16>
    %68 = vector.shape_cast %67 : vector<1x64x9xbf16> to vector<64x9xbf16>
    %cst_56 = arith.constant dense<0.000000e+00> : vector<32x9xf32>
    %69 = tpu.matmul %26, %68, %cst_56 {dimension_numbers = #tpu.dot_dimension_numbers<[1], [0], [0], [1], [0, 0, 1, 1], [], []>} : vector<32x64xbf16>, vector<64x9xbf16>, vector<32x9xf32> -> vector<32x9xf32>
    %70 = arith.truncf %69 : vector<32x9xf32> to vector<32x9xbf16>
    %c11 = arith.constant 11 : index
    %c0_57 = arith.constant 0 : index
    %c0_58 = arith.constant 0 : index
    %71 = vector.load %arg3[%c11, %c0_57, %c0_58] : memref<16x64x9xbf16, #tpu.memory_space<vmem>>, vector<1x64x9xbf16>
    %72 = vector.shape_cast %71 : vector<1x64x9xbf16> to vector<64x9xbf16>
    %cst_59 = arith.constant dense<0.000000e+00> : vector<32x9xf32>
    %73 = tpu.matmul %26, %72, %cst_59 {dimension_numbers = #tpu.dot_dimension_numbers<[1], [0], [0], [1], [0, 0, 1, 1], [], []>} : vector<32x64xbf16>, vector<64x9xbf16>, vector<32x9xf32> -> vector<32x9xf32>
    %74 = arith.truncf %73 : vector<32x9xf32> to vector<32x9xbf16>
    %c12 = arith.constant 12 : index
    %c0_60 = arith.constant 0 : index
    %c0_61 = arith.constant 0 : index
    %75 = vector.load %arg3[%c12, %c0_60, %c0_61] : memref<16x64x9xbf16, #tpu.memory_space<vmem>>, vector<1x64x9xbf16>
    %76 = vector.shape_cast %75 : vector<1x64x9xbf16> to vector<64x9xbf16>
    %cst_62 = arith.constant dense<0.000000e+00> : vector<32x9xf32>
    %77 = tpu.matmul %26, %76, %cst_62 {dimension_numbers = #tpu.dot_dimension_numbers<[1], [0], [0], [1], [0, 0, 1, 1], [], []>} : vector<32x64xbf16>, vector<64x9xbf16>, vector<32x9xf32> -> vector<32x9xf32>
    %78 = arith.truncf %77 : vector<32x9xf32> to vector<32x9xbf16>
    %c13 = arith.constant 13 : index
    %c0_63 = arith.constant 0 : index
    %c0_64 = arith.constant 0 : index
    %79 = vector.load %arg3[%c13, %c0_63, %c0_64] : memref<16x64x9xbf16, #tpu.memory_space<vmem>>, vector<1x64x9xbf16>
    %80 = vector.shape_cast %79 : vector<1x64x9xbf16> to vector<64x9xbf16>
    %cst_65 = arith.constant dense<0.000000e+00> : vector<32x9xf32>
    %81 = tpu.matmul %26, %80, %cst_65 {dimension_numbers = #tpu.dot_dimension_numbers<[1], [0], [0], [1], [0, 0, 1, 1], [], []>} : vector<32x64xbf16>, vector<64x9xbf16>, vector<32x9xf32> -> vector<32x9xf32>
    %82 = arith.truncf %81 : vector<32x9xf32> to vector<32x9xbf16>
    %c14 = arith.constant 14 : index
    %c0_66 = arith.constant 0 : index
    %c0_67 = arith.constant 0 : index
    %83 = vector.load %arg3[%c14, %c0_66, %c0_67] : memref<16x64x9xbf16, #tpu.memory_space<vmem>>, vector<1x64x9xbf16>
    %84 = vector.shape_cast %83 : vector<1x64x9xbf16> to vector<64x9xbf16>
    %cst_68 = arith.constant dense<0.000000e+00> : vector<32x9xf32>
    %85 = tpu.matmul %26, %84, %cst_68 {dimension_numbers = #tpu.dot_dimension_numbers<[1], [0], [0], [1], [0, 0, 1, 1], [], []>} : vector<32x64xbf16>, vector<64x9xbf16>, vector<32x9xf32> -> vector<32x9xf32>
    %86 = arith.truncf %85 : vector<32x9xf32> to vector<32x9xbf16>
    %c15 = arith.constant 15 : index
    %c0_69 = arith.constant 0 : index
    %c0_70 = arith.constant 0 : index
    %87 = vector.load %arg3[%c15, %c0_69, %c0_70] : memref<16x64x9xbf16, #tpu.memory_space<vmem>>, vector<1x64x9xbf16>
    %88 = vector.shape_cast %87 : vector<1x64x9xbf16> to vector<64x9xbf16>
    %cst_71 = arith.constant dense<0.000000e+00> : vector<32x9xf32>
    %89 = tpu.matmul %26, %88, %cst_71 {dimension_numbers = #tpu.dot_dimension_numbers<[1], [0], [0], [1], [0, 0, 1, 1], [], []>} : vector<32x64xbf16>, vector<64x9xbf16>, vector<32x9xf32> -> vector<32x9xf32>
    %90 = arith.truncf %89 : vector<32x9xf32> to vector<32x9xbf16>
    %91 = tpu.concatenate %30, %34, %38, %42, %46, %50, %54, %58, %62, %66, %70, %74, %78, %82, %86, %90 in 0 : vector<32x9xbf16>, vector<32x9xbf16>, vector<32x9xbf16>, vector<32x9xbf16>, vector<32x9xbf16>, vector<32x9xbf16>, vector<32x9xbf16>, vector<32x9xbf16>, vector<32x9xbf16>, vector<32x9xbf16>, vector<32x9xbf16>, vector<32x9xbf16>, vector<32x9xbf16>, vector<32x9xbf16>, vector<32x9xbf16>, vector<32x9xbf16> -> vector<512x9xbf16>
    %c0_72 = arith.constant 0 : index
    %c0_73 = arith.constant 0 : index
    %92 = vector.load %arg7[%c0_72, %c0_73] : memref<64x512xbf16, #tpu.memory_space<vmem>>, vector<64x512xbf16>
    %cst_74 = arith.constant dense<0.000000e+00> : vector<64x9xf32>
    %93 = tpu.matmul %92, %91, %cst_74 {dimension_numbers = #tpu.dot_dimension_numbers<[1], [0], [0], [1], [0, 0, 1, 1], [], []>} : vector<64x512xbf16>, vector<512x9xbf16>, vector<64x9xf32> -> vector<64x9xf32>
    %c0_75 = arith.constant 0 : index
    %c0_76 = arith.constant 0 : index
    %94 = vector.load %arg8[%c0_75, %c0_76] : memref<64x1xf32, #tpu.memory_space<vmem>>, vector<64x1xf32>
    %95 = vector.broadcast %94 : vector<64x1xf32> to vector<64x9xf32>
    %96 = arith.addf %93, %95 : vector<64x9xf32>
    %cst_77 = arith.constant 0.000000e+00 : f32
    %97 = vector.broadcast %cst_77 : f32 to vector<64x9xf32>
    %98 = arith.maximumf %96, %97 : vector<64x9xf32>
    %99 = arith.truncf %98 : vector<64x9xf32> to vector<64x9xbf16>
    %c0_78 = arith.constant 0 : index
    %c0_79 = arith.constant 0 : index
    %c0_80 = arith.constant 0 : index
    %100 = vector.load %arg4[%c0_78, %c0_79, %c0_80] : memref<9x9x1xbf16, #tpu.memory_space<vmem>>, vector<1x9x1xbf16>
    %101 = vector.shape_cast %100 : vector<1x9x1xbf16> to vector<9x1xbf16>
    %cst_81 = arith.constant dense<0.000000e+00> : vector<64x1xf32>
    %102 = tpu.matmul %99, %101, %cst_81 {dimension_numbers = #tpu.dot_dimension_numbers<[1], [0], [0], [1], [0, 0, 1, 1], [], []>} : vector<64x9xbf16>, vector<9x1xbf16>, vector<64x1xf32> -> vector<64x1xf32>
    %103 = arith.truncf %102 : vector<64x1xf32> to vector<64x1xbf16>
    %c1_82 = arith.constant 1 : index
    %c0_83 = arith.constant 0 : index
    %c0_84 = arith.constant 0 : index
    %104 = vector.load %arg4[%c1_82, %c0_83, %c0_84] : memref<9x9x1xbf16, #tpu.memory_space<vmem>>, vector<1x9x1xbf16>
    %105 = vector.shape_cast %104 : vector<1x9x1xbf16> to vector<9x1xbf16>
    %cst_85 = arith.constant dense<0.000000e+00> : vector<64x1xf32>
    %106 = tpu.matmul %99, %105, %cst_85 {dimension_numbers = #tpu.dot_dimension_numbers<[1], [0], [0], [1], [0, 0, 1, 1], [], []>} : vector<64x9xbf16>, vector<9x1xbf16>, vector<64x1xf32> -> vector<64x1xf32>
    %107 = arith.truncf %106 : vector<64x1xf32> to vector<64x1xbf16>
    %c2_86 = arith.constant 2 : index
    %c0_87 = arith.constant 0 : index
    %c0_88 = arith.constant 0 : index
    %108 = vector.load %arg4[%c2_86, %c0_87, %c0_88] : memref<9x9x1xbf16, #tpu.memory_space<vmem>>, vector<1x9x1xbf16>
    %109 = vector.shape_cast %108 : vector<1x9x1xbf16> to vector<9x1xbf16>
    %cst_89 = arith.constant dense<0.000000e+00> : vector<64x1xf32>
    %110 = tpu.matmul %99, %109, %cst_89 {dimension_numbers = #tpu.dot_dimension_numbers<[1], [0], [0], [1], [0, 0, 1, 1], [], []>} : vector<64x9xbf16>, vector<9x1xbf16>, vector<64x1xf32> -> vector<64x1xf32>
    %111 = arith.truncf %110 : vector<64x1xf32> to vector<64x1xbf16>
    %c3_90 = arith.constant 3 : index
    %c0_91 = arith.constant 0 : index
    %c0_92 = arith.constant 0 : index
    %112 = vector.load %arg4[%c3_90, %c0_91, %c0_92] : memref<9x9x1xbf16, #tpu.memory_space<vmem>>, vector<1x9x1xbf16>
    %113 = vector.shape_cast %112 : vector<1x9x1xbf16> to vector<9x1xbf16>
    %cst_93 = arith.constant dense<0.000000e+00> : vector<64x1xf32>
    %114 = tpu.matmul %99, %113, %cst_93 {dimension_numbers = #tpu.dot_dimension_numbers<[1], [0], [0], [1], [0, 0, 1, 1], [], []>} : vector<64x9xbf16>, vector<9x1xbf16>, vector<64x1xf32> -> vector<64x1xf32>
    %115 = arith.truncf %114 : vector<64x1xf32> to vector<64x1xbf16>
    %c4_94 = arith.constant 4 : index
    %c0_95 = arith.constant 0 : index
    %c0_96 = arith.constant 0 : index
    %116 = vector.load %arg4[%c4_94, %c0_95, %c0_96] : memref<9x9x1xbf16, #tpu.memory_space<vmem>>, vector<1x9x1xbf16>
    %117 = vector.shape_cast %116 : vector<1x9x1xbf16> to vector<9x1xbf16>
    %cst_97 = arith.constant dense<0.000000e+00> : vector<64x1xf32>
    %118 = tpu.matmul %99, %117, %cst_97 {dimension_numbers = #tpu.dot_dimension_numbers<[1], [0], [0], [1], [0, 0, 1, 1], [], []>} : vector<64x9xbf16>, vector<9x1xbf16>, vector<64x1xf32> -> vector<64x1xf32>
    %119 = arith.truncf %118 : vector<64x1xf32> to vector<64x1xbf16>
    %c5_98 = arith.constant 5 : index
    %c0_99 = arith.constant 0 : index
    %c0_100 = arith.constant 0 : index
    %120 = vector.load %arg4[%c5_98, %c0_99, %c0_100] : memref<9x9x1xbf16, #tpu.memory_space<vmem>>, vector<1x9x1xbf16>
    %121 = vector.shape_cast %120 : vector<1x9x1xbf16> to vector<9x1xbf16>
    %cst_101 = arith.constant dense<0.000000e+00> : vector<64x1xf32>
    %122 = tpu.matmul %99, %121, %cst_101 {dimension_numbers = #tpu.dot_dimension_numbers<[1], [0], [0], [1], [0, 0, 1, 1], [], []>} : vector<64x9xbf16>, vector<9x1xbf16>, vector<64x1xf32> -> vector<64x1xf32>
    %123 = arith.truncf %122 : vector<64x1xf32> to vector<64x1xbf16>
    %c6_102 = arith.constant 6 : index
    %c0_103 = arith.constant 0 : index
    %c0_104 = arith.constant 0 : index
    %124 = vector.load %arg4[%c6_102, %c0_103, %c0_104] : memref<9x9x1xbf16, #tpu.memory_space<vmem>>, vector<1x9x1xbf16>
    %125 = vector.shape_cast %124 : vector<1x9x1xbf16> to vector<9x1xbf16>
    %cst_105 = arith.constant dense<0.000000e+00> : vector<64x1xf32>
    %126 = tpu.matmul %99, %125, %cst_105 {dimension_numbers = #tpu.dot_dimension_numbers<[1], [0], [0], [1], [0, 0, 1, 1], [], []>} : vector<64x9xbf16>, vector<9x1xbf16>, vector<64x1xf32> -> vector<64x1xf32>
    %127 = arith.truncf %126 : vector<64x1xf32> to vector<64x1xbf16>
    %c7_106 = arith.constant 7 : index
    %c0_107 = arith.constant 0 : index
    %c0_108 = arith.constant 0 : index
    %128 = vector.load %arg4[%c7_106, %c0_107, %c0_108] : memref<9x9x1xbf16, #tpu.memory_space<vmem>>, vector<1x9x1xbf16>
    %129 = vector.shape_cast %128 : vector<1x9x1xbf16> to vector<9x1xbf16>
    %cst_109 = arith.constant dense<0.000000e+00> : vector<64x1xf32>
    %130 = tpu.matmul %99, %129, %cst_109 {dimension_numbers = #tpu.dot_dimension_numbers<[1], [0], [0], [1], [0, 0, 1, 1], [], []>} : vector<64x9xbf16>, vector<9x1xbf16>, vector<64x1xf32> -> vector<64x1xf32>
    %131 = arith.truncf %130 : vector<64x1xf32> to vector<64x1xbf16>
    %c8_110 = arith.constant 8 : index
    %c0_111 = arith.constant 0 : index
    %c0_112 = arith.constant 0 : index
    %132 = vector.load %arg4[%c8_110, %c0_111, %c0_112] : memref<9x9x1xbf16, #tpu.memory_space<vmem>>, vector<1x9x1xbf16>
    %133 = vector.shape_cast %132 : vector<1x9x1xbf16> to vector<9x1xbf16>
    %cst_113 = arith.constant dense<0.000000e+00> : vector<64x1xf32>
    %134 = tpu.matmul %99, %133, %cst_113 {dimension_numbers = #tpu.dot_dimension_numbers<[1], [0], [0], [1], [0, 0, 1, 1], [], []>} : vector<64x9xbf16>, vector<9x1xbf16>, vector<64x1xf32> -> vector<64x1xf32>
    %135 = arith.truncf %134 : vector<64x1xf32> to vector<64x1xbf16>
    %136 = tpu.concatenate %103, %107, %111, %115, %119, %123, %127, %131, %135 in 0 : vector<64x1xbf16>, vector<64x1xbf16>, vector<64x1xbf16>, vector<64x1xbf16>, vector<64x1xbf16>, vector<64x1xbf16>, vector<64x1xbf16>, vector<64x1xbf16>, vector<64x1xbf16> -> vector<576x1xbf16>
    %c0_114 = arith.constant 0 : index
    %c0_115 = arith.constant 0 : index
    %137 = vector.load %arg9[%c0_114, %c0_115] : memref<64x576xbf16, #tpu.memory_space<vmem>>, vector<64x576xbf16>
    %cst_116 = arith.constant dense<0.000000e+00> : vector<64x1xf32>
    %138 = tpu.matmul %137, %136, %cst_116 {dimension_numbers = #tpu.dot_dimension_numbers<[1], [0], [0], [1], [0, 0, 1, 1], [], []>} : vector<64x576xbf16>, vector<576x1xbf16>, vector<64x1xf32> -> vector<64x1xf32>
    %c0_117 = arith.constant 0 : index
    %c0_118 = arith.constant 0 : index
    %139 = vector.load %arg10[%c0_117, %c0_118] : memref<64x1xf32, #tpu.memory_space<vmem>>, vector<64x1xf32>
    %140 = arith.addf %138, %139 : vector<64x1xf32>
    %cst_119 = arith.constant 0.000000e+00 : f32
    %141 = vector.broadcast %cst_119 : f32 to vector<64x1xf32>
    %142 = arith.maximumf %140, %141 : vector<64x1xf32>
    %143 = arith.truncf %142 : vector<64x1xf32> to vector<64x1xbf16>
    %c0_120 = arith.constant 0 : index
    %c0_121 = arith.constant 0 : index
    %c0_122 = arith.constant 0 : index
    %144 = vector.load %arg11[%c0_120, %c0_121, %c0_122] : memref<1x512x64xbf16, #tpu.memory_space<vmem>>, vector<1x512x64xbf16>
    %145 = vector.shape_cast %144 : vector<1x512x64xbf16> to vector<512x64xbf16>
    %cst_123 = arith.constant dense<0.000000e+00> : vector<512x1xf32>
    %146 = tpu.matmul %145, %143, %cst_123 {dimension_numbers = #tpu.dot_dimension_numbers<[1], [0], [0], [1], [0, 0, 1, 1], [], []>} : vector<512x64xbf16>, vector<64x1xbf16>, vector<512x1xf32> -> vector<512x1xf32>
    %c0_124 = arith.constant 0 : index
    %c0_125 = arith.constant 0 : index
    %147 = vector.load %arg12[%c0_124, %c0_125] : memref<512x1xf32, #tpu.memory_space<vmem>>, vector<512x1xf32>
    %148 = arith.addf %146, %147 : vector<512x1xf32>
    %cst_126 = arith.constant 0.000000e+00 : f32
    %149 = vector.broadcast %cst_126 : f32 to vector<512x1xf32>
    %150 = arith.maximumf %148, %149 : vector<512x1xf32>
    %151 = arith.truncf %150 : vector<512x1xf32> to vector<512x1xbf16>
    %c0_127 = arith.constant 0 : index
    %c0_128 = arith.constant 0 : index
    %152 = vector.load %arg13[%c0_127, %c0_128] : memref<128x512xbf16, #tpu.memory_space<vmem>>, vector<128x512xbf16>
    %cst_129 = arith.constant dense<0.000000e+00> : vector<128x1xf32>
    %153 = tpu.matmul %152, %151, %cst_129 {dimension_numbers = #tpu.dot_dimension_numbers<[1], [0], [0], [1], [0, 0, 1, 1], [], []>} : vector<128x512xbf16>, vector<512x1xbf16>, vector<128x1xf32> -> vector<128x1xf32>
    %c0_130 = arith.constant 0 : index
    %c0_131 = arith.constant 0 : index
    %154 = vector.load %arg14[%c0_130, %c0_131] : memref<128x1xf32, #tpu.memory_space<vmem>>, vector<128x1xf32>
    %155 = arith.addf %153, %154 : vector<128x1xf32>
    %156 = tpu.transpose %155, [1, 0] : vector<128x1xf32> -> vector<1x128xf32>
    %cst_132 = arith.constant dense<0xFF800000> : vector<1xf32>
    %157 = vector.multi_reduction <maximumf>, %156, %cst_132 [1] : vector<1x128xf32> to vector<1xf32>
    %158 = vector.shape_cast %157 : vector<1xf32> to vector<1x1xf32>
    %159 = vector.broadcast %158 : vector<1x1xf32> to vector<1x128xf32>
    %160 = arith.subf %156, %159 : vector<1x128xf32>
    %161 = math.exp %160 : vector<1x128xf32>
    %cst_133 = arith.constant dense<0.000000e+00> : vector<1xf32>
    %162 = vector.multi_reduction <add>, %161, %cst_133 [1] : vector<1x128xf32> to vector<1xf32>
    %163 = vector.shape_cast %162 : vector<1xf32> to vector<1x1xf32>
    %164 = tpu.reciprocal %163 : vector<1x1xf32> -> vector<1x1xf32>
    %165 = vector.broadcast %164 : vector<1x1xf32> to vector<1x128xf32>
    %166 = arith.mulf %161, %165 : vector<1x128xf32>
    %c0_134 = arith.constant 0 : index
    %c0_135 = arith.constant 0 : index
    %c0_136 = arith.constant 0 : index
    %167 = vector.load %arg15[%c0_134, %c0_135, %c0_136] : memref<1x1x128xf32, #tpu.memory_space<vmem>>, vector<1x1x128xf32>
    %168 = vector.shape_cast %167 : vector<1x1x128xf32> to vector<1x128xf32>
    %169 = vector.shape_cast %166 : vector<1x128xf32> to vector<1x1x128xf32>
    tpu.vector_store %arg15[%c0_134, %c0_135, %c0_136], %169 {strides = array<i32>} : memref<1x1x128xf32, #tpu.memory_space<vmem>>, vector<1x1x128xf32>,
    return
  }
  func.func @transform_0(%arg0: i32) -> (i32, i32, i32) {
    %c0_i32 = arith.constant 0 : i32
    %c0_i32_0 = arith.constant 0 : i32
    %c0_i32_1 = arith.constant 0 : i32
    return %arg0, %c0_i32, %c0_i32_0 : i32, i32, i32
  }
  func.func @transform_1(%arg0: i32) -> (i32, i32, i32) {
    %c0_i32 = arith.constant 0 : i32
    %c0_i32_0 = arith.constant 0 : i32
    %c0_i32_1 = arith.constant 0 : i32
    %c0_i32_2 = arith.constant 0 : i32
    return %c0_i32, %c0_i32_0, %c0_i32_1 : i32, i32, i32
  }
  func.func @transform_2(%arg0: i32) -> (i32, i32, i32) {
    %c0_i32 = arith.constant 0 : i32
    %c0_i32_0 = arith.constant 0 : i32
    %c0_i32_1 = arith.constant 0 : i32
    %c0_i32_2 = arith.constant 0 : i32
    return %c0_i32, %c0_i32_0, %c0_i32_1 : i32, i32, i32
  }
  func.func @transform_3(%arg0: i32) -> (i32, i32, i32) {
    %c0_i32 = arith.constant 0 : i32
    %c0_i32_0 = arith.constant 0 : i32
    %c0_i32_1 = arith.constant 0 : i32
    %c0_i32_2 = arith.constant 0 : i32
    return %c0_i32, %c0_i32_0, %c0_i32_1 : i32, i32, i32
  }
  func.func @transform_4(%arg0: i32) -> (i32, i32) {
    %c0_i32 = arith.constant 0 : i32
    %c0_i32_0 = arith.constant 0 : i32
    %c0_i32_1 = arith.constant 0 : i32
    return %c0_i32, %c0_i32_0 : i32, i32
  }
  func.func @transform_5(%arg0: i32) -> (i32, i32) {
    %c0_i32 = arith.constant 0 : i32
    %c0_i32_0 = arith.constant 0 : i32
    %c0_i32_1 = arith.constant 0 : i32
    return %c0_i32, %c0_i32_0 : i32, i32
  }
  func.func @transform_6(%arg0: i32) -> (i32, i32) {
    %c0_i32 = arith.constant 0 : i32
    %c0_i32_0 = arith.constant 0 : i32
    %c0_i32_1 = arith.constant 0 : i32
    return %c0_i32, %c0_i32_0 : i32, i32
  }
  func.func @transform_7(%arg0: i32) -> (i32, i32) {
    %c0_i32 = arith.constant 0 : i32
    %c0_i32_0 = arith.constant 0 : i32
    %c0_i32_1 = arith.constant 0 : i32
    return %c0_i32, %c0_i32_0 : i32, i32
  }
  func.func @transform_8(%arg0: i32) -> (i32, i32) {
    %c0_i32 = arith.constant 0 : i32
    %c0_i32_0 = arith.constant 0 : i32
    %c0_i32_1 = arith.constant 0 : i32
    return %c0_i32, %c0_i32_0 : i32, i32
  }
  func.func @transform_9(%arg0: i32) -> (i32, i32) {
    %c0_i32 = arith.constant 0 : i32
    %c0_i32_0 = arith.constant 0 : i32
    %c0_i32_1 = arith.constant 0 : i32
    return %c0_i32, %c0_i32_0 : i32, i32
  }
  func.func @transform_10(%arg0: i32) -> (i32, i32, i32) {
    %c0_i32 = arith.constant 0 : i32
    %c0_i32_0 = arith.constant 0 : i32
    %c0_i32_1 = arith.constant 0 : i32
    %c0_i32_2 = arith.constant 0 : i32
    return %c0_i32, %c0_i32_0, %c0_i32_1 : i32, i32, i32
  }
  func.func @transform_11(%arg0: i32) -> (i32, i32) {
    %c0_i32 = arith.constant 0 : i32
    %c0_i32_0 = arith.constant 0 : i32
    %c0_i32_1 = arith.constant 0 : i32
    return %c0_i32, %c0_i32_0 : i32, i32
  }
  func.func @transform_12(%arg0: i32) -> (i32, i32) {
    %c0_i32 = arith.constant 0 : i32
    %c0_i32_0 = arith.constant 0 : i32
    %c0_i32_1 = arith.constant 0 : i32
    return %c0_i32, %c0_i32_0 : i32, i32
  }
  func.func @transform_13(%arg0: i32) -> (i32, i32) {
    %c0_i32 = arith.constant 0 : i32
    %c0_i32_0 = arith.constant 0 : i32
    %c0_i32_1 = arith.constant 0 : i32
    return %c0_i32, %c0_i32_0 : i32, i32
  }
  func.func @transform_14(%arg0: i32) -> (i32, i32, i32) {
    %c0_i32 = arith.constant 0 : i32
    %c0_i32_0 = arith.constant 0 : i32
    %c0_i32_1 = arith.constant 0 : i32
    return %arg0, %c0_i32, %c0_i32_0 : i32, i32, i32
  }
}

</mosaic_0001>

<llo_original>
// kernel: actor_forward.1
$region0: #{actor_forward.1}
  #allocation0 [shape = 'u32[]', space=smem, size = 0x4, offset = 0x4, fixed_abs, tag = 'smem constant byte address 0x4 - core index']
  #allocation1 [shape = 'u32[144,128]{1,0:T(1,128)}', space=vmem, size = 0x12000, scoped, tag = 'internal scratch']
  %s0 = inlined_call_operand.vmem [shape: bf16[2,64,81], index: 0, kind: input, shape index: {}]
  %s1 = inlined_call_operand.vmem [shape: bf16[4,81,64], index: 1, kind: input, shape index: {}]
  %s2 = inlined_call_operand.vmem [shape: bf16[16,64,9], index: 2, kind: input, shape index: {}]
  %s3 = inlined_call_operand.vmem [shape: bf16[9,9,1], index: 3, kind: input, shape index: {}]
  %s4 = inlined_call_operand.vmem [shape: bf16[32,256], index: 4, kind: input, shape index: {}]
  %s5 = inlined_call_operand.vmem [shape: f32[32,1], index: 5, kind: input, shape index: {}]
  %s6 = inlined_call_operand.vmem [shape: bf16[64,512], index: 6, kind: input, shape index: {}]
  %s7 = inlined_call_operand.vmem [shape: f32[64,1], index: 7, kind: input, shape index: {}]
  %s8 = inlined_call_operand.vmem [shape: bf16[64,576], index: 8, kind: input, shape index: {}]
  %s9 = inlined_call_operand.vmem [shape: f32[64,1], index: 9, kind: input, shape index: {}]
  %s10 = inlined_call_operand.vmem [shape: bf16[1,512,64], index: 10, kind: input, shape index: {}]
  %s11 = inlined_call_operand.vmem [shape: f32[512,1], index: 11, kind: input, shape index: {}]
  %s12 = inlined_call_operand.vmem [shape: bf16[128,512], index: 12, kind: input, shape index: {}]
  %s13 = inlined_call_operand.vmem [shape: f32[128,1], index: 13, kind: input, shape index: {}]
  %s14 = inlined_call_operand.hbm [shape: f32[2,1,128], index: 14, kind: output, shape index: {}]
  %s15 = sld [smem:[#allocation0]]
  $region89: #{actor_forward.1} parent=0
    _
  %s17 = ssub.s32 1, %s15
  %s18 = scalar_select 0, %s17, %s15
  $region1: #{actor_forward.1} parent=0
    #allocation2 [shape = 'u8[1024]{0}', space=vmem, size = 0x400, scoped, tag = 'output window, operand 0']
    #allocation3 [shape = 's32[2]{0}', space=sflag, size = 0x8, scoped, tag = 'scoped memory for actor_forward.1']
    %19 = vsyncpa [#allocation3], 0
    %s20 = scalar_lea.sflag [#allocation3], 1
    %21 = vsyncpa %s20, 0
    loop: start=0, step=1, limit=4
    $region2: #{actor_forward.1} parent=1 // loop_pre_header
      _
    $region3: #{actor_forward.1} parent=1 // loop_header
      %s23 = sphi 0, %s27
      %p24 = scmp.ge.s32.totalorder %s23, 4
      %s33 = sphi 0, %s35
      %s36 = sphi 0, %s33
      %s37 = sphi 0, %s36
      %s53 = sphi 0, %s37
      %s57 = sphi 0, %s57
      %s59 = sphi 0, %s57
      %s60 = sphi 0, %s59
      %s74 = sphi 0, %s60
      %s78 = sphi 0, %s78
      %s80 = sphi 0, %s78
      %s81 = sphi 0, %s80
      %s95 = sphi 0, %s81
      %s99 = sphi 0, %s99
      %s101 = sphi 0, %s99
      %s102 = sphi 0, %s101
      %s116 = sphi 0, %s102
      %s120 = sphi 0, %s120
      %s122 = sphi 0, %s120
      %s123 = sphi 0, %s122
      %s137 = sphi 0, %s123
      %s141 = sphi 0, %s141
      %s143 = sphi 0, %s141
      %s144 = sphi 0, %s143
      %s158 = sphi 0, %s144
      %s162 = sphi 0, %s162
      %s164 = sphi 0, %s162
      %s165 = sphi 0, %s164
      %s179 = sphi 0, %s165
      %s183 = sphi 0, %s183
      %s185 = sphi 0, %s183
      %s186 = sphi 0, %s185
      %s200 = sphi 0, %s186
      %s204 = sphi 0, %s204
      %s206 = sphi 0, %s204
      %s207 = sphi 0, %s206
      %s221 = sphi 0, %s207
      %s225 = sphi 0, %s225
      %s227 = sphi 0, %s225
      %s228 = sphi 0, %s227
      %s242 = sphi 0, %s228
      %s246 = sphi 0, %s246
      %s248 = sphi 0, %s246
      %s249 = sphi 0, %s248
      %s263 = sphi 0, %s249
      %s267 = sphi 0, %s267
      %s269 = sphi 0, %s267
      %s270 = sphi 0, %s269
      %s284 = sphi 0, %s270
      %s288 = sphi 0, %s288
      %s290 = sphi 0, %s288
      %s291 = sphi 0, %s290
      %s305 = sphi 0, %s291
      %s309 = sphi 0, %s309
      %s311 = sphi 0, %s309
      %s312 = sphi 0, %s311
      %s326 = sphi 0, %s312
      %s332 = sphi 0, %s334
      %s335 = sphi 0, %s332
      %s336 = sphi 0, %s335
      %s352 = sphi 0, %s336
    $region4: #{actor_forward.1} parent=1 // loop_header_branch
      %26 = sbr.rel (%p24) target = $region8
    $region5: #{actor_forward.1} parent=1 // loop_body
      %s28 = ssub.s32 %s23, 1
      %s29 = ssub.s32 %s23, 2
      %s30 = sadd.s32 %s23, 1
      %s31 = ssub.s32 %s23, %s30
      %p32 = scmp.eq.s32.totalorder %s31, 0
      %s34 = sadd.s32 %s33, 1
      %s35 = scalar_select %p32, %s33, %s34
      %p38 = pneg %p32
      %p39 = scmp.eq.s32.totalorder %s23, 1
      %p40 = por %p38, %p39
      %p41 = scmp.ne.s32.totalorder %s33, %s36
      %p42 = scmp.eq.s32.totalorder %s23, 0
      %p43 = por %p41, %p42
      %p44 = scmp.ne.s32.totalorder %s33, %s36
      %p45 = scmp.eq.s32.totalorder %s28, 1
      %p46 = por %p44, %p45
      %p47 = scmp.ne.s32.totalorder %s36, %s37
      %p48 = scmp.eq.s32.totalorder %s28, 0
      %p49 = por %p47, %p48
      %p50 = scmp.ne.s32.totalorder %s36, %s37
      %p51 = scmp.eq.s32.totalorder %s29, 1
      %p52 = por %p50, %p51
      %p54 = scmp.ne.s32.totalorder %s37, %s53
      %p55 = scmp.eq.s32.totalorder %s29, 0
      %p56 = por %p54, %p55
      %s58 = sadd.s32 %s57, 1
      %p61 = scmp.eq.s32.totalorder %s23, 1
      %p62 = scmp.ne.s32.totalorder %s57, %s59
      %p63 = scmp.eq.s32.totalorder %s23, 0
      %p64 = por %p62, %p63
      %p65 = scmp.ne.s32.totalorder %s57, %s59
      %p66 = scmp.eq.s32.totalorder %s28, 1
      %p67 = por %p65, %p66
      %p68 = scmp.ne.s32.totalorder %s59, %s60
      %p69 = scmp.eq.s32.totalorder %s28, 0
      %p70 = por %p68, %p69
      %p71 = scmp.ne.s32.totalorder %s59, %s60
      %p72 = scmp.eq.s32.totalorder %s29, 1
      %p73 = por %p71, %p72
      %p75 = scmp.ne.s32.totalorder %s60, %s74
      %p76 = scmp.eq.s32.totalorder %s29, 0
      %p77 = por %p75, %p76
      %s79 = sadd.s32 %s78, 1
      %p82 = scmp.eq.s32.totalorder %s23, 1
      %p83 = scmp.ne.s32.totalorder %s78, %s80
      %p84 = scmp.eq.s32.totalorder %s23, 0
      %p85 = por %p83, %p84
      %p86 = scmp.ne.s32.totalorder %s78, %s80
      %p87 = scmp.eq.s32.totalorder %s28, 1
      %p88 = por %p86, %p87
      %p89 = scmp.ne.s32.totalorder %s80, %s81
      %p90 = scmp.eq.s32.totalorder %s28, 0
      %p91 = por %p89, %p90
      %p92 = scmp.ne.s32.totalorder %s80, %s81
      %p93 = scmp.eq.s32.totalorder %s29, 1
      %p94 = por %p92, %p93
      %p96 = scmp.ne.s32.totalorder %s81, %s95
      %p97 = scmp.eq.s32.totalorder %s29, 0
      %p98 = por %p96, %p97
      %s100 = sadd.s32 %s99, 1
      %p103 = scmp.eq.s32.totalorder %s23, 1
      %p104 = scmp.ne.s32.totalorder %s99, %s101
      %p105 = scmp.eq.s32.totalorder %s23, 0
      %p106 = por %p104, %p105
      %p107 = scmp.ne.s32.totalorder %s99, %s101
      %p108 = scmp.eq.s32.totalorder %s28, 1
      %p109 = por %p107, %p108
      %p110 = scmp.ne.s32.totalorder %s101, %s102
      %p111 = scmp.eq.s32.totalorder %s28, 0
      %p112 = por %p110, %p111
      %p113 = scmp.ne.s32.totalorder %s101, %s102
      %p114 = scmp.eq.s32.totalorder %s29, 1
      %p115 = por %p113, %p114
      %p117 = scmp.ne.s32.totalorder %s102, %s116
      %p118 = scmp.eq.s32.totalorder %s29, 0
      %p119 = por %p117, %p118
      %s121 = sadd.s32 %s120, 1
      %p124 = scmp.eq.s32.totalorder %s23, 1
      %p125 = scmp.ne.s32.totalorder %s120, %s122
      %p126 = scmp.eq.s32.totalorder %s23, 0
      %p127 = por %p125, %p126
      %p128 = scmp.ne.s32.totalorder %s120, %s122
      %p129 = scmp.eq.s32.totalorder %s28, 1
      %p130 = por %p128, %p129
      %p131 = scmp.ne.s32.totalorder %s122, %s123
      %p132 = scmp.eq.s32.totalorder %s28, 0
      %p133 = por %p131, %p132
      %p134 = scmp.ne.s32.totalorder %s122, %s123
      %p135 = scmp.eq.s32.totalorder %s29, 1
      %p136 = por %p134, %p135
      %p138 = scmp.ne.s32.totalorder %s123, %s137
      %p139 = scmp.eq.s32.totalorder %s29, 0
      %p140 = por %p138, %p139
      %s142 = sadd.s32 %s141, 1
      %p145 = scmp.eq.s32.totalorder %s23, 1
      %p146 = scmp.ne.s32.totalorder %s141, %s143
      %p147 = scmp.eq.s32.totalorder %s23, 0
      %p148 = por %p146, %p147
      %p149 = scmp.ne.s32.totalorder %s141, %s143
      %p150 = scmp.eq.s32.totalorder %s28, 1
      %p151 = por %p149, %p150
      %p152 = scmp.ne.s32.totalorder %s143, %s144
      %p153 = scmp.eq.s32.totalorder %s28, 0
      %p154 = por %p152, %p153
      %p155 = scmp.ne.s32.totalorder %s143, %s144
      %p156 = scmp.eq.s32.totalorder %s29, 1
      %p157 = por %p155, %p156
      %p159 = scmp.ne.s32.totalorder %s144, %s158
      %p160 = scmp.eq.s32.totalorder %s29, 0
      %p161 = por %p159, %p160
      %s163 = sadd.s32 %s162, 1
      %p166 = scmp.eq.s32.totalorder %s23, 1
      %p167 = scmp.ne.s32.totalorder %s162, %s164
      %p168 = scmp.eq.s32.totalorder %s23, 0
      %p169 = por %p167, %p168
      %p170 = scmp.ne.s32.totalorder %s162, %s164
      %p171 = scmp.eq.s32.totalorder %s28, 1
      %p172 = por %p170, %p171
      %p173 = scmp.ne.s32.totalorder %s164, %s165
      %p174 = scmp.eq.s32.totalorder %s28, 0
      %p175 = por %p173, %p174
      %p176 = scmp.ne.s32.totalorder %s164, %s165
      %p177 = scmp.eq.s32.totalorder %s29, 1
      %p178 = por %p176, %p177
      %p180 = scmp.ne.s32.totalorder %s165, %s179
      %p181 = scmp.eq.s32.totalorder %s29, 0
      %p182 = por %p180, %p181
      %s184 = sadd.s32 %s183, 1
      %p187 = scmp.eq.s32.totalorder %s23, 1
      %p188 = scmp.ne.s32.totalorder %s183, %s185
      %p189 = scmp.eq.s32.totalorder %s23, 0
      %p190 = por %p188, %p189
      %p191 = scmp.ne.s32.totalorder %s183, %s185
      %p192 = scmp.eq.s32.totalorder %s28, 1
      %p193 = por %p191, %p192
      %p194 = scmp.ne.s32.totalorder %s185, %s186
      %p195 = scmp.eq.s32.totalorder %s28, 0
      %p196 = por %p194, %p195
      %p197 = scmp.ne.s32.totalorder %s185, %s186
      %p198 = scmp.eq.s32.totalorder %s29, 1
      %p199 = por %p197, %p198
      %p201 = scmp.ne.s32.totalorder %s186, %s200
      %p202 = scmp.eq.s32.totalorder %s29, 0
      %p203 = por %p201, %p202
      %s205 = sadd.s32 %s204, 1
      %p208 = scmp.eq.s32.totalorder %s23, 1
      %p209 = scmp.ne.s32.totalorder %s204, %s206
      %p210 = scmp.eq.s32.totalorder %s23, 0
      %p211 = por %p209, %p210
      %p212 = scmp.ne.s32.totalorder %s204, %s206
      %p213 = scmp.eq.s32.totalorder %s28, 1
      %p214 = por %p212, %p213
      %p215 = scmp.ne.s32.totalorder %s206, %s207
      %p216 = scmp.eq.s32.totalorder %s28, 0
      %p217 = por %p215, %p216
      %p218 = scmp.ne.s32.totalorder %s206, %s207
      %p219 = scmp.eq.s32.totalorder %s29, 1
      %p220 = por %p218, %p219
      %p222 = scmp.ne.s32.totalorder %s207, %s221
      %p223 = scmp.eq.s32.totalorder %s29, 0
      %p224 = por %p222, %p223
      %s226 = sadd.s32 %s225, 1
      %p229 = scmp.eq.s32.totalorder %s23, 1
      %p230 = scmp.ne.s32.totalorder %s225, %s227
      %p231 = scmp.eq.s32.totalorder %s23, 0
      %p232 = por %p230, %p231
      %p233 = scmp.ne.s32.totalorder %s225, %s227
      %p234 = scmp.eq.s32.totalorder %s28, 1
      %p235 = por %p233, %p234
      %p236 = scmp.ne.s32.totalorder %s227, %s228
      %p237 = scmp.eq.s32.totalorder %s28, 0
      %p238 = por %p236, %p237
      %p239 = scmp.ne.s32.totalorder %s227, %s228
      %p240 = scmp.eq.s32.totalorder %s29, 1
      %p241 = por %p239, %p240
      %p243 = scmp.ne.s32.totalorder %s228, %s242
      %p244 = scmp.eq.s32.totalorder %s29, 0
      %p245 = por %p243, %p244
      %s247 = sadd.s32 %s246, 1
      %p250 = scmp.eq.s32.totalorder %s23, 1
      %p251 = scmp.ne.s32.totalorder %s246, %s248
      %p252 = scmp.eq.s32.totalorder %s23, 0
      %p253 = por %p251, %p252
      %p254 = scmp.ne.s32.totalorder %s246, %s248
      %p255 = scmp.eq.s32.totalorder %s28, 1
      %p256 = por %p254, %p255
      %p257 = scmp.ne.s32.totalorder %s248, %s249
      %p258 = scmp.eq.s32.totalorder %s28, 0
      %p259 = por %p257, %p258
      %p260 = scmp.ne.s32.totalorder %s248, %s249
      %p261 = scmp.eq.s32.totalorder %s29, 1
      %p262 = por %p260, %p261
      %p264 = scmp.ne.s32.totalorder %s249, %s263
      %p265 = scmp.eq.s32.totalorder %s29, 0
      %p266 = por %p264, %p265
      %s268 = sadd.s32 %s267, 1
      %p271 = scmp.eq.s32.totalorder %s23, 1
      %p272 = scmp.ne.s32.totalorder %s267, %s269
      %p273 = scmp.eq.s32.totalorder %s23, 0
      %p274 = por %p272, %p273
      %p275 = scmp.ne.s32.totalorder %s267, %s269
      %p276 = scmp.eq.s32.totalorder %s28, 1
      %p277 = por %p275, %p276
      %p278 = scmp.ne.s32.totalorder %s269, %s270
      %p279 = scmp.eq.s32.totalorder %s28, 0
      %p280 = por %p278, %p279
      %p281 = scmp.ne.s32.totalorder %s269, %s270
      %p282 = scmp.eq.s32.totalorder %s29, 1
      %p283 = por %p281, %p282
      %p285 = scmp.ne.s32.totalorder %s270, %s284
      %p286 = scmp.eq.s32.totalorder %s29, 0
      %p287 = por %p285, %p286
      %s289 = sadd.s32 %s288, 1
      %p292 = scmp.eq.s32.totalorder %s23, 1
      %p293 = scmp.ne.s32.totalorder %s288, %s290
      %p294 = scmp.eq.s32.totalorder %s23, 0
      %p295 = por %p293, %p294
      %p296 = scmp.ne.s32.totalorder %s288, %s290
      %p297 = scmp.eq.s32.totalorder %s28, 1
      %p298 = por %p296, %p297
      %p299 = scmp.ne.s32.totalorder %s290, %s291
      %p300 = scmp.eq.s32.totalorder %s28, 0
      %p301 = por %p299, %p300
      %p302 = scmp.ne.s32.totalorder %s290, %s291
      %p303 = scmp.eq.s32.totalorder %s29, 1
      %p304 = por %p302, %p303
      %p306 = scmp.ne.s32.totalorder %s291, %s305
      %p307 = scmp.eq.s32.totalorder %s29, 0
      %p308 = por %p306, %p307
      %s310 = sadd.s32 %s309, 1
      %p313 = scmp.eq.s32.totalorder %s23, 1
      %p314 = scmp.ne.s32.totalorder %s309, %s311
      %p315 = scmp.eq.s32.totalorder %s23, 0
      %p316 = por %p314, %p315
      %p317 = scmp.ne.s32.totalorder %s309, %s311
      %p318 = scmp.eq.s32.totalorder %s28, 1
      %p319 = por %p317, %p318
      %p320 = scmp.ne.s32.totalorder %s311, %s312
      %p321 = scmp.eq.s32.totalorder %s28, 0
      %p322 = por %p320, %p321
      %p323 = scmp.ne.s32.totalorder %s311, %s312
      %p324 = scmp.eq.s32.totalorder %s29, 1
      %p325 = por %p323, %p324
      %p327 = scmp.ne.s32.totalorder %s312, %s326
      %p328 = scmp.eq.s32.totalorder %s29, 0
      %p329 = por %p327, %p328
      %s330 = ssub.s32 %s23, %s30
      %p331 = scmp.eq.s32.totalorder %s330, 0
      %s333 = sadd.s32 %s332, 1
      %s334 = scalar_select %p331, %s332, %s333
      %p337 = pneg %p331
      %p338 = scmp.eq.s32.totalorder %s23, 1
      %p339 = por %p337, %p338
      %p340 = scmp.ne.s32.totalorder %s332, %s335
      %p341 = scmp.eq.s32.totalorder %s23, 0
      %p342 = por %p340, %p341
      %p343 = scmp.ne.s32.totalorder %s332, %s335
      %p344 = scmp.eq.s32.totalorder %s28, 1
      %p345 = por %p343, %p344
      %p346 = scmp.ne.s32.totalorder %s335, %s336
      %p347 = scmp.eq.s32.totalorder %s28, 0
      %p348 = por %p346, %p347
      %p349 = scmp.ne.s32.totalorder %s335, %s336
      %p350 = scmp.eq.s32.totalorder %s29, 1
      %p351 = por %p349, %p350
      %p353 = scmp.ne.s32.totalorder %s336, %s352
      %p354 = scmp.eq.s32.totalorder %s29, 0
      %p355 = por %p353, %p354
      %p356 = scmp.le.s32.totalorder 1, %s23
      %p357 = scmp.lt.s32.totalorder %s23, 3
      %p358 = pnand %p356, %p357
      %p359 = pneg %p358
      // Predicated region
      $region9: #{actor_forward.1} parent=5 // pred_check
        _
      $region10: #{actor_forward.1} parent=5 // pred_check_branch
        %361 = sbr.rel (%p358) target = $region12
      $region11: #{actor_forward.1} parent=5 // pred_region
        %s362 = ssub.s32 %s23, 1
        // Predicated region
        $region13: #{actor_forward.1} parent=11 // pred_check
          %p363 = pneg %p70
        $region14: #{actor_forward.1} parent=11 // pred_check_branch
          %365 = sbr.rel (%p363) target = $region16
        $region15: #{actor_forward.1} parent=11 // pred_region
          _
        $region16: #{actor_forward.1} parent=11 // pred_fallthru
          _
        // Predicated region
        $region17: #{actor_forward.1} parent=11 // pred_check
          %p366 = pneg %p91
        $region18: #{actor_forward.1} parent=11 // pred_check_branch
          %368 = sbr.rel (%p366) target = $region20
        $region19: #{actor_forward.1} parent=11 // pred_region
          _
        $region20: #{actor_forward.1} parent=11 // pred_fallthru
          _
        // Predicated region
        $region21: #{actor_forward.1} parent=11 // pred_check
          %p369 = pneg %p112
        $region22: #{actor_forward.1} parent=11 // pred_check_branch
          %371 = sbr.rel (%p369) target = $region24
        $region23: #{actor_forward.1} parent=11 // pred_region
          _
        $region24: #{actor_forward.1} parent=11 // pred_fallthru
          _
        // Predicated region
        $region25: #{actor_forward.1} parent=11 // pred_check
          %p372 = pneg %p133
        $region26: #{actor_forward.1} parent=11 // pred_check_branch
          %374 = sbr.rel (%p372) target = $region28
        $region27: #{actor_forward.1} parent=11 // pred_region
          _
        $region28: #{actor_forward.1} parent=11 // pred_fallthru
          _
        // Predicated region
        $region29: #{actor_forward.1} parent=11 // pred_check
          %p375 = pneg %p154
        $region30: #{actor_forward.1} parent=11 // pred_check_branch
          %377 = sbr.rel (%p375) target = $region32
        $region31: #{actor_forward.1} parent=11 // pred_region
          _
        $region32: #{actor_forward.1} parent=11 // pred_fallthru
          _
        // Predicated region
        $region33: #{actor_forward.1} parent=11 // pred_check
          %p378 = pneg %p175
        $region34: #{actor_forward.1} parent=11 // pred_check_branch
          %380 = sbr.rel (%p378) target = $region36
        $region35: #{actor_forward.1} parent=11 // pred_region
          _
        $region36: #{actor_forward.1} parent=11 // pred_fallthru
          _
        // Predicated region
        $region37: #{actor_forward.1} parent=11 // pred_check
          %p381 = pneg %p196
        $region38: #{actor_forward.1} parent=11 // pred_check_branch
          %383 = sbr.rel (%p381) target = $region40
        $region39: #{actor_forward.1} parent=11 // pred_region
          _
        $region40: #{actor_forward.1} parent=11 // pred_fallthru
          _
        // Predicated region
        $region41: #{actor_forward.1} parent=11 // pred_check
          %p384 = pneg %p217
        $region42: #{actor_forward.1} parent=11 // pred_check_branch
          %386 = sbr.rel (%p384) target = $region44
        $region43: #{actor_forward.1} parent=11 // pred_region
          _
        $region44: #{actor_forward.1} parent=11 // pred_fallthru
          _
        // Predicated region
        $region45: #{actor_forward.1} parent=11 // pred_check
          %p387 = pneg %p238
        $region46: #{actor_forward.1} parent=11 // pred_check_branch
          %389 = sbr.rel (%p387) target = $region48
        $region47: #{actor_forward.1} parent=11 // pred_region
          _
        $region48: #{actor_forward.1} parent=11 // pred_fallthru
          _
        // Predicated region
        $region49: #{actor_forward.1} parent=11 // pred_check
          %p390 = pneg %p259
        $region50: #{actor_forward.1} parent=11 // pred_check_branch
          %392 = sbr.rel (%p390) target = $region52
        $region51: #{actor_forward.1} parent=11 // pred_region
          _
        $region52: #{actor_forward.1} parent=11 // pred_fallthru
          _
        // Predicated region
        $region53: #{actor_forward.1} parent=11 // pred_check
          %p393 = pneg %p280
        $region54: #{actor_forward.1} parent=11 // pred_check_branch
          %395 = sbr.rel (%p393) target = $region56
        $region55: #{actor_forward.1} parent=11 // pred_region
          _
        $region56: #{actor_forward.1} parent=11 // pred_fallthru
          _
        // Predicated region
        $region57: #{actor_forward.1} parent=11 // pred_check
          %p396 = pneg %p301
        $region58: #{actor_forward.1} parent=11 // pred_check_branch
          %398 = sbr.rel (%p396) target = $region60
        $region59: #{actor_forward.1} parent=11 // pred_region
          _
        $region60: #{actor_forward.1} parent=11 // pred_fallthru
          _
        // Predicated region
        $region61: #{actor_forward.1} parent=11 // pred_check
          %p399 = pneg %p322
        $region62: #{actor_forward.1} parent=11 // pred_check_branch
          %401 = sbr.rel (%p399) target = $region64
        $region63: #{actor_forward.1} parent=11 // pred_region
          _
        $region64: #{actor_forward.1} parent=11 // pred_fallthru
          _
      $region12: #{actor_forward.1} parent=5 // pred_fallthru
        _
      %p402 = scmp.lt.s32.totalorder %s23, 2
      // Predicated region
      $region65: #{actor_forward.1} parent=5 // pred_check
        %p403 = pneg %p402
      $region66: #{actor_forward.1} parent=5 // pred_check_branch
        %405 = sbr.rel (%p403) target = $region68
      $region67: #{actor_forward.1} parent=5 // pred_region
        // Predicated region
        $region69: #{actor_forward.1} parent=67 // pred_check
          %p406 = pneg %p43
        $region70: #{actor_forward.1} parent=67 // pred_check_branch
          %408 = sbr.rel (%p406) target = $region72
        $region71: #{actor_forward.1} parent=67 // pred_region
          %p409 = scmp.lt.s32.totalorder %s23, 1
          %s410 = scalar_select %p409, %s23, 1
          %s411 = smul.addr %s410, 8
          %s412 = smul.addr %s411, 4
          %s413 = scalar_lea.vmem %s0, %s412
        $region72: #{actor_forward.1} parent=67 // pred_fallthru
          _
      $region68: #{actor_forward.1} parent=5 // pred_fallthru
        _
      %p414 = scmp.le.s32.totalorder 1, %s23
      %p415 = scmp.lt.s32.totalorder %s23, 3
      %p416 = pnand %p414, %p415
      %p417 = pneg %p416
      // Predicated region
      $region73: #{actor_forward.1} parent=5 // pred_check
        _
      $region74: #{actor_forward.1} parent=5 // pred_check_branch
        %419 = sbr.rel (%p416) target = $region76
      $region75: #{actor_forward.1} parent=5 // pred_region
        %s420 = ssub.s32 %s23, 1
        %p421 = scmp.lt.s32.totalorder %s28, 1
        %s422 = scalar_select %p421, %s28, 1
        %s423 = smul.addr %s422, 8
        %s424 = smul.addr %s423, 4
        %s425 = scalar_lea.vmem %s0, %s424
        %p426 = pneg %p49
        %p427 = pneg %p46
        %p428 = pneg %p70
        %p429 = pneg %p67
        %p430 = pneg %p91
        %p431 = pneg %p88
        %p432 = pneg %p112
        %p433 = pneg %p109
        %p434 = pneg %p133
        %p435 = pneg %p130
        %p436 = pneg %p154
        %p437 = pneg %p151
        %p438 = pneg %p175
        %p439 = pneg %p172
        %p440 = pneg %p196
        %p441 = pneg %p193
        %p442 = pneg %p217
        %p443 = pneg %p214
        %p444 = pneg %p238
        %p445 = pneg %p235
        %p446 = pneg %p259
        %p447 = pneg %p256
        %p448 = pneg %p280
        %p449 = pneg %p277
        %p450 = pneg %p301
        %p451 = pneg %p298
        %p452 = pneg %p322
        %p453 = pneg %p319
        %p454 = pneg %p348
        %p455 = pneg %p345
        %s456 = sand.u32 %s335, 1
        %s457 = scalar_lea.sflag [#allocation3], %s456
        %s458 = sand.u32 %s335, 1
        %s459 = scalar_lea.vmem [#allocation2], %s458
        %p460 = scmp.lt.s32.totalorder %s28, 1
        %s461 = scalar_select %p460, %s28, 1
        %s462 = smul.addr %s461, 8
        %s463 = smul.addr %s462, 4
        %s464 = scalar_lea.vmem %s0, %s463
        %v466 = vld [vmem:[%s464] sm:$0xf]
        %v467 = vld [vmem:[%s464 + $0x4] sm:$0xf]
        %v468 = vld [vmem:[%s464 + $0x8] sm:$0xf]
        %v469 = vld [vmem:[%s464 + $0xc] sm:$0xf]
        %v470 = vld [vmem:[%s464 + $0x10] sm:$0xf]
        %v471 = vld [vmem:[%s464 + $0x14] sm:$0xf]
        %v472 = vld [vmem:[%s464 + $0x18] sm:$0xf]
        %v473 = vld [vmem:[%s464 + $0x1c] sm:$0xf]
        %v474 = vld [vmem:[%s1] sm:$0xf]
        %v475 = vld [vmem:[%s1 + $0x4] sm:$0xf]
        %v476 = vld [vmem:[%s1 + $0x8] sm:$0xf]
        %v477 = vld [vmem:[%s1 + $0xc] sm:$0xf]
        %v478 = vld [vmem:[%s1 + $0x10] sm:$0xf]
        %v479 = vld [vmem:[%s1 + $0x14] sm:$0xf]
        %v480 = vld [vmem:[%s1 + $0x18] sm:$0xf]
        %v481 = vld [vmem:[%s1 + $0x1c] sm:$0xf]
        %v482 = vld [vmem:[%s1 + $0x20] sm:$0xf]
        %v483 = vld [vmem:[%s1 + $0x24] sm:$0xf]
        %v484 = vld [vmem:[%s1 + $0x28] sm:$0x1]
        %v493 = vunpack.c.l.b16 %v466
        %v494 = vunpack.c.l.b16 %v467
        %v495 = vunpack.c.l.b16 %v468
        %v496 = vunpack.c.l.b16 %v469
        %v497 = vunpack.c.l.b16 %v470
        %v498 = vunpack.c.l.b16 %v471
        %v499 = vunpack.c.l.b16 %v472
        %v500 = vunpack.c.l.b16 %v473
        %v501 = vpack.c.b16 %v494, %v493
        %v502 = vpack.c.b16 %v496, %v495
        %v503 = vpack.c.b16 %v498, %v497
        %v504 = vpack.c.b16 %v500, %v499
        %v516 = vunpack.c.l.b16 %v474
        %v517 = vunpack.c.l.b16 %v475
        %v518 = vunpack.c.l.b16 %v476
        %v519 = vunpack.c.l.b16 %v477
        %v520 = vunpack.c.l.b16 %v478
        %v521 = vunpack.c.l.b16 %v479
        %v522 = vunpack.c.l.b16 %v480
        %v523 = vunpack.c.l.b16 %v481
        %v524 = vunpack.c.l.b16 %v482
        %v525 = vunpack.c.l.b16 %v483
        %v526 = vunpack.c.l.b16 %v484
        %v527 = vpack.c.b16 %v517, %v516
        %v528 = vpack.c.b16 %v519, %v518
        %v529 = vpack.c.b16 %v521, %v520
        %v530 = vpack.c.b16 %v523, %v522
        %v531 = vpack.c.b16 %v525, %v524
        %v532 = vpack.c.b16 %v526, %v526
        %vm538 = vcmask 662528
        %v540 = vsel %vm538, %v501, 0
        %v543 = vsel %vm538, %v502, 0
        %v546 = vsel %vm538, %v503, 0
        %v549 = vsel %vm538, %v504, 0
        %vm551 = vcmask 1040384
        %v552 = vsel 0, 4294967295, 65535
        %v553 = vsel %vm551, %v552, 0
        %v555 = vand.u32 %v532, %v553
        %557 = vmatprep.subr.bf16.mxu0 0
        %558 = vmatpush1.bf16.msra.mxu0 %v527
        %559 = vmatprep.subr.bf16.mxu0 0
        %560 = vmatpush1.bf16.msra.mxu0 %v528
        %561 = vmatprep.subr.bf16.mxu0 0
        %562 = vmatpush1.bf16.msra.mxu0 %v529
        %563 = vmatprep.subr.bf16.mxu0 0
        %564 = vmatpush1.bf16.msra.mxu0 %v530
        %565 = vmatprep.subr.bf16.mxu0 0
        %566 = vmatpush1.bf16.msra.mxu0 %v531
        %567 = vmatprep.subr.bf16.mxu0 0
        %568 = vmatpush1.bf16.msra.mxu0 %v555
        %569 = vmatprep.subr.bf16.mxu0 0
        %570 = vmatpush1.bf16.msra.mxu0 0
        %571 = vmatprep.subr.bf16.mxu0 0
        %572 = vmatpush1.bf16.msra.mxu0 0
        %573 = vmatprep.subr.bf16.mxu0 0
        %574 = vmatpush1.bf16.msra.mxu0 0
        %575 = vmatprep.subr.bf16.mxu0 0
        %576 = vmatpush1.bf16.msra.mxu0 0
        %577 = vmatprep.subr.bf16.mxu0 0
        %578 = vmatpush1.bf16.msra.mxu0 0
        %579 = vmatprep.subr.bf16.mxu0 0
        %580 = vmatpush1.bf16.msra.mxu0 0
        %581 = vmatprep.subr.bf16.mxu0 0
        %582 = vmatpush1.bf16.msra.mxu0 0
        %583 = vmatprep.subr.bf16.mxu0 0
        %584 = vmatpush1.bf16.msra.mxu0 0
        %585 = vmatprep.subr.bf16.mxu0 0
        %586 = vmatpush1.bf16.msra.mxu0 0
        %587 = vmatprep.subr.bf16.mxu0 0
        %588 = vmatpush1.bf16.msra.mxu0 0
        %589 = vmatprep.mubr.bf16.mxu0 0
        %590 = vmatmul.mubr.bf16.gmra.mrb[0].mxu0 %v540
        %v591 = vpop.f32.mrb[0].mxu0
        %v592 = vadd.f32 0.0, %v591
        %v593 = vpop.f32.mrb[0].mxu0
        %v594 = vpop.f32.mrb[0].mxu0
        %v595 = vadd.f32 0.0, %v594
        %v596 = vpop.f32.mrb[0].mxu0
        %597 = vmatprep.mubr.bf16.mxu0 0
        %598 = vmatmul.mubr.bf16.gmra.mrb[0].mxu0 %v543
        %v599 = vpop.f32.mrb[0].mxu0
        %v600 = vadd.f32 0.0, %v599
        %v601 = vpop.f32.mrb[0].mxu0
        %v602 = vpop.f32.mrb[0].mxu0
        %v603 = vadd.f32 0.0, %v602
        %v604 = vpop.f32.mrb[0].mxu0
        %605 = vmatprep.mubr.bf16.mxu0 0
        %606 = vmatmul.mubr.bf16.gmra.mrb[0].mxu0 %v546
        %v607 = vpop.f32.mrb[0].mxu0
        %v608 = vadd.f32 0.0, %v607
        %v609 = vpop.f32.mrb[0].mxu0
        %v610 = vpop.f32.mrb[0].mxu0
        %v611 = vadd.f32 0.0, %v610
        %v612 = vpop.f32.mrb[0].mxu0
        %613 = vmatprep.mubr.bf16.mxu0 0
        %614 = vmatmul.mubr.bf16.gmra.mrb[0].mxu0 %v549
        %v615 = vpop.f32.mrb[0].mxu0
        %v616 = vadd.f32 0.0, %v615
        %v617 = vpop.f32.mrb[0].mxu0
        %v618 = vpop.f32.mrb[0].mxu0
        %v619 = vadd.f32 0.0, %v618
        %v620 = vpop.f32.mrb[0].mxu0
        %621 = vdwg.mxu0
        %v622 = vpack.c.bf16 %v595, %v592
        %v623 = vpack.c.bf16 %v603, %v600
        %v624 = vpack.c.bf16 %v611, %v608
        %v625 = vpack.c.bf16 %v619, %v616
        %s626 = scalar_lea.vmem %s1, 44
        %v627 = vld [vmem:[%s626] sm:$0xf]
        %v628 = vld [vmem:[%s626 + $0x4] sm:$0xf]
        %v629 = vld [vmem:[%s626 + $0x8] sm:$0xf]
        %v630 = vld [vmem:[%s626 + $0xc] sm:$0xf]
        %v631 = vld [vmem:[%s626 + $0x10] sm:$0xf]
        %v632 = vld [vmem:[%s626 + $0x14] sm:$0xf]
        %v633 = vld [vmem:[%s626 + $0x18] sm:$0xf]
        %v634 = vld [vmem:[%s626 + $0x1c] sm:$0xf]
        %v635 = vld [vmem:[%s626 + $0x20] sm:$0xf]
        %v636 = vld [vmem:[%s626 + $0x24] sm:$0xf]
        %v637 = vld [vmem:[%s626 + $0x28] sm:$0x1]
        %v649 = vunpack.c.l.b16 %v627
        %v650 = vunpack.c.l.b16 %v628
        %v651 = vunpack.c.l.b16 %v629
        %v652 = vunpack.c.l.b16 %v630
        %v653 = vunpack.c.l.b16 %v631
        %v654 = vunpack.c.l.b16 %v632
        %v655 = vunpack.c.l.b16 %v633
        %v656 = vunpack.c.l.b16 %v634
        %v657 = vunpack.c.l.b16 %v635
        %v658 = vunpack.c.l.b16 %v636
        %v659 = vunpack.c.l.b16 %v637
        %v660 = vpack.c.b16 %v650, %v649
        %v661 = vpack.c.b16 %v652, %v651
        %v662 = vpack.c.b16 %v654, %v653
        %v663 = vpack.c.b16 %v656, %v655
        %v664 = vpack.c.b16 %v658, %v657
        %v665 = vpack.c.b16 %v659, %v659
        %v672 = vand.u32 %v665, %v553
        %674 = vmatprep.subr.bf16.mxu0 0
        %675 = vmatpush1.bf16.msra.mxu0 %v660
        %676 = vmatprep.subr.bf16.mxu0 0
        %677 = vmatpush1.bf16.msra.mxu0 %v661
        %678 = vmatprep.subr.bf16.mxu0 0
        %679 = vmatpush1.bf16.msra.mxu0 %v662
        %680 = vmatprep.subr.bf16.mxu0 0
        %681 = vmatpush1.bf16.msra.mxu0 %v663
        %682 = vmatprep.subr.bf16.mxu0 0
        %683 = vmatpush1.bf16.msra.mxu0 %v664
        %684 = vmatprep.subr.bf16.mxu0 0
        %685 = vmatpush1.bf16.msra.mxu0 %v672
        %686 = vmatprep.subr.bf16.mxu0 0
        %687 = vmatpush1.bf16.msra.mxu0 0
        %688 = vmatprep.subr.bf16.mxu0 0
        %689 = vmatpush1.bf16.msra.mxu0 0
        %690 = vmatprep.subr.bf16.mxu0 0
        %691 = vmatpush1.bf16.msra.mxu0 0
        %692 = vmatprep.subr.bf16.mxu0 0
        %693 = vmatpush1.bf16.msra.mxu0 0
        %694 = vmatprep.subr.bf16.mxu0 0
        %695 = vmatpush1.bf16.msra.mxu0 0
        %696 = vmatprep.subr.bf16.mxu0 0
        %697 = vmatpush1.bf16.msra.mxu0 0
        %698 = vmatprep.subr.bf16.mxu0 0
        %699 = vmatpush1.bf16.msra.mxu0 0
        %700 = vmatprep.subr.bf16.mxu0 0
        %701 = vmatpush1.bf16.msra.mxu0 0
        %702 = vmatprep.subr.bf16.mxu0 0
        %703 = vmatpush1.bf16.msra.mxu0 0
        %704 = vmatprep.subr.bf16.mxu0 0
        %705 = vmatpush1.bf16.msra.mxu0 0
        %706 = vmatprep.mubr.bf16.mxu0 0
        %707 = vmatmul.mubr.bf16.gmra.mrb[0].mxu0 %v540
        %v708 = vpop.f32.mrb[0].mxu0
        %v709 = vadd.f32 0.0, %v708
        %v710 = vpop.f32.mrb[0].mxu0
        %v711 = vpop.f32.mrb[0].mxu0
        %v712 = vadd.f32 0.0, %v711
        %v713 = vpop.f32.mrb[0].mxu0
        %714 = vmatprep.mubr.bf16.mxu0 0
        %715 = vmatmul.mubr.bf16.gmra.mrb[0].mxu0 %v543
        %v716 = vpop.f32.mrb[0].mxu0
        %v717 = vadd.f32 0.0, %v716
        %v718 = vpop.f32.mrb[0].mxu0
        %v719 = vpop.f32.mrb[0].mxu0
        %v720 = vadd.f32 0.0, %v719
        %v721 = vpop.f32.mrb[0].mxu0
        %722 = vmatprep.mubr.bf16.mxu0 0
        %723 = vmatmul.mubr.bf16.gmra.mrb[0].mxu0 %v546
        %v724 = vpop.f32.mrb[0].mxu0
        %v725 = vadd.f32 0.0, %v724
        %v726 = vpop.f32.mrb[0].mxu0
        %v727 = vpop.f32.mrb[0].mxu0
        %v728 = vadd.f32 0.0, %v727
        %v729 = vpop.f32.mrb[0].mxu0
        %730 = vmatprep.mubr.bf16.mxu0 0
        %731 = vmatmul.mubr.bf16.gmra.mrb[0].mxu0 %v549
        %v732 = vpop.f32.mrb[0].mxu0
        %v733 = vadd.f32 0.0, %v732
        %v734 = vpop.f32.mrb[0].mxu0
        %v735 = vpop.f32.mrb[0].mxu0
        %v736 = vadd.f32 0.0, %v735
        %v737 = vpop.f32.mrb[0].mxu0
        %738 = vdwg.mxu0
        %v739 = vpack.c.bf16 %v712, %v709
        %v740 = vpack.c.bf16 %v720, %v717
        %v741 = vpack.c.bf16 %v728, %v725
        %v742 = vpack.c.bf16 %v736, %v733
        %s743 = scalar_lea.vmem %s1, 88
        %v744 = vld [vmem:[%s743] sm:$0xf]
        %v745 = vld [vmem:[%s743 + $0x4] sm:$0xf]
        %v746 = vld [vmem:[%s743 + $0x8] sm:$0xf]
        %v747 = vld [vmem:[%s743 + $0xc] sm:$0xf]
        %v748 = vld [vmem:[%s743 + $0x10] sm:$0xf]
        %v749 = vld [vmem:[%s743 + $0x14] sm:$0xf]
        %v750 = vld [vmem:[%s743 + $0x18] sm:$0xf]
        %v751 = vld [vmem:[%s743 + $0x1c] sm:$0xf]
        %v752 = vld [vmem:[%s743 + $0x20] sm:$0xf]
        %v753 = vld [vmem:[%s743 + $0x24] sm:$0xf]
        %v754 = vld [vmem:[%s743 + $0x28] sm:$0x1]
        %v766 = vunpack.c.l.b16 %v744
        %v767 = vunpack.c.l.b16 %v745
        %v768 = vunpack.c.l.b16 %v746
        %v769 = vunpack.c.l.b16 %v747
        %v770 = vunpack.c.l.b16 %v748
        %v771 = vunpack.c.l.b16 %v749
        %v772 = vunpack.c.l.b16 %v750
        %v773 = vunpack.c.l.b16 %v751
        %v774 = vunpack.c.l.b16 %v752
        %v775 = vunpack.c.l.b16 %v753
        %v776 = vunpack.c.l.b16 %v754
        %v777 = vpack.c.b16 %v767, %v766
        %v778 = vpack.c.b16 %v769, %v768
        %v779 = vpack.c.b16 %v771, %v770
        %v780 = vpack.c.b16 %v773, %v772
        %v781 = vpack.c.b16 %v775, %v774
        %v782 = vpack.c.b16 %v776, %v776
        %v789 = vand.u32 %v782, %v553
        %791 = vmatprep.subr.bf16.mxu0 0
        %792 = vmatpush1.bf16.msra.mxu0 %v777
        %793 = vmatprep.subr.bf16.mxu0 0
        %794 = vmatpush1.bf16.msra.mxu0 %v778
        %795 = vmatprep.subr.bf16.mxu0 0
        %796 = vmatpush1.bf16.msra.mxu0 %v779
        %797 = vmatprep.subr.bf16.mxu0 0
        %798 = vmatpush1.bf16.msra.mxu0 %v780
        %799 = vmatprep.subr.bf16.mxu0 0
        %800 = vmatpush1.bf16.msra.mxu0 %v781
        %801 = vmatprep.subr.bf16.mxu0 0
        %802 = vmatpush1.bf16.msra.mxu0 %v789
        %803 = vmatprep.subr.bf16.mxu0 0
        %804 = vmatpush1.bf16.msra.mxu0 0
        %805 = vmatprep.subr.bf16.mxu0 0
        %806 = vmatpush1.bf16.msra.mxu0 0
        %807 = vmatprep.subr.bf16.mxu0 0
        %808 = vmatpush1.bf16.msra.mxu0 0
        %809 = vmatprep.subr.bf16.mxu0 0
        %810 = vmatpush1.bf16.msra.mxu0 0
        %811 = vmatprep.subr.bf16.mxu0 0
        %812 = vmatpush1.bf16.msra.mxu0 0
        %813 = vmatprep.subr.bf16.mxu0 0
        %814 = vmatpush1.bf16.msra.mxu0 0
        %815 = vmatprep.subr.bf16.mxu0 0
        %816 = vmatpush1.bf16.msra.mxu0 0
        %817 = vmatprep.subr.bf16.mxu0 0
        %818 = vmatpush1.bf16.msra.mxu0 0
        %819 = vmatprep.subr.bf16.mxu0 0
        %820 = vmatpush1.bf16.msra.mxu0 0
        %821 = vmatprep.subr.bf16.mxu0 0
        %822 = vmatpush1.bf16.msra.mxu0 0
        %823 = vmatprep.mubr.bf16.mxu0 0
        %824 = vmatmul.mubr.bf16.gmra.mrb[0].mxu0 %v540
        %v825 = vpop.f32.mrb[0].mxu0
        %v826 = vadd.f32 0.0, %v825
        %v827 = vpop.f32.mrb[0].mxu0
        %v828 = vpop.f32.mrb[0].mxu0
        %v829 = vadd.f32 0.0, %v828
        %v830 = vpop.f32.mrb[0].mxu0
        %831 = vmatprep.mubr.bf16.mxu0 0
        %832 = vmatmul.mubr.bf16.gmra.mrb[0].mxu0 %v543
        %v833 = vpop.f32.mrb[0].mxu0
        %v834 = vadd.f32 0.0, %v833
        %v835 = vpop.f32.mrb[0].mxu0
        %v836 = vpop.f32.mrb[0].mxu0
        %v837 = vadd.f32 0.0, %v836
        %v838 = vpop.f32.mrb[0].mxu0
        %839 = vmatprep.mubr.bf16.mxu0 0
        %840 = vmatmul.mubr.bf16.gmra.mrb[0].mxu0 %v546
        %v841 = vpop.f32.mrb[0].mxu0
        %v842 = vadd.f32 0.0, %v841
        %v843 = vpop.f32.mrb[0].mxu0
        %v844 = vpop.f32.mrb[0].mxu0
        %v845 = vadd.f32 0.0, %v844
        %v846 = vpop.f32.mrb[0].mxu0
        %847 = vmatprep.mubr.bf16.mxu0 0
        %848 = vmatmul.mubr.bf16.gmra.mrb[0].mxu0 %v549
        %v849 = vpop.f32.mrb[0].mxu0
        %v850 = vadd.f32 0.0, %v849
        %v851 = vpop.f32.mrb[0].mxu0
        %v852 = vpop.f32.mrb[0].mxu0
        %v853 = vadd.f32 0.0, %v852
        %v854 = vpop.f32.mrb[0].mxu0
        %855 = vdwg.mxu0
        %v856 = vpack.c.bf16 %v829, %v826
        %v857 = vpack.c.bf16 %v837, %v834
        %v858 = vpack.c.bf16 %v845, %v842
        %v859 = vpack.c.bf16 %v853, %v850
        %s860 = scalar_lea.vmem %s1, 132
        %v861 = vld [vmem:[%s860] sm:$0xf]
        %v862 = vld [vmem:[%s860 + $0x4] sm:$0xf]
        %v863 = vld [vmem:[%s860 + $0x8] sm:$0xf]
        %v864 = vld [vmem:[%s860 + $0xc] sm:$0xf]
        %v865 = vld [vmem:[%s860 + $0x10] sm:$0xf]
        %v866 = vld [vmem:[%s860 + $0x14] sm:$0xf]
        %v867 = vld [vmem:[%s860 + $0x18] sm:$0xf]
        %v868 = vld [vmem:[%s860 + $0x1c] sm:$0xf]
        %v869 = vld [vmem:[%s860 + $0x20] sm:$0xf]
        %v870 = vld [vmem:[%s860 + $0x24] sm:$0xf]
        %v871 = vld [vmem:[%s860 + $0x28] sm:$0x1]
        %v883 = vunpack.c.l.b16 %v861
        %v884 = vunpack.c.l.b16 %v862
        %v885 = vunpack.c.l.b16 %v863
        %v886 = vunpack.c.l.b16 %v864
        %v887 = vunpack.c.l.b16 %v865
        %v888 = vunpack.c.l.b16 %v866
        %v889 = vunpack.c.l.b16 %v867
        %v890 = vunpack.c.l.b16 %v868
        %v891 = vunpack.c.l.b16 %v869
        %v892 = vunpack.c.l.b16 %v870
        %v893 = vunpack.c.l.b16 %v871
        %v894 = vpack.c.b16 %v884, %v883
        %v895 = vpack.c.b16 %v886, %v885
        %v896 = vpack.c.b16 %v888, %v887
        %v897 = vpack.c.b16 %v890, %v889
        %v898 = vpack.c.b16 %v892, %v891
        %v899 = vpack.c.b16 %v893, %v893
        %v906 = vand.u32 %v899, %v553
        %908 = vmatprep.subr.bf16.mxu0 0
        %909 = vmatpush1.bf16.msra.mxu0 %v894
        %910 = vmatprep.subr.bf16.mxu0 0
        %911 = vmatpush1.bf16.msra.mxu0 %v895
        %912 = vmatprep.subr.bf16.mxu0 0
        %913 = vmatpush1.bf16.msra.mxu0 %v896
        %914 = vmatprep.subr.bf16.mxu0 0
        %915 = vmatpush1.bf16.msra.mxu0 %v897
        %916 = vmatprep.subr.bf16.mxu0 0
        %917 = vmatpush1.bf16.msra.mxu0 %v898
        %918 = vmatprep.subr.bf16.mxu0 0
        %919 = vmatpush1.bf16.msra.mxu0 %v906
        %920 = vmatprep.subr.bf16.mxu0 0
        %921 = vmatpush1.bf16.msra.mxu0 0
        %922 = vmatprep.subr.bf16.mxu0 0
        %923 = vmatpush1.bf16.msra.mxu0 0
        %924 = vmatprep.subr.bf16.mxu0 0
        %925 = vmatpush1.bf16.msra.mxu0 0
        %926 = vmatprep.subr.bf16.mxu0 0
        %927 = vmatpush1.bf16.msra.mxu0 0
        %928 = vmatprep.subr.bf16.mxu0 0
        %929 = vmatpush1.bf16.msra.mxu0 0
        %930 = vmatprep.subr.bf16.mxu0 0
        %931 = vmatpush1.bf16.msra.mxu0 0
        %932 = vmatprep.subr.bf16.mxu0 0
        %933 = vmatpush1.bf16.msra.mxu0 0
        %934 = vmatprep.subr.bf16.mxu0 0
        %935 = vmatpush1.bf16.msra.mxu0 0
        %936 = vmatprep.subr.bf16.mxu0 0
        %937 = vmatpush1.bf16.msra.mxu0 0
        %938 = vmatprep.subr.bf16.mxu0 0
        %939 = vmatpush1.bf16.msra.mxu0 0
        %940 = vmatprep.mubr.bf16.mxu0 0
        %941 = vmatmul.mubr.bf16.gmra.mrb[0].mxu0 %v540
        %v942 = vpop.f32.mrb[0].mxu0
        %v943 = vadd.f32 0.0, %v942
        %v944 = vpop.f32.mrb[0].mxu0
        %v945 = vpop.f32.mrb[0].mxu0
        %v946 = vadd.f32 0.0, %v945
        %v947 = vpop.f32.mrb[0].mxu0
        %948 = vmatprep.mubr.bf16.mxu0 0
        %949 = vmatmul.mubr.bf16.gmra.mrb[0].mxu0 %v543
        %v950 = vpop.f32.mrb[0].mxu0
        %v951 = vadd.f32 0.0, %v950
        %v952 = vpop.f32.mrb[0].mxu0
        %v953 = vpop.f32.mrb[0].mxu0
        %v954 = vadd.f32 0.0, %v953
        %v955 = vpop.f32.mrb[0].mxu0
        %956 = vmatprep.mubr.bf16.mxu0 0
        %957 = vmatmul.mubr.bf16.gmra.mrb[0].mxu0 %v546
        %v958 = vpop.f32.mrb[0].mxu0
        %v959 = vadd.f32 0.0, %v958
        %v960 = vpop.f32.mrb[0].mxu0
        %v961 = vpop.f32.mrb[0].mxu0
        %v962 = vadd.f32 0.0, %v961
        %v963 = vpop.f32.mrb[0].mxu0
        %964 = vmatprep.mubr.bf16.mxu0 0
        %965 = vmatmul.mubr.bf16.gmra.mrb[0].mxu0 %v549
        %v966 = vpop.f32.mrb[0].mxu0
        %v967 = vadd.f32 0.0, %v966
        %v968 = vpop.f32.mrb[0].mxu0
        %v969 = vpop.f32.mrb[0].mxu0
        %v970 = vadd.f32 0.0, %v969
        %v971 = vpop.f32.mrb[0].mxu0
        %972 = vdwg.mxu0
        %v973 = vpack.c.bf16 %v946, %v943
        %v974 = vpack.c.bf16 %v954, %v951
        %v975 = vpack.c.bf16 %v962, %v959
        %v976 = vpack.c.bf16 %v970, %v967
        %v977 = vld [vmem:[%s4] sm:$0xff]
        %v978 = vld [vmem:[%s4 + $0x8] sm:$0xff]
        %v979 = vld [vmem:[%s4 + $0x10] sm:$0xff]
        %v980 = vld [vmem:[%s4 + $0x18] sm:$0xff]
        %v981 = vld [vmem:[%s5] sm:$0xff]
        %v982 = vld [vmem:[%s5 + $0x8] sm:$0xff]
        %v983 = vld [vmem:[%s5 + $0x10] sm:$0xff]
        %v984 = vld [vmem:[%s5 + $0x18] sm:$0xff]
        %986 = vset.pattern.permute.xlu0 0
        %987 = vperm.xlu0 %986, %v981
        %v988 = vpop.permute.xlu0 %987
        %991 = vset.pattern.permute.xlu0 0
        %992 = vperm.xlu0 %991, %v982
        %v993 = vpop.permute.xlu0 %992
        %996 = vset.pattern.permute.xlu0 0
        %997 = vperm.xlu0 %996, %v983
        %v998 = vpop.permute.xlu0 %997
        %1001 = vset.pattern.permute.xlu0 0
        %1002 = vperm.xlu0 %1001, %v984
        %v1003 = vpop.permute.xlu0 %1002
        %v1009 = vunpack.c.l.b16 %v977
        %v1010 = vunpack.c.h.b16 %v977
        %v1011 = vunpack.c.l.b16 %v978
        %v1012 = vunpack.c.h.b16 %v978
        %v1013 = vunpack.c.l.b16 %v979
        %v1014 = vunpack.c.h.b16 %v979
        %v1015 = vunpack.c.l.b16 %v980
        %v1016 = vunpack.c.h.b16 %v980
        %v1017 = vpack.c.b16 %v1011, %v1009
        %v1018 = vpack.c.b16 %v1012, %v1010
        %v1019 = vpack.c.b16 %v1015, %v1013
        %v1020 = vpack.c.b16 %v1016, %v1014
        %1025 = vmatprep.subr.bf16.mxu0 0
        %1026 = vmatpush1.bf16.msra.mxu0 %v622
        %1027 = vmatprep.subr.bf16.mxu0 0
        %1028 = vmatpush1.bf16.msra.mxu0 %v623
        %1029 = vmatprep.subr.bf16.mxu0 0
        %1030 = vmatpush1.bf16.msra.mxu0 %v624
        %1031 = vmatprep.subr.bf16.mxu0 0
        %1032 = vmatpush1.bf16.msra.mxu0 %v625
        %1033 = vmatprep.subr.bf16.mxu0 0
        %1034 = vmatpush1.bf16.msra.mxu0 %v739
        %1035 = vmatprep.subr.bf16.mxu0 0
        %1036 = vmatpush1.bf16.msra.mxu0 %v740
        %1037 = vmatprep.subr.bf16.mxu0 0
        %1038 = vmatpush1.bf16.msra.mxu0 %v741
        %1039 = vmatprep.subr.bf16.mxu0 0
        %1040 = vmatpush1.bf16.msra.mxu0 %v742
        %1041 = vmatprep.subr.bf16.mxu0 0
        %1042 = vmatpush1.bf16.msra.mxu0 %v856
        %1043 = vmatprep.subr.bf16.mxu0 0
        %1044 = vmatpush1.bf16.msra.mxu0 %v857
        %1045 = vmatprep.subr.bf16.mxu0 0
        %1046 = vmatpush1.bf16.msra.mxu0 %v858
        %1047 = vmatprep.subr.bf16.mxu0 0
        %1048 = vmatpush1.bf16.msra.mxu0 %v859
        %1049 = vmatprep.subr.bf16.mxu0 0
        %1050 = vmatpush1.bf16.msra.mxu0 %v973
        %1051 = vmatprep.subr.bf16.mxu0 0
        %1052 = vmatpush1.bf16.msra.mxu0 %v974
        %1053 = vmatprep.subr.bf16.mxu0 0
        %1054 = vmatpush1.bf16.msra.mxu0 %v975
        %1055 = vmatprep.subr.bf16.mxu0 0
        %1056 = vmatpush1.bf16.msra.mxu0 %v976
        %1057 = vmatprep.mubr.bf16.mxu0 %v1018
        %1058 = vmatmul.mubr.bf16.gmra.mrb[0].mxu0 %v1017
        %v1059 = vpop.f32.mrb[0].mxu0
        %v1060 = vadd.f32 %v988, %v1059
        %v1061 = vpop.f32.mrb[0].mxu0
        %v1062 = vpop.f32.mrb[0].mxu0
        %v1063 = vadd.f32 %v993, %v1062
        %v1064 = vpop.f32.mrb[0].mxu0
        %1065 = vmatprep.mubr.bf16.mxu0 %v1020
        %1066 = vmatmul.mubr.bf16.gmra.mrb[0].mxu0 %v1019
        %v1067 = vpop.f32.mrb[0].mxu0
        %v1068 = vadd.f32 %v998, %v1067
        %v1069 = vpop.f32.mrb[0].mxu0
        %v1070 = vpop.f32.mrb[0].mxu0
        %v1071 = vadd.f32 %v1003, %v1070
        %v1072 = vpop.f32.mrb[0].mxu0
        %1073 = vdwg.mxu0
        %v1074 = vmax.f32 %v1060, 0.0
        %v1075 = vmax.f32 %v1063, 0.0
        %v1076 = vmax.f32 %v1068, 0.0
        %v1077 = vmax.f32 %v1071, 0.0
        %v1078 = vpack.c.bf16 %v1075, %v1074
        %v1079 = vpack.c.bf16 %v1077, %v1076
        %v1080 = vld [vmem:[%s2] sm:$0xf]
        %v1081 = vld [vmem:[%s2 + $0x4] sm:$0xf]
        %v1082 = vld [vmem:[%s2 + $0x8] sm:$0xf]
        %v1083 = vld [vmem:[%s2 + $0xc] sm:$0xf]
        %v1084 = vld [vmem:[%s2 + $0x10] sm:$0xf]
        %v1085 = vld [vmem:[%s2 + $0x14] sm:$0xf]
        %v1086 = vld [vmem:[%s2 + $0x18] sm:$0xf]
        %v1087 = vld [vmem:[%s2 + $0x1c] sm:$0xf]
        %v1096 = vunpack.c.l.b16 %v1080
        %v1097 = vunpack.c.l.b16 %v1081
        %v1098 = vunpack.c.l.b16 %v1082
        %v1099 = vunpack.c.l.b16 %v1083
        %v1100 = vunpack.c.l.b16 %v1084
        %v1101 = vunpack.c.l.b16 %v1085
        %v1102 = vunpack.c.l.b16 %v1086
        %v1103 = vunpack.c.l.b16 %v1087
        %v1104 = vpack.c.b16 %v1097, %v1096
        %v1105 = vpack.c.b16 %v1099, %v1098
        %v1106 = vpack.c.b16 %v1101, %v1100
        %v1107 = vpack.c.b16 %v1103, %v1102
        %vm1112 = vcmask 523264
        %v1114 = vsel %vm1112, %v1078, 0
        %v1117 = vsel %vm1112, %v1079, 0
        %1119 = vmatprep.subr.bf16.mxu0 0
        %1120 = vmatpush1.bf16.msra.mxu0 %v1104
        %1121 = vmatprep.subr.bf16.mxu0 0
        %1122 = vmatpush1.bf16.msra.mxu0 %v1105
        %1123 = vmatprep.subr.bf16.mxu0 0
        %1124 = vmatpush1.bf16.msra.mxu0 %v1106
        %1125 = vmatprep.subr.bf16.mxu0 0
        %1126 = vmatpush1.bf16.msra.mxu0 %v1107
        %1127 = vmatprep.subr.bf16.mxu0 0
        %1128 = vmatpush1.bf16.msra.mxu0 0
        %1129 = vmatprep.subr.bf16.mxu0 0
        %1130 = vmatpush1.bf16.msra.mxu0 0
        %1131 = vmatprep.subr.bf16.mxu0 0
        %1132 = vmatpush1.bf16.msra.mxu0 0
        %1133 = vmatprep.subr.bf16.mxu0 0
        %1134 = vmatpush1.bf16.msra.mxu0 0
        %1135 = vmatprep.subr.bf16.mxu0 0
        %1136 = vmatpush1.bf16.msra.mxu0 0
        %1137 = vmatprep.subr.bf16.mxu0 0
        %1138 = vmatpush1.bf16.msra.mxu0 0
        %1139 = vmatprep.subr.bf16.mxu0 0
        %1140 = vmatpush1.bf16.msra.mxu0 0
        %1141 = vmatprep.subr.bf16.mxu0 0
        %1142 = vmatpush1.bf16.msra.mxu0 0
        %1143 = vmatprep.subr.bf16.mxu0 0
        %1144 = vmatpush1.bf16.msra.mxu0 0
        %1145 = vmatprep.subr.bf16.mxu0 0
        %1146 = vmatpush1.bf16.msra.mxu0 0
        %1147 = vmatprep.subr.bf16.mxu0 0
        %1148 = vmatpush1.bf16.msra.mxu0 0
        %1149 = vmatprep.subr.bf16.mxu0 0
        %1150 = vmatpush1.bf16.msra.mxu0 0
        %1151 = vmatprep.mubr.bf16.mxu0 0
        %1152 = vmatmul.mubr.bf16.gmra.mrb[0].mxu0 %v1114
        %v1153 = vpop.f32.mrb[0].mxu0
        %v1154 = vadd.f32 0.0, %v1153
        %v1155 = vpop.f32.mrb[0].mxu0
        %v1156 = vpop.f32.mrb[0].mxu0
        %v1157 = vadd.f32 0.0, %v1156
        %v1158 = vpop.f32.mrb[0].mxu0
        %1159 = vmatprep.mubr.bf16.mxu0 0
        %1160 = vmatmul.mubr.bf16.gmra.mrb[0].mxu0 %v1117
        %v1161 = vpop.f32.mrb[0].mxu0
        %v1162 = vadd.f32 0.0, %v1161
        %v1163 = vpop.f32.mrb[0].mxu0
        %v1164 = vpop.f32.mrb[0].mxu0
        %v1165 = vadd.f32 0.0, %v1164
        %v1166 = vpop.f32.mrb[0].mxu0
        %1167 = vdwg.mxu0
        %v1168 = vpack.c.bf16 %v1157, %v1154
        %v1169 = vpack.c.bf16 %v1165, %v1162
        %s1170 = scalar_lea.vmem %s2, 32
        %v1171 = vld [vmem:[%s1170] sm:$0xf]
        %v1172 = vld [vmem:[%s1170 + $0x4] sm:$0xf]
        %v1173 = vld [vmem:[%s1170 + $0x8] sm:$0xf]
        %v1174 = vld [vmem:[%s1170 + $0xc] sm:$0xf]
        %v1175 = vld [vmem:[%s1170 + $0x10] sm:$0xf]
        %v1176 = vld [vmem:[%s1170 + $0x14] sm:$0xf]
        %v1177 = vld [vmem:[%s1170 + $0x18] sm:$0xf]
        %v1178 = vld [vmem:[%s1170 + $0x1c] sm:$0xf]
        %v1187 = vunpack.c.l.b16 %v1171
        %v1188 = vunpack.c.l.b16 %v1172
        %v1189 = vunpack.c.l.b16 %v1173
        %v1190 = vunpack.c.l.b16 %v1174
        %v1191 = vunpack.c.l.b16 %v1175
        %v1192 = vunpack.c.l.b16 %v1176
        %v1193 = vunpack.c.l.b16 %v1177
        %v1194 = vunpack.c.l.b16 %v1178
        %v1195 = vpack.c.b16 %v1188, %v1187
        %v1196 = vpack.c.b16 %v1190, %v1189
        %v1197 = vpack.c.b16 %v1192, %v1191
        %v1198 = vpack.c.b16 %v1194, %v1193
        %1203 = vmatprep.subr.bf16.mxu0 0
        %1204 = vmatpush1.bf16.msra.mxu0 %v1195
        %1205 = vmatprep.subr.bf16.mxu0 0
        %1206 = vmatpush1.bf16.msra.mxu0 %v1196
        %1207 = vmatprep.subr.bf16.mxu0 0
        %1208 = vmatpush1.bf16.msra.mxu0 %v1197
        %1209 = vmatprep.subr.bf16.mxu0 0
        %1210 = vmatpush1.bf16.msra.mxu0 %v1198
        %1211 = vmatprep.subr.bf16.mxu0 0
        %1212 = vmatpush1.bf16.msra.mxu0 0
        %1213 = vmatprep.subr.bf16.mxu0 0
        %1214 = vmatpush1.bf16.msra.mxu0 0
        %1215 = vmatprep.subr.bf16.mxu0 0
        %1216 = vmatpush1.bf16.msra.mxu0 0
        %1217 = vmatprep.subr.bf16.mxu0 0
        %1218 = vmatpush1.bf16.msra.mxu0 0
        %1219 = vmatprep.subr.bf16.mxu0 0
        %1220 = vmatpush1.bf16.msra.mxu0 0
        %1221 = vmatprep.subr.bf16.mxu0 0
        %1222 = vmatpush1.bf16.msra.mxu0 0
        %1223 = vmatprep.subr.bf16.mxu0 0
        %1224 = vmatpush1.bf16.msra.mxu0 0
        %1225 = vmatprep.subr.bf16.mxu0 0
        %1226 = vmatpush1.bf16.msra.mxu0 0
        %1227 = vmatprep.subr.bf16.mxu0 0
        %1228 = vmatpush1.bf16.msra.mxu0 0
        %1229 = vmatprep.subr.bf16.mxu0 0
        %1230 = vmatpush1.bf16.msra.mxu0 0
        %1231 = vmatprep.subr.bf16.mxu0 0
        %1232 = vmatpush1.bf16.msra.mxu0 0
        %1233 = vmatprep.subr.bf16.mxu0 0
        %1234 = vmatpush1.bf16.msra.mxu0 0
        %1235 = vmatprep.mubr.bf16.mxu0 0
        %1236 = vmatmul.mubr.bf16.gmra.mrb[0].mxu0 %v1114
        %v1237 = vpop.f32.mrb[0].mxu0
        %v1238 = vadd.f32 0.0, %v1237
        %v1239 = vpop.f32.mrb[0].mxu0
        %v1240 = vpop.f32.mrb[0].mxu0
        %v1241 = vadd.f32 0.0, %v1240
        %v1242 = vpop.f32.mrb[0].mxu0
        %1243 = vmatprep.mubr.bf16.mxu0 0
        %1244 = vmatmul.mubr.bf16.gmra.mrb[0].mxu0 %v1117
        %v1245 = vpop.f32.mrb[0].mxu0
        %v1246 = vadd.f32 0.0, %v1245
        %v1247 = vpop.f32.mrb[0].mxu0
        %v1248 = vpop.f32.mrb[0].mxu0
        %v1249 = vadd.f32 0.0, %v1248
        %v1250 = vpop.f32.mrb[0].mxu0
        %1251 = vdwg.mxu0
        %v1252 = vpack.c.bf16 %v1241, %v1238
        %v1253 = vpack.c.bf16 %v1249, %v1246
        %s1254 = scalar_lea.vmem %s2, 64
        %v1255 = vld [vmem:[%s1254] sm:$0xf]
        %v1256 = vld [vmem:[%s1254 + $0x4] sm:$0xf]
        %v1257 = vld [vmem:[%s1254 + $0x8] sm:$0xf]
        %v1258 = vld [vmem:[%s1254 + $0xc] sm:$0xf]
        %v1259 = vld [vmem:[%s1254 + $0x10] sm:$0xf]
        %v1260 = vld [vmem:[%s1254 + $0x14] sm:$0xf]
        %v1261 = vld [vmem:[%s1254 + $0x18] sm:$0xf]
        %v1262 = vld [vmem:[%s1254 + $0x1c] sm:$0xf]
        %v1271 = vunpack.c.l.b16 %v1255
        %v1272 = vunpack.c.l.b16 %v1256
        %v1273 = vunpack.c.l.b16 %v1257
        %v1274 = vunpack.c.l.b16 %v1258
        %v1275 = vunpack.c.l.b16 %v1259
        %v1276 = vunpack.c.l.b16 %v1260
        %v1277 = vunpack.c.l.b16 %v1261
        %v1278 = vunpack.c.l.b16 %v1262
        %v1279 = vpack.c.b16 %v1272, %v1271
        %v1280 = vpack.c.b16 %v1274, %v1273
        %v1281 = vpack.c.b16 %v1276, %v1275
        %v1282 = vpack.c.b16 %v1278, %v1277
        %1287 = vmatprep.subr.bf16.mxu0 0
        %1288 = vmatpush1.bf16.msra.mxu0 %v1279
        %1289 = vmatprep.subr.bf16.mxu0 0
        %1290 = vmatpush1.bf16.msra.mxu0 %v1280
        %1291 = vmatprep.subr.bf16.mxu0 0
        %1292 = vmatpush1.bf16.msra.mxu0 %v1281
        %1293 = vmatprep.subr.bf16.mxu0 0
        %1294 = vmatpush1.bf16.msra.mxu0 %v1282
        %1295 = vmatprep.subr.bf16.mxu0 0
        %1296 = vmatpush1.bf16.msra.mxu0 0
        %1297 = vmatprep.subr.bf16.mxu0 0
        %1298 = vmatpush1.bf16.msra.mxu0 0
        %1299 = vmatprep.subr.bf16.mxu0 0
        %1300 = vmatpush1.bf16.msra.mxu0 0
        %1301 = vmatprep.subr.bf16.mxu0 0
        %1302 = vmatpush1.bf16.msra.mxu0 0
        %1303 = vmatprep.subr.bf16.mxu0 0
        %1304 = vmatpush1.bf16.msra.mxu0 0
        %1305 = vmatprep.subr.bf16.mxu0 0
        %1306 = vmatpush1.bf16.msra.mxu0 0
        %1307 = vmatprep.subr.bf16.mxu0 0
        %1308 = vmatpush1.bf16.msra.mxu0 0
        %1309 = vmatprep.subr.bf16.mxu0 0
        %1310 = vmatpush1.bf16.msra.mxu0 0
        %1311 = vmatprep.subr.bf16.mxu0 0
        %1312 = vmatpush1.bf16.msra.mxu0 0
        %1313 = vmatprep.subr.bf16.mxu0 0
        %1314 = vmatpush1.bf16.msra.mxu0 0
        %1315 = vmatprep.subr.bf16.mxu0 0
        %1316 = vmatpush1.bf16.msra.mxu0 0
        %1317 = vmatprep.subr.bf16.mxu0 0
        %1318 = vmatpush1.bf16.msra.mxu0 0
        %1319 = vmatprep.mubr.bf16.mxu0 0
        %1320 = vmatmul.mubr.bf16.gmra.mrb[0].mxu0 %v1114
        %v1321 = vpop.f32.mrb[0].mxu0
        %v1322 = vadd.f32 0.0, %v1321
        %v1323 = vpop.f32.mrb[0].mxu0
        %v1324 = vpop.f32.mrb[0].mxu0
        %v1325 = vadd.f32 0.0, %v1324
        %v1326 = vpop.f32.mrb[0].mxu0
        %1327 = vmatprep.mubr.bf16.mxu0 0
        %1328 = vmatmul.mubr.bf16.gmra.mrb[0].mxu0 %v1117
        %v1329 = vpop.f32.mrb[0].mxu0
        %v1330 = vadd.f32 0.0, %v1329
        %v1331 = vpop.f32.mrb[0].mxu0
        %v1332 = vpop.f32.mrb[0].mxu0
        %v1333 = vadd.f32 0.0, %v1332
        %v1334 = vpop.f32.mrb[0].mxu0
        %1335 = vdwg.mxu0
        %v1336 = vpack.c.bf16 %v1325, %v1322
        %v1337 = vpack.c.bf16 %v1333, %v1330
        %s1338 = scalar_lea.vmem %s2, 96
        %v1339 = vld [vmem:[%s1338] sm:$0xf]
        %v1340 = vld [vmem:[%s1338 + $0x4] sm:$0xf]
        %v1341 = vld [vmem:[%s1338 + $0x8] sm:$0xf]
        %v1342 = vld [vmem:[%s1338 + $0xc] sm:$0xf]
        %v1343 = vld [vmem:[%s1338 + $0x10] sm:$0xf]
        %v1344 = vld [vmem:[%s1338 + $0x14] sm:$0xf]
        %v1345 = vld [vmem:[%s1338 + $0x18] sm:$0xf]
        %v1346 = vld [vmem:[%s1338 + $0x1c] sm:$0xf]
        %v1355 = vunpack.c.l.b16 %v1339
        %v1356 = vunpack.c.l.b16 %v1340
        %v1357 = vunpack.c.l.b16 %v1341
        %v1358 = vunpack.c.l.b16 %v1342
        %v1359 = vunpack.c.l.b16 %v1343
        %v1360 = vunpack.c.l.b16 %v1344
        %v1361 = vunpack.c.l.b16 %v1345
        %v1362 = vunpack.c.l.b16 %v1346
        %v1363 = vpack.c.b16 %v1356, %v1355
        %v1364 = vpack.c.b16 %v1358, %v1357
        %v1365 = vpack.c.b16 %v1360, %v1359
        %v1366 = vpack.c.b16 %v1362, %v1361
        %1371 = vmatprep.subr.bf16.mxu0 0
        %1372 = vmatpush1.bf16.msra.mxu0 %v1363
        %1373 = vmatprep.subr.bf16.mxu0 0
        %1374 = vmatpush1.bf16.msra.mxu0 %v1364
        %1375 = vmatprep.subr.bf16.mxu0 0
        %1376 = vmatpush1.bf16.msra.mxu0 %v1365
        %1377 = vmatprep.subr.bf16.mxu0 0
        %1378 = vmatpush1.bf16.msra.mxu0 %v1366
        %1379 = vmatprep.subr.bf16.mxu0 0
        %1380 = vmatpush1.bf16.msra.mxu0 0
        %1381 = vmatprep.subr.bf16.mxu0 0
        %1382 = vmatpush1.bf16.msra.mxu0 0
        %1383 = vmatprep.subr.bf16.mxu0 0
        %1384 = vmatpush1.bf16.msra.mxu0 0
        %1385 = vmatprep.subr.bf16.mxu0 0
        %1386 = vmatpush1.bf16.msra.mxu0 0
        %1387 = vmatprep.subr.bf16.mxu0 0
        %1388 = vmatpush1.bf16.msra.mxu0 0
        %1389 = vmatprep.subr.bf16.mxu0 0
        %1390 = vmatpush1.bf16.msra.mxu0 0
        %1391 = vmatprep.subr.bf16.mxu0 0
        %1392 = vmatpush1.bf16.msra.mxu0 0
        %1393 = vmatprep.subr.bf16.mxu0 0
        %1394 = vmatpush1.bf16.msra.mxu0 0
        %1395 = vmatprep.subr.bf16.mxu0 0
        %1396 = vmatpush1.bf16.msra.mxu0 0
        %1397 = vmatprep.subr.bf16.mxu0 0
        %1398 = vmatpush1.bf16.msra.mxu0 0
        %1399 = vmatprep.subr.bf16.mxu0 0
        %1400 = vmatpush1.bf16.msra.mxu0 0
        %1401 = vmatprep.subr.bf16.mxu0 0
        %1402 = vmatpush1.bf16.msra.mxu0 0
        %1403 = vmatprep.mubr.bf16.mxu0 0
        %1404 = vmatmul.mubr.bf16.gmra.mrb[0].mxu0 %v1114
        %v1405 = vpop.f32.mrb[0].mxu0
        %v1406 = vadd.f32 0.0, %v1405
        %v1407 = vpop.f32.mrb[0].mxu0
        %v1408 = vpop.f32.mrb[0].mxu0
        %v1409 = vadd.f32 0.0, %v1408
        %v1410 = vpop.f32.mrb[0].mxu0
        %1411 = vmatprep.mubr.bf16.mxu0 0
        %1412 = vmatmul.mubr.bf16.gmra.mrb[0].mxu0 %v1117
        %v1413 = vpop.f32.mrb[0].mxu0
        %v1414 = vadd.f32 0.0, %v1413
        %v1415 = vpop.f32.mrb[0].mxu0
        %v1416 = vpop.f32.mrb[0].mxu0
        %v1417 = vadd.f32 0.0, %v1416
        %v1418 = vpop.f32.mrb[0].mxu0
        %1419 = vdwg.mxu0
        %v1420 = vpack.c.bf16 %v1409, %v1406
        %v1421 = vpack.c.bf16 %v1417, %v1414
        %s1422 = scalar_lea.vmem %s2, 128
        %v1423 = vld [vmem:[%s1422] sm:$0xf]
        %v1424 = vld [vmem:[%s1422 + $0x4] sm:$0xf]
        %v1425 = vld [vmem:[%s1422 + $0x8] sm:$0xf]
        %v1426 = vld [vmem:[%s1422 + $0xc] sm:$0xf]
        %v1427 = vld [vmem:[%s1422 + $0x10] sm:$0xf]
        %v1428 = vld [vmem:[%s1422 + $0x14] sm:$0xf]
        %v1429 = vld [vmem:[%s1422 + $0x18] sm:$0xf]
        %v1430 = vld [vmem:[%s1422 + $0x1c] sm:$0xf]
        %v1439 = vunpack.c.l.b16 %v1423
        %v1440 = vunpack.c.l.b16 %v1424
        %v1441 = vunpack.c.l.b16 %v1425
        %v1442 = vunpack.c.l.b16 %v1426
        %v1443 = vunpack.c.l.b16 %v1427
        %v1444 = vunpack.c.l.b16 %v1428
        %v1445 = vunpack.c.l.b16 %v1429
        %v1446 = vunpack.c.l.b16 %v1430
        %v1447 = vpack.c.b16 %v1440, %v1439
        %v1448 = vpack.c.b16 %v1442, %v1441
        %v1449 = vpack.c.b16 %v1444, %v1443
        %v1450 = vpack.c.b16 %v1446, %v1445
        %1455 = vmatprep.subr.bf16.mxu0 0
        %1456 = vmatpush1.bf16.msra.mxu0 %v1447
        %1457 = vmatprep.subr.bf16.mxu0 0
        %1458 = vmatpush1.bf16.msra.mxu0 %v1448
        %1459 = vmatprep.subr.bf16.mxu0 0
        %1460 = vmatpush1.bf16.msra.mxu0 %v1449
        %1461 = vmatprep.subr.bf16.mxu0 0
        %1462 = vmatpush1.bf16.msra.mxu0 %v1450
        %1463 = vmatprep.subr.bf16.mxu0 0
        %1464 = vmatpush1.bf16.msra.mxu0 0
        %1465 = vmatprep.subr.bf16.mxu0 0
        %1466 = vmatpush1.bf16.msra.mxu0 0
        %1467 = vmatprep.subr.bf16.mxu0 0
        %1468 = vmatpush1.bf16.msra.mxu0 0
        %1469 = vmatprep.subr.bf16.mxu0 0
        %1470 = vmatpush1.bf16.msra.mxu0 0
        %1471 = vmatprep.subr.bf16.mxu0 0
        %1472 = vmatpush1.bf16.msra.mxu0 0
        %1473 = vmatprep.subr.bf16.mxu0 0
        %1474 = vmatpush1.bf16.msra.mxu0 0
        %1475 = vmatprep.subr.bf16.mxu0 0
        %1476 = vmatpush1.bf16.msra.mxu0 0
        %1477 = vmatprep.subr.bf16.mxu0 0
        %1478 = vmatpush1.bf16.msra.mxu0 0
        %1479 = vmatprep.subr.bf16.mxu0 0
        %1480 = vmatpush1.bf16.msra.mxu0 0
        %1481 = vmatprep.subr.bf16.mxu0 0
        %1482 = vmatpush1.bf16.msra.mxu0 0
        %1483 = vmatprep.subr.bf16.mxu0 0
        %1484 = vmatpush1.bf16.msra.mxu0 0
        %1485 = vmatprep.subr.bf16.mxu0 0
        %1486 = vmatpush1.bf16.msra.mxu0 0
        %1487 = vmatprep.mubr.bf16.mxu0 0
        %1488 = vmatmul.mubr.bf16.gmra.mrb[0].mxu0 %v1114
        %v1489 = vpop.f32.mrb[0].mxu0
        %v1490 = vadd.f32 0.0, %v1489
        %v1491 = vpop.f32.mrb[0].mxu0
        %v1492 = vpop.f32.mrb[0].mxu0
        %v1493 = vadd.f32 0.0, %v1492
        %v1494 = vpop.f32.mrb[0].mxu0
        %1495 = vmatprep.mubr.bf16.mxu0 0
        %1496 = vmatmul.mubr.bf16.gmra.mrb[0].mxu0 %v1117
        %v1497 = vpop.f32.mrb[0].mxu0
        %v1498 = vadd.f32 0.0, %v1497
        %v1499 = vpop.f32.mrb[0].mxu0
        %v1500 = vpop.f32.mrb[0].mxu0
        %v1501 = vadd.f32 0.0, %v1500
        %v1502 = vpop.f32.mrb[0].mxu0
        %1503 = vdwg.mxu0
        %v1504 = vpack.c.bf16 %v1493, %v1490
        %v1505 = vpack.c.bf16 %v1501, %v1498
        %s1506 = scalar_lea.vmem %s2, 160
        %v1507 = vld [vmem:[%s1506] sm:$0xf]
        %v1508 = vld [vmem:[%s1506 + $0x4] sm:$0xf]
        %v1509 = vld [vmem:[%s1506 + $0x8] sm:$0xf]
        %v1510 = vld [vmem:[%s1506 + $0xc] sm:$0xf]
        %v1511 = vld [vmem:[%s1506 + $0x10] sm:$0xf]
        %v1512 = vld [vmem:[%s1506 + $0x14] sm:$0xf]
        %v1513 = vld [vmem:[%s1506 + $0x18] sm:$0xf]
        %v1514 = vld [vmem:[%s1506 + $0x1c] sm:$0xf]
        %v1523 = vunpack.c.l.b16 %v1507
        %v1524 = vunpack.c.l.b16 %v1508
        %v1525 = vunpack.c.l.b16 %v1509
        %v1526 = vunpack.c.l.b16 %v1510
        %v1527 = vunpack.c.l.b16 %v1511
        %v1528 = vunpack.c.l.b16 %v1512
        %v1529 = vunpack.c.l.b16 %v1513
        %v1530 = vunpack.c.l.b16 %v1514
        %v1531 = vpack.c.b16 %v1524, %v1523
        %v1532 = vpack.c.b16 %v1526, %v1525
        %v1533 = vpack.c.b16 %v1528, %v1527
        %v1534 = vpack.c.b16 %v1530, %v1529
        %1539 = vmatprep.subr.bf16.mxu0 0
        %1540 = vmatpush1.bf16.msra.mxu0 %v1531
        %1541 = vmatprep.subr.bf16.mxu0 0
        %1542 = vmatpush1.bf16.msra.mxu0 %v1532
        %1543 = vmatprep.subr.bf16.mxu0 0
        %1544 = vmatpush1.bf16.msra.mxu0 %v1533
        %1545 = vmatprep.subr.bf16.mxu0 0
        %1546 = vmatpush1.bf16.msra.mxu0 %v1534
        %1547 = vmatprep.subr.bf16.mxu0 0
        %1548 = vmatpush1.bf16.msra.mxu0 0
        %1549 = vmatprep.subr.bf16.mxu0 0
        %1550 = vmatpush1.bf16.msra.mxu0 0
        %1551 = vmatprep.subr.bf16.mxu0 0
        %1552 = vmatpush1.bf16.msra.mxu0 0
        %1553 = vmatprep.subr.bf16.mxu0 0
        %1554 = vmatpush1.bf16.msra.mxu0 0
        %1555 = vmatprep.subr.bf16.mxu0 0
        %1556 = vmatpush1.bf16.msra.mxu0 0
        %1557 = vmatprep.subr.bf16.mxu0 0
        %1558 = vmatpush1.bf16.msra.mxu0 0
        %1559 = vmatprep.subr.bf16.mxu0 0
        %1560 = vmatpush1.bf16.msra.mxu0 0
        %1561 = vmatprep.subr.bf16.mxu0 0
        %1562 = vmatpush1.bf16.msra.mxu0 0
        %1563 = vmatprep.subr.bf16.mxu0 0
        %1564 = vmatpush1.bf16.msra.mxu0 0
        %1565 = vmatprep.subr.bf16.mxu0 0
        %1566 = vmatpush1.bf16.msra.mxu0 0
        %1567 = vmatprep.subr.bf16.mxu0 0
        %1568 = vmatpush1.bf16.msra.mxu0 0
        %1569 = vmatprep.subr.bf16.mxu0 0
        %1570 = vmatpush1.bf16.msra.mxu0 0
        %1571 = vmatprep.mubr.bf16.mxu0 0
        %1572 = vmatmul.mubr.bf16.gmra.mrb[0].mxu0 %v1114
        %v1573 = vpop.f32.mrb[0].mxu0
        %v1574 = vadd.f32 0.0, %v1573
        %v1575 = vpop.f32.mrb[0].mxu0
        %v1576 = vpop.f32.mrb[0].mxu0
        %v1577 = vadd.f32 0.0, %v1576
        %v1578 = vpop.f32.mrb[0].mxu0
        %1579 = vmatprep.mubr.bf16.mxu0 0
        %1580 = vmatmul.mubr.bf16.gmra.mrb[0].mxu0 %v1117
        %v1581 = vpop.f32.mrb[0].mxu0
        %v1582 = vadd.f32 0.0, %v1581
        %v1583 = vpop.f32.mrb[0].mxu0
        %v1584 = vpop.f32.mrb[0].mxu0
        %v1585 = vadd.f32 0.0, %v1584
        %v1586 = vpop.f32.mrb[0].mxu0
        %1587 = vdwg.mxu0
        %v1588 = vpack.c.bf16 %v1577, %v1574
        %v1589 = vpack.c.bf16 %v1585, %v1582
        %s1590 = scalar_lea.vmem %s2, 192
        %v1591 = vld [vmem:[%s1590] sm:$0xf]
        %v1592 = vld [vmem:[%s1590 + $0x4] sm:$0xf]
        %v1593 = vld [vmem:[%s1590 + $0x8] sm:$0xf]
        %v1594 = vld [vmem:[%s1590 + $0xc] sm:$0xf]
        %v1595 = vld [vmem:[%s1590 + $0x10] sm:$0xf]
        %v1596 = vld [vmem:[%s1590 + $0x14] sm:$0xf]
        %v1597 = vld [vmem:[%s1590 + $0x18] sm:$0xf]
        %v1598 = vld [vmem:[%s1590 + $0x1c] sm:$0xf]
        %v1607 = vunpack.c.l.b16 %v1591
        %v1608 = vunpack.c.l.b16 %v1592
        %v1609 = vunpack.c.l.b16 %v1593
        %v1610 = vunpack.c.l.b16 %v1594
        %v1611 = vunpack.c.l.b16 %v1595
        %v1612 = vunpack.c.l.b16 %v1596
        %v1613 = vunpack.c.l.b16 %v1597
        %v1614 = vunpack.c.l.b16 %v1598
        %v1615 = vpack.c.b16 %v1608, %v1607
        %v1616 = vpack.c.b16 %v1610, %v1609
        %v1617 = vpack.c.b16 %v1612, %v1611
        %v1618 = vpack.c.b16 %v1614, %v1613
        %1623 = vmatprep.subr.bf16.mxu0 0
        %1624 = vmatpush1.bf16.msra.mxu0 %v1615
        %1625 = vmatprep.subr.bf16.mxu0 0
        %1626 = vmatpush1.bf16.msra.mxu0 %v1616
        %1627 = vmatprep.subr.bf16.mxu0 0
        %1628 = vmatpush1.bf16.msra.mxu0 %v1617
        %1629 = vmatprep.subr.bf16.mxu0 0
        %1630 = vmatpush1.bf16.msra.mxu0 %v1618
        %1631 = vmatprep.subr.bf16.mxu0 0
        %1632 = vmatpush1.bf16.msra.mxu0 0
        %1633 = vmatprep.subr.bf16.mxu0 0
        %1634 = vmatpush1.bf16.msra.mxu0 0
        %1635 = vmatprep.subr.bf16.mxu0 0
        %1636 = vmatpush1.bf16.msra.mxu0 0
        %1637 = vmatprep.subr.bf16.mxu0 0
        %1638 = vmatpush1.bf16.msra.mxu0 0
        %1639 = vmatprep.subr.bf16.mxu0 0
        %1640 = vmatpush1.bf16.msra.mxu0 0
        %1641 = vmatprep.subr.bf16.mxu0 0
        %1642 = vmatpush1.bf16.msra.mxu0 0
        %1643 = vmatprep.subr.bf16.mxu0 0
        %1644 = vmatpush1.bf16.msra.mxu0 0
        %1645 = vmatprep.subr.bf16.mxu0 0
        %1646 = vmatpush1.bf16.msra.mxu0 0
        %1647 = vmatprep.subr.bf16.mxu0 0
        %1648 = vmatpush1.bf16.msra.mxu0 0
        %1649 = vmatprep.subr.bf16.mxu0 0
        %1650 = vmatpush1.bf16.msra.mxu0 0
        %1651 = vmatprep.subr.bf16.mxu0 0
        %1652 = vmatpush1.bf16.msra.mxu0 0
        %1653 = vmatprep.subr.bf16.mxu0 0
        %1654 = vmatpush1.bf16.msra.mxu0 0
        %1655 = vmatprep.mubr.bf16.mxu0 0
        %1656 = vmatmul.mubr.bf16.gmra.mrb[0].mxu0 %v1114
        %v1657 = vpop.f32.mrb[0].mxu0
        %v1658 = vadd.f32 0.0, %v1657
        %v1659 = vpop.f32.mrb[0].mxu0
        %v1660 = vpop.f32.mrb[0].mxu0
        %v1661 = vadd.f32 0.0, %v1660
        %v1662 = vpop.f32.mrb[0].mxu0
        %1663 = vmatprep.mubr.bf16.mxu0 0
        %1664 = vmatmul.mubr.bf16.gmra.mrb[0].mxu0 %v1117
        %v1665 = vpop.f32.mrb[0].mxu0
        %v1666 = vadd.f32 0.0, %v1665
        %v1667 = vpop.f32.mrb[0].mxu0
        %v1668 = vpop.f32.mrb[0].mxu0
        %v1669 = vadd.f32 0.0, %v1668
        %v1670 = vpop.f32.mrb[0].mxu0
        %1671 = vdwg.mxu0
        %v1672 = vpack.c.bf16 %v1661, %v1658
        %v1673 = vpack.c.bf16 %v1669, %v1666
        %s1674 = scalar_lea.vmem %s2, 224
        %v1675 = vld [vmem:[%s1674] sm:$0xf]
        %v1676 = vld [vmem:[%s1674 + $0x4] sm:$0xf]
        %v1677 = vld [vmem:[%s1674 + $0x8] sm:$0xf]
        %v1678 = vld [vmem:[%s1674 + $0xc] sm:$0xf]
        %v1679 = vld [vmem:[%s1674 + $0x10] sm:$0xf]
        %v1680 = vld [vmem:[%s1674 + $0x14] sm:$0xf]
        %v1681 = vld [vmem:[%s1674 + $0x18] sm:$0xf]
        %v1682 = vld [vmem:[%s1674 + $0x1c] sm:$0xf]
        %v1691 = vunpack.c.l.b16 %v1675
        %v1692 = vunpack.c.l.b16 %v1676
        %v1693 = vunpack.c.l.b16 %v1677
        %v1694 = vunpack.c.l.b16 %v1678
        %v1695 = vunpack.c.l.b16 %v1679
        %v1696 = vunpack.c.l.b16 %v1680
        %v1697 = vunpack.c.l.b16 %v1681
        %v1698 = vunpack.c.l.b16 %v1682
        %v1699 = vpack.c.b16 %v1692, %v1691
        %v1700 = vpack.c.b16 %v1694, %v1693
        %v1701 = vpack.c.b16 %v1696, %v1695
        %v1702 = vpack.c.b16 %v1698, %v1697
        %1707 = vmatprep.subr.bf16.mxu0 0
        %1708 = vmatpush1.bf16.msra.mxu0 %v1699
        %1709 = vmatprep.subr.bf16.mxu0 0
        %1710 = vmatpush1.bf16.msra.mxu0 %v1700
        %1711 = vmatprep.subr.bf16.mxu0 0
        %1712 = vmatpush1.bf16.msra.mxu0 %v1701
        %1713 = vmatprep.subr.bf16.mxu0 0
        %1714 = vmatpush1.bf16.msra.mxu0 %v1702
        %1715 = vmatprep.subr.bf16.mxu0 0
        %1716 = vmatpush1.bf16.msra.mxu0 0
        %1717 = vmatprep.subr.bf16.mxu0 0
        %1718 = vmatpush1.bf16.msra.mxu0 0
        %1719 = vmatprep.subr.bf16.mxu0 0
        %1720 = vmatpush1.bf16.msra.mxu0 0
        %1721 = vmatprep.subr.bf16.mxu0 0
        %1722 = vmatpush1.bf16.msra.mxu0 0
        %1723 = vmatprep.subr.bf16.mxu0 0
        %1724 = vmatpush1.bf16.msra.mxu0 0
        %1725 = vmatprep.subr.bf16.mxu0 0
        %1726 = vmatpush1.bf16.msra.mxu0 0
        %1727 = vmatprep.subr.bf16.mxu0 0
        %1728 = vmatpush1.bf16.msra.mxu0 0
        %1729 = vmatprep.subr.bf16.mxu0 0
        %1730 = vmatpush1.bf16.msra.mxu0 0
        %1731 = vmatprep.subr.bf16.mxu0 0
        %1732 = vmatpush1.bf16.msra.mxu0 0
        %1733 = vmatprep.subr.bf16.mxu0 0
        %1734 = vmatpush1.bf16.msra.mxu0 0
        %1735 = vmatprep.subr.bf16.mxu0 0
        %1736 = vmatpush1.bf16.msra.mxu0 0
        %1737 = vmatprep.subr.bf16.mxu0 0
        %1738 = vmatpush1.bf16.msra.mxu0 0
        %1739 = vmatprep.mubr.bf16.mxu0 0
        %1740 = vmatmul.mubr.bf16.gmra.mrb[0].mxu0 %v1114
        %v1741 = vpop.f32.mrb[0].mxu0
        %v1742 = vadd.f32 0.0, %v1741
        %v1743 = vpop.f32.mrb[0].mxu0
        %v1744 = vpop.f32.mrb[0].mxu0
        %v1745 = vadd.f32 0.0, %v1744
        %v1746 = vpop.f32.mrb[0].mxu0
        %1747 = vmatprep.mubr.bf16.mxu0 0
        %1748 = vmatmul.mubr.bf16.gmra.mrb[0].mxu0 %v1117
        %v1749 = vpop.f32.mrb[0].mxu0
        %v1750 = vadd.f32 0.0, %v1749
        %v1751 = vpop.f32.mrb[0].mxu0
        %v1752 = vpop.f32.mrb[0].mxu0
        %v1753 = vadd.f32 0.0, %v1752
        %v1754 = vpop.f32.mrb[0].mxu0
        %1755 = vdwg.mxu0
        %v1756 = vpack.c.bf16 %v1745, %v1742
        %v1757 = vpack.c.bf16 %v1753, %v1750
        %s1758 = scalar_lea.vmem %s2, 256
        %v1759 = vld [vmem:[%s1758] sm:$0xf]
        %v1760 = vld [vmem:[%s1758 + $0x4] sm:$0xf]
        %v1761 = vld [vmem:[%s1758 + $0x8] sm:$0xf]
        %v1762 = vld [vmem:[%s1758 + $0xc] sm:$0xf]
        %v1763 = vld [vmem:[%s1758 + $0x10] sm:$0xf]
        %v1764 = vld [vmem:[%s1758 + $0x14] sm:$0xf]
        %v1765 = vld [vmem:[%s1758 + $0x18] sm:$0xf]
        %v1766 = vld [vmem:[%s1758 + $0x1c] sm:$0xf]
        %v1775 = vunpack.c.l.b16 %v1759
        %v1776 = vunpack.c.l.b16 %v1760
        %v1777 = vunpack.c.l.b16 %v1761
        %v1778 = vunpack.c.l.b16 %v1762
        %v1779 = vunpack.c.l.b16 %v1763
        %v1780 = vunpack.c.l.b16 %v1764
        %v1781 = vunpack.c.l.b16 %v1765
        %v1782 = vunpack.c.l.b16 %v1766
        %v1783 = vpack.c.b16 %v1776, %v1775
        %v1784 = vpack.c.b16 %v1778, %v1777
        %v1785 = vpack.c.b16 %v1780, %v1779
        %v1786 = vpack.c.b16 %v1782, %v1781
        %1791 = vmatprep.subr.bf16.mxu0 0
        %1792 = vmatpush1.bf16.msra.mxu0 %v1783
        %1793 = vmatprep.subr.bf16.mxu0 0
        %1794 = vmatpush1.bf16.msra.mxu0 %v1784
        %1795 = vmatprep.subr.bf16.mxu0 0
        %1796 = vmatpush1.bf16.msra.mxu0 %v1785
        %1797 = vmatprep.subr.bf16.mxu0 0
        %1798 = vmatpush1.bf16.msra.mxu0 %v1786
        %1799 = vmatprep.subr.bf16.mxu0 0
        %1800 = vmatpush1.bf16.msra.mxu0 0
        %1801 = vmatprep.subr.bf16.mxu0 0
        %1802 = vmatpush1.bf16.msra.mxu0 0
        %1803 = vmatprep.subr.bf16.mxu0 0
        %1804 = vmatpush1.bf16.msra.mxu0 0
        %1805 = vmatprep.subr.bf16.mxu0 0
        %1806 = vmatpush1.bf16.msra.mxu0 0
        %1807 = vmatprep.subr.bf16.mxu0 0
        %1808 = vmatpush1.bf16.msra.mxu0 0
        %1809 = vmatprep.subr.bf16.mxu0 0
        %1810 = vmatpush1.bf16.msra.mxu0 0
        %1811 = vmatprep.subr.bf16.mxu0 0
        %1812 = vmatpush1.bf16.msra.mxu0 0
        %1813 = vmatprep.subr.bf16.mxu0 0
        %1814 = vmatpush1.bf16.msra.mxu0 0
        %1815 = vmatprep.subr.bf16.mxu0 0
        %1816 = vmatpush1.bf16.msra.mxu0 0
        %1817 = vmatprep.subr.bf16.mxu0 0
        %1818 = vmatpush1.bf16.msra.mxu0 0
        %1819 = vmatprep.subr.bf16.mxu0 0
        %1820 = vmatpush1.bf16.msra.mxu0 0
        %1821 = vmatprep.subr.bf16.mxu0 0
        %1822 = vmatpush1.bf16.msra.mxu0 0
        %1823 = vmatprep.mubr.bf16.mxu0 0
        %1824 = vmatmul.mubr.bf16.gmra.mrb[0].mxu0 %v1114
        %v1825 = vpop.f32.mrb[0].mxu0
        %v1826 = vadd.f32 0.0, %v1825
        %v1827 = vpop.f32.mrb[0].mxu0
        %v1828 = vpop.f32.mrb[0].mxu0
        %v1829 = vadd.f32 0.0, %v1828
        %v1830 = vpop.f32.mrb[0].mxu0
        %1831 = vmatprep.mubr.bf16.mxu0 0
        %1832 = vmatmul.mubr.bf16.gmra.mrb[0].mxu0 %v1117
        %v1833 = vpop.f32.mrb[0].mxu0
        %v1834 = vadd.f32 0.0, %v1833
        %v1835 = vpop.f32.mrb[0].mxu0
        %v1836 = vpop.f32.mrb[0].mxu0
        %v1837 = vadd.f32 0.0, %v1836
        %v1838 = vpop.f32.mrb[0].mxu0
        %1839 = vdwg.mxu0
        %v1840 = vpack.c.bf16 %v1829, %v1826
        %v1841 = vpack.c.bf16 %v1837, %v1834
        %s1842 = scalar_lea.vmem %s2, 288
        %v1843 = vld [vmem:[%s1842] sm:$0xf]
        %v1844 = vld [vmem:[%s1842 + $0x4] sm:$0xf]
        %v1845 = vld [vmem:[%s1842 + $0x8] sm:$0xf]
        %v1846 = vld [vmem:[%s1842 + $0xc] sm:$0xf]
        %v1847 = vld [vmem:[%s1842 + $0x10] sm:$0xf]
        %v1848 = vld [vmem:[%s1842 + $0x14] sm:$0xf]
        %v1849 = vld [vmem:[%s1842 + $0x18] sm:$0xf]
        %v1850 = vld [vmem:[%s1842 + $0x1c] sm:$0xf]
        %v1859 = vunpack.c.l.b16 %v1843
        %v1860 = vunpack.c.l.b16 %v1844
        %v1861 = vunpack.c.l.b16 %v1845
        %v1862 = vunpack.c.l.b16 %v1846
        %v1863 = vunpack.c.l.b16 %v1847
        %v1864 = vunpack.c.l.b16 %v1848
        %v1865 = vunpack.c.l.b16 %v1849
        %v1866 = vunpack.c.l.b16 %v1850
        %v1867 = vpack.c.b16 %v1860, %v1859
        %v1868 = vpack.c.b16 %v1862, %v1861
        %v1869 = vpack.c.b16 %v1864, %v1863
        %v1870 = vpack.c.b16 %v1866, %v1865
        %1875 = vmatprep.subr.bf16.mxu0 0
        %1876 = vmatpush1.bf16.msra.mxu0 %v1867
        %1877 = vmatprep.subr.bf16.mxu0 0
        %1878 = vmatpush1.bf16.msra.mxu0 %v1868
        %1879 = vmatprep.subr.bf16.mxu0 0
        %1880 = vmatpush1.bf16.msra.mxu0 %v1869
        %1881 = vmatprep.subr.bf16.mxu0 0
        %1882 = vmatpush1.bf16.msra.mxu0 %v1870
        %1883 = vmatprep.subr.bf16.mxu0 0
        %1884 = vmatpush1.bf16.msra.mxu0 0
        %1885 = vmatprep.subr.bf16.mxu0 0
        %1886 = vmatpush1.bf16.msra.mxu0 0
        %1887 = vmatprep.subr.bf16.mxu0 0
        %1888 = vmatpush1.bf16.msra.mxu0 0
        %1889 = vmatprep.subr.bf16.mxu0 0
        %1890 = vmatpush1.bf16.msra.mxu0 0
        %1891 = vmatprep.subr.bf16.mxu0 0
        %1892 = vmatpush1.bf16.msra.mxu0 0
        %1893 = vmatprep.subr.bf16.mxu0 0
        %1894 = vmatpush1.bf16.msra.mxu0 0
        %1895 = vmatprep.subr.bf16.mxu0 0
        %1896 = vmatpush1.bf16.msra.mxu0 0
        %1897 = vmatprep.subr.bf16.mxu0 0
        %1898 = vmatpush1.bf16.msra.mxu0 0
        %1899 = vmatprep.subr.bf16.mxu0 0
        %1900 = vmatpush1.bf16.msra.mxu0 0
        %1901 = vmatprep.subr.bf16.mxu0 0
        %1902 = vmatpush1.bf16.msra.mxu0 0
        %1903 = vmatprep.subr.bf16.mxu0 0
        %1904 = vmatpush1.bf16.msra.mxu0 0
        %1905 = vmatprep.subr.bf16.mxu0 0
        %1906 = vmatpush1.bf16.msra.mxu0 0
        %1907 = vmatprep.mubr.bf16.mxu0 0
        %1908 = vmatmul.mubr.bf16.gmra.mrb[0].mxu0 %v1114
        %v1909 = vpop.f32.mrb[0].mxu0
        %v1910 = vadd.f32 0.0, %v1909
        %v1911 = vpop.f32.mrb[0].mxu0
        %v1912 = vpop.f32.mrb[0].mxu0
        %v1913 = vadd.f32 0.0, %v1912
        %v1914 = vpop.f32.mrb[0].mxu0
        %1915 = vmatprep.mubr.bf16.mxu0 0
        %1916 = vmatmul.mubr.bf16.gmra.mrb[0].mxu0 %v1117
        %v1917 = vpop.f32.mrb[0].mxu0
        %v1918 = vadd.f32 0.0, %v1917
        %v1919 = vpop.f32.mrb[0].mxu0
        %v1920 = vpop.f32.mrb[0].mxu0
        %v1921 = vadd.f32 0.0, %v1920
        %v1922 = vpop.f32.mrb[0].mxu0
        %1923 = vdwg.mxu0
        %v1924 = vpack.c.bf16 %v1913, %v1910
        %v1925 = vpack.c.bf16 %v1921, %v1918
        %s1926 = scalar_lea.vmem %s2, 320
        %v1927 = vld [vmem:[%s1926] sm:$0xf]
        %v1928 = vld [vmem:[%s1926 + $0x4] sm:$0xf]
        %v1929 = vld [vmem:[%s1926 + $0x8] sm:$0xf]
        %v1930 = vld [vmem:[%s1926 + $0xc] sm:$0xf]
        %v1931 = vld [vmem:[%s1926 + $0x10] sm:$0xf]
        %v1932 = vld [vmem:[%s1926 + $0x14] sm:$0xf]
        %v1933 = vld [vmem:[%s1926 + $0x18] sm:$0xf]
        %v1934 = vld [vmem:[%s1926 + $0x1c] sm:$0xf]
        %v1943 = vunpack.c.l.b16 %v1927
        %v1944 = vunpack.c.l.b16 %v1928
        %v1945 = vunpack.c.l.b16 %v1929
        %v1946 = vunpack.c.l.b16 %v1930
        %v1947 = vunpack.c.l.b16 %v1931
        %v1948 = vunpack.c.l.b16 %v1932
        %v1949 = vunpack.c.l.b16 %v1933
        %v1950 = vunpack.c.l.b16 %v1934
        %v1951 = vpack.c.b16 %v1944, %v1943
        %v1952 = vpack.c.b16 %v1946, %v1945
        %v1953 = vpack.c.b16 %v1948, %v1947
        %v1954 = vpack.c.b16 %v1950, %v1949
        %1959 = vmatprep.subr.bf16.mxu0 0
        %1960 = vmatpush1.bf16.msra.mxu0 %v1951
        %1961 = vmatprep.subr.bf16.mxu0 0
        %1962 = vmatpush1.bf16.msra.mxu0 %v1952
        %1963 = vmatprep.subr.bf16.mxu0 0
        %1964 = vmatpush1.bf16.msra.mxu0 %v1953
        %1965 = vmatprep.subr.bf16.mxu0 0
        %1966 = vmatpush1.bf16.msra.mxu0 %v1954
        %1967 = vmatprep.subr.bf16.mxu0 0
        %1968 = vmatpush1.bf16.msra.mxu0 0
        %1969 = vmatprep.subr.bf16.mxu0 0
        %1970 = vmatpush1.bf16.msra.mxu0 0
        %1971 = vmatprep.subr.bf16.mxu0 0
        %1972 = vmatpush1.bf16.msra.mxu0 0
        %1973 = vmatprep.subr.bf16.mxu0 0
        %1974 = vmatpush1.bf16.msra.mxu0 0
        %1975 = vmatprep.subr.bf16.mxu0 0
        %1976 = vmatpush1.bf16.msra.mxu0 0
        %1977 = vmatprep.subr.bf16.mxu0 0
        %1978 = vmatpush1.bf16.msra.mxu0 0
        %1979 = vmatprep.subr.bf16.mxu0 0
        %1980 = vmatpush1.bf16.msra.mxu0 0
        %1981 = vmatprep.subr.bf16.mxu0 0
        %1982 = vmatpush1.bf16.msra.mxu0 0
        %1983 = vmatprep.subr.bf16.mxu0 0
        %1984 = vmatpush1.bf16.msra.mxu0 0
        %1985 = vmatprep.subr.bf16.mxu0 0
        %1986 = vmatpush1.bf16.msra.mxu0 0
        %1987 = vmatprep.subr.bf16.mxu0 0
        %1988 = vmatpush1.bf16.msra.mxu0 0
        %1989 = vmatprep.subr.bf16.mxu0 0
        %1990 = vmatpush1.bf16.msra.mxu0 0
        %1991 = vmatprep.mubr.bf16.mxu0 0
        %1992 = vmatmul.mubr.bf16.gmra.mrb[0].mxu0 %v1114
        %v1993 = vpop.f32.mrb[0].mxu0
        %v1994 = vadd.f32 0.0, %v1993
        %v1995 = vpop.f32.mrb[0].mxu0
        %v1996 = vpop.f32.mrb[0].mxu0
        %v1997 = vadd.f32 0.0, %v1996
        %v1998 = vpop.f32.mrb[0].mxu0
        %1999 = vmatprep.mubr.bf16.mxu0 0
        %2000 = vmatmul.mubr.bf16.gmra.mrb[0].mxu0 %v1117
        %v2001 = vpop.f32.mrb[0].mxu0
        %v2002 = vadd.f32 0.0, %v2001
        %v2003 = vpop.f32.mrb[0].mxu0
        %v2004 = vpop.f32.mrb[0].mxu0
        %v2005 = vadd.f32 0.0, %v2004
        %v2006 = vpop.f32.mrb[0].mxu0
        %2007 = vdwg.mxu0
        %v2008 = vpack.c.bf16 %v1997, %v1994
        %v2009 = vpack.c.bf16 %v2005, %v2002
        %s2010 = scalar_lea.vmem %s2, 352
        %v2011 = vld [vmem:[%s2010] sm:$0xf]
        %v2012 = vld [vmem:[%s2010 + $0x4] sm:$0xf]
        %v2013 = vld [vmem:[%s2010 + $0x8] sm:$0xf]
        %v2014 = vld [vmem:[%s2010 + $0xc] sm:$0xf]
        %v2015 = vld [vmem:[%s2010 + $0x10] sm:$0xf]
        %v2016 = vld [vmem:[%s2010 + $0x14] sm:$0xf]
        %v2017 = vld [vmem:[%s2010 + $0x18] sm:$0xf]
        %v2018 = vld [vmem:[%s2010 + $0x1c] sm:$0xf]
        %v2027 = vunpack.c.l.b16 %v2011
        %v2028 = vunpack.c.l.b16 %v2012
        %v2029 = vunpack.c.l.b16 %v2013
        %v2030 = vunpack.c.l.b16 %v2014
        %v2031 = vunpack.c.l.b16 %v2015
        %v2032 = vunpack.c.l.b16 %v2016
        %v2033 = vunpack.c.l.b16 %v2017
        %v2034 = vunpack.c.l.b16 %v2018
        %v2035 = vpack.c.b16 %v2028, %v2027
        %v2036 = vpack.c.b16 %v2030, %v2029
        %v2037 = vpack.c.b16 %v2032, %v2031
        %v2038 = vpack.c.b16 %v2034, %v2033
        %2043 = vmatprep.subr.bf16.mxu0 0
        %2044 = vmatpush1.bf16.msra.mxu0 %v2035
        %2045 = vmatprep.subr.bf16.mxu0 0
        %2046 = vmatpush1.bf16.msra.mxu0 %v2036
        %2047 = vmatprep.subr.bf16.mxu0 0
        %2048 = vmatpush1.bf16.msra.mxu0 %v2037
        %2049 = vmatprep.subr.bf16.mxu0 0
        %2050 = vmatpush1.bf16.msra.mxu0 %v2038
        %2051 = vmatprep.subr.bf16.mxu0 0
        %2052 = vmatpush1.bf16.msra.mxu0 0
        %2053 = vmatprep.subr.bf16.mxu0 0
        %2054 = vmatpush1.bf16.msra.mxu0 0
        %2055 = vmatprep.subr.bf16.mxu0 0
        %2056 = vmatpush1.bf16.msra.mxu0 0
        %2057 = vmatprep.subr.bf16.mxu0 0
        %2058 = vmatpush1.bf16.msra.mxu0 0
        %2059 = vmatprep.subr.bf16.mxu0 0
        %2060 = vmatpush1.bf16.msra.mxu0 0
        %2061 = vmatprep.subr.bf16.mxu0 0
        %2062 = vmatpush1.bf16.msra.mxu0 0
        %2063 = vmatprep.subr.bf16.mxu0 0
        %2064 = vmatpush1.bf16.msra.mxu0 0
        %2065 = vmatprep.subr.bf16.mxu0 0
        %2066 = vmatpush1.bf16.msra.mxu0 0
        %2067 = vmatprep.subr.bf16.mxu0 0
        %2068 = vmatpush1.bf16.msra.mxu0 0
        %2069 = vmatprep.subr.bf16.mxu0 0
        %2070 = vmatpush1.bf16.msra.mxu0 0
        %2071 = vmatprep.subr.bf16.mxu0 0
        %2072 = vmatpush1.bf16.msra.mxu0 0
        %2073 = vmatprep.subr.bf16.mxu0 0
        %2074 = vmatpush1.bf16.msra.mxu0 0
        %2075 = vmatprep.mubr.bf16.mxu0 0
        %2076 = vmatmul.mubr.bf16.gmra.mrb[0].mxu0 %v1114
        %v2077 = vpop.f32.mrb[0].mxu0
        %v2078 = vadd.f32 0.0, %v2077
        %v2079 = vpop.f32.mrb[0].mxu0
        %v2080 = vpop.f32.mrb[0].mxu0
        %v2081 = vadd.f32 0.0, %v2080
        %v2082 = vpop.f32.mrb[0].mxu0
        %2083 = vmatprep.mubr.bf16.mxu0 0
        %2084 = vmatmul.mubr.bf16.gmra.mrb[0].mxu0 %v1117
        %v2085 = vpop.f32.mrb[0].mxu0
        %v2086 = vadd.f32 0.0, %v2085
        %v2087 = vpop.f32.mrb[0].mxu0
        %v2088 = vpop.f32.mrb[0].mxu0
        %v2089 = vadd.f32 0.0, %v2088
        %v2090 = vpop.f32.mrb[0].mxu0
        %2091 = vdwg.mxu0
        %v2092 = vpack.c.bf16 %v2081, %v2078
        %v2093 = vpack.c.bf16 %v2089, %v2086
        %s2094 = scalar_lea.vmem %s2, 384
        %v2095 = vld [vmem:[%s2094] sm:$0xf]
        %v2096 = vld [vmem:[%s2094 + $0x4] sm:$0xf]
        %v2097 = vld [vmem:[%s2094 + $0x8] sm:$0xf]
        %v2098 = vld [vmem:[%s2094 + $0xc] sm:$0xf]
        %v2099 = vld [vmem:[%s2094 + $0x10] sm:$0xf]
        %v2100 = vld [vmem:[%s2094 + $0x14] sm:$0xf]
        %v2101 = vld [vmem:[%s2094 + $0x18] sm:$0xf]
        %v2102 = vld [vmem:[%s2094 + $0x1c] sm:$0xf]
        %v2111 = vunpack.c.l.b16 %v2095
        %v2112 = vunpack.c.l.b16 %v2096
        %v2113 = vunpack.c.l.b16 %v2097
        %v2114 = vunpack.c.l.b16 %v2098
        %v2115 = vunpack.c.l.b16 %v2099
        %v2116 = vunpack.c.l.b16 %v2100
        %v2117 = vunpack.c.l.b16 %v2101
        %v2118 = vunpack.c.l.b16 %v2102
        %v2119 = vpack.c.b16 %v2112, %v2111
        %v2120 = vpack.c.b16 %v2114, %v2113
        %v2121 = vpack.c.b16 %v2116, %v2115
        %v2122 = vpack.c.b16 %v2118, %v2117
        %2127 = vmatprep.subr.bf16.mxu0 0
        %2128 = vmatpush1.bf16.msra.mxu0 %v2119
        %2129 = vmatprep.subr.bf16.mxu0 0
        %2130 = vmatpush1.bf16.msra.mxu0 %v2120
        %2131 = vmatprep.subr.bf16.mxu0 0
        %2132 = vmatpush1.bf16.msra.mxu0 %v2121
        %2133 = vmatprep.subr.bf16.mxu0 0
        %2134 = vmatpush1.bf16.msra.mxu0 %v2122
        %2135 = vmatprep.subr.bf16.mxu0 0
        %2136 = vmatpush1.bf16.msra.mxu0 0
        %2137 = vmatprep.subr.bf16.mxu0 0
        %2138 = vmatpush1.bf16.msra.mxu0 0
        %2139 = vmatprep.subr.bf16.mxu0 0
        %2140 = vmatpush1.bf16.msra.mxu0 0
        %2141 = vmatprep.subr.bf16.mxu0 0
        %2142 = vmatpush1.bf16.msra.mxu0 0
        %2143 = vmatprep.subr.bf16.mxu0 0
        %2144 = vmatpush1.bf16.msra.mxu0 0
        %2145 = vmatprep.subr.bf16.mxu0 0
        %2146 = vmatpush1.bf16.msra.mxu0 0
        %2147 = vmatprep.subr.bf16.mxu0 0
        %2148 = vmatpush1.bf16.msra.mxu0 0
        %2149 = vmatprep.subr.bf16.mxu0 0
        %2150 = vmatpush1.bf16.msra.mxu0 0
        %2151 = vmatprep.subr.bf16.mxu0 0
        %2152 = vmatpush1.bf16.msra.mxu0 0
        %2153 = vmatprep.subr.bf16.mxu0 0
        %2154 = vmatpush1.bf16.msra.mxu0 0
        %2155 = vmatprep.subr.bf16.mxu0 0
        %2156 = vmatpush1.bf16.msra.mxu0 0
        %2157 = vmatprep.subr.bf16.mxu0 0
        %2158 = vmatpush1.bf16.msra.mxu0 0
        %2159 = vmatprep.mubr.bf16.mxu0 0
        %2160 = vmatmul.mubr.bf16.gmra.mrb[0].mxu0 %v1114
        %v2161 = vpop.f32.mrb[0].mxu0
        %v2162 = vadd.f32 0.0, %v2161
        %v2163 = vpop.f32.mrb[0].mxu0
        %v2164 = vpop.f32.mrb[0].mxu0
        %v2165 = vadd.f32 0.0, %v2164
        %v2166 = vpop.f32.mrb[0].mxu0
        %2167 = vmatprep.mubr.bf16.mxu0 0
        %2168 = vmatmul.mubr.bf16.gmra.mrb[0].mxu0 %v1117
        %v2169 = vpop.f32.mrb[0].mxu0
        %v2170 = vadd.f32 0.0, %v2169
        %v2171 = vpop.f32.mrb[0].mxu0
        %v2172 = vpop.f32.mrb[0].mxu0
        %v2173 = vadd.f32 0.0, %v2172
        %v2174 = vpop.f32.mrb[0].mxu0
        %2175 = vdwg.mxu0
        %v2176 = vpack.c.bf16 %v2165, %v2162
        %v2177 = vpack.c.bf16 %v2173, %v2170
        %s2178 = scalar_lea.vmem %s2, 416
        %v2179 = vld [vmem:[%s2178] sm:$0xf]
        %v2180 = vld [vmem:[%s2178 + $0x4] sm:$0xf]
        %v2181 = vld [vmem:[%s2178 + $0x8] sm:$0xf]
        %v2182 = vld [vmem:[%s2178 + $0xc] sm:$0xf]
        %v2183 = vld [vmem:[%s2178 + $0x10] sm:$0xf]
        %v2184 = vld [vmem:[%s2178 + $0x14] sm:$0xf]
        %v2185 = vld [vmem:[%s2178 + $0x18] sm:$0xf]
        %v2186 = vld [vmem:[%s2178 + $0x1c] sm:$0xf]
        %v2195 = vunpack.c.l.b16 %v2179
        %v2196 = vunpack.c.l.b16 %v2180
        %v2197 = vunpack.c.l.b16 %v2181
        %v2198 = vunpack.c.l.b16 %v2182
        %v2199 = vunpack.c.l.b16 %v2183
        %v2200 = vunpack.c.l.b16 %v2184
        %v2201 = vunpack.c.l.b16 %v2185
        %v2202 = vunpack.c.l.b16 %v2186
        %v2203 = vpack.c.b16 %v2196, %v2195
        %v2204 = vpack.c.b16 %v2198, %v2197
        %v2205 = vpack.c.b16 %v2200, %v2199
        %v2206 = vpack.c.b16 %v2202, %v2201
        %2211 = vmatprep.subr.bf16.mxu0 0
        %2212 = vmatpush1.bf16.msra.mxu0 %v2203
        %2213 = vmatprep.subr.bf16.mxu0 0
        %2214 = vmatpush1.bf16.msra.mxu0 %v2204
        %2215 = vmatprep.subr.bf16.mxu0 0
        %2216 = vmatpush1.bf16.msra.mxu0 %v2205
        %2217 = vmatprep.subr.bf16.mxu0 0
        %2218 = vmatpush1.bf16.msra.mxu0 %v2206
        %2219 = vmatprep.subr.bf16.mxu0 0
        %2220 = vmatpush1.bf16.msra.mxu0 0
        %2221 = vmatprep.subr.bf16.mxu0 0
        %2222 = vmatpush1.bf16.msra.mxu0 0
        %2223 = vmatprep.subr.bf16.mxu0 0
        %2224 = vmatpush1.bf16.msra.mxu0 0
        %2225 = vmatprep.subr.bf16.mxu0 0
        %2226 = vmatpush1.bf16.msra.mxu0 0
        %2227 = vmatprep.subr.bf16.mxu0 0
        %2228 = vmatpush1.bf16.msra.mxu0 0
        %2229 = vmatprep.subr.bf16.mxu0 0
        %2230 = vmatpush1.bf16.msra.mxu0 0
        %2231 = vmatprep.subr.bf16.mxu0 0
        %2232 = vmatpush1.bf16.msra.mxu0 0
        %2233 = vmatprep.subr.bf16.mxu0 0
        %2234 = vmatpush1.bf16.msra.mxu0 0
        %2235 = vmatprep.subr.bf16.mxu0 0
        %2236 = vmatpush1.bf16.msra.mxu0 0
        %2237 = vmatprep.subr.bf16.mxu0 0
        %2238 = vmatpush1.bf16.msra.mxu0 0
        %2239 = vmatprep.subr.bf16.mxu0 0
        %2240 = vmatpush1.bf16.msra.mxu0 0
        %2241 = vmatprep.subr.bf16.mxu0 0
        %2242 = vmatpush1.bf16.msra.mxu0 0
        %2243 = vmatprep.mubr.bf16.mxu0 0
        %2244 = vmatmul.mubr.bf16.gmra.mrb[0].mxu0 %v1114
        %v2245 = vpop.f32.mrb[0].mxu0
        %v2246 = vadd.f32 0.0, %v2245
        %v2247 = vpop.f32.mrb[0].mxu0
        %v2248 = vpop.f32.mrb[0].mxu0
        %v2249 = vadd.f32 0.0, %v2248
        %v2250 = vpop.f32.mrb[0].mxu0
        %2251 = vmatprep.mubr.bf16.mxu0 0
        %2252 = vmatmul.mubr.bf16.gmra.mrb[0].mxu0 %v1117
        %v2253 = vpop.f32.mrb[0].mxu0
        %v2254 = vadd.f32 0.0, %v2253
        %v2255 = vpop.f32.mrb[0].mxu0
        %v2256 = vpop.f32.mrb[0].mxu0
        %v2257 = vadd.f32 0.0, %v2256
        %v2258 = vpop.f32.mrb[0].mxu0
        %2259 = vdwg.mxu0
        %v2260 = vpack.c.bf16 %v2249, %v2246
        %v2261 = vpack.c.bf16 %v2257, %v2254
        %s2262 = scalar_lea.vmem %s2, 448
        %v2263 = vld [vmem:[%s2262] sm:$0xf]
        %v2264 = vld [vmem:[%s2262 + $0x4] sm:$0xf]
        %v2265 = vld [vmem:[%s2262 + $0x8] sm:$0xf]
        %v2266 = vld [vmem:[%s2262 + $0xc] sm:$0xf]
        %v2267 = vld [vmem:[%s2262 + $0x10] sm:$0xf]
        %v2268 = vld [vmem:[%s2262 + $0x14] sm:$0xf]
        %v2269 = vld [vmem:[%s2262 + $0x18] sm:$0xf]
        %v2270 = vld [vmem:[%s2262 + $0x1c] sm:$0xf]
        %v2279 = vunpack.c.l.b16 %v2263
        %v2280 = vunpack.c.l.b16 %v2264
        %v2281 = vunpack.c.l.b16 %v2265
        %v2282 = vunpack.c.l.b16 %v2266
        %v2283 = vunpack.c.l.b16 %v2267
        %v2284 = vunpack.c.l.b16 %v2268
        %v2285 = vunpack.c.l.b16 %v2269
        %v2286 = vunpack.c.l.b16 %v2270
        %v2287 = vpack.c.b16 %v2280, %v2279
        %v2288 = vpack.c.b16 %v2282, %v2281
        %v2289 = vpack.c.b16 %v2284, %v2283
        %v2290 = vpack.c.b16 %v2286, %v2285
        %2295 = vmatprep.subr.bf16.mxu0 0
        %2296 = vmatpush1.bf16.msra.mxu0 %v2287
        %2297 = vmatprep.subr.bf16.mxu0 0
        %2298 = vmatpush1.bf16.msra.mxu0 %v2288
        %2299 = vmatprep.subr.bf16.mxu0 0
        %2300 = vmatpush1.bf16.msra.mxu0 %v2289
        %2301 = vmatprep.subr.bf16.mxu0 0
        %2302 = vmatpush1.bf16.msra.mxu0 %v2290
        %2303 = vmatprep.subr.bf16.mxu0 0
        %2304 = vmatpush1.bf16.msra.mxu0 0
        %2305 = vmatprep.subr.bf16.mxu0 0
        %2306 = vmatpush1.bf16.msra.mxu0 0
        %2307 = vmatprep.subr.bf16.mxu0 0
        %2308 = vmatpush1.bf16.msra.mxu0 0
        %2309 = vmatprep.subr.bf16.mxu0 0
        %2310 = vmatpush1.bf16.msra.mxu0 0
        %2311 = vmatprep.subr.bf16.mxu0 0
        %2312 = vmatpush1.bf16.msra.mxu0 0
        %2313 = vmatprep.subr.bf16.mxu0 0
        %2314 = vmatpush1.bf16.msra.mxu0 0
        %2315 = vmatprep.subr.bf16.mxu0 0
        %2316 = vmatpush1.bf16.msra.mxu0 0
        %2317 = vmatprep.subr.bf16.mxu0 0
        %2318 = vmatpush1.bf16.msra.mxu0 0
        %2319 = vmatprep.subr.bf16.mxu0 0
        %2320 = vmatpush1.bf16.msra.mxu0 0
        %2321 = vmatprep.subr.bf16.mxu0 0
        %2322 = vmatpush1.bf16.msra.mxu0 0
        %2323 = vmatprep.subr.bf16.mxu0 0
        %2324 = vmatpush1.bf16.msra.mxu0 0
        %2325 = vmatprep.subr.bf16.mxu0 0
        %2326 = vmatpush1.bf16.msra.mxu0 0
        %2327 = vmatprep.mubr.bf16.mxu0 0
        %2328 = vmatmul.mubr.bf16.gmra.mrb[0].mxu0 %v1114
        %v2329 = vpop.f32.mrb[0].mxu0
        %v2330 = vadd.f32 0.0, %v2329
        %v2331 = vpop.f32.mrb[0].mxu0
        %v2332 = vpop.f32.mrb[0].mxu0
        %v2333 = vadd.f32 0.0, %v2332
        %v2334 = vpop.f32.mrb[0].mxu0
        %2335 = vmatprep.mubr.bf16.mxu0 0
        %2336 = vmatmul.mubr.bf16.gmra.mrb[0].mxu0 %v1117
        %v2337 = vpop.f32.mrb[0].mxu0
        %v2338 = vadd.f32 0.0, %v2337
        %v2339 = vpop.f32.mrb[0].mxu0
        %v2340 = vpop.f32.mrb[0].mxu0
        %v2341 = vadd.f32 0.0, %v2340
        %v2342 = vpop.f32.mrb[0].mxu0
        %2343 = vdwg.mxu0
        %v2344 = vpack.c.bf16 %v2333, %v2330
        %v2345 = vpack.c.bf16 %v2341, %v2338
        %s2346 = scalar_lea.vmem %s2, 480
        %v2347 = vld [vmem:[%s2346] sm:$0xf]
        %v2348 = vld [vmem:[%s2346 + $0x4] sm:$0xf]
        %v2349 = vld [vmem:[%s2346 + $0x8] sm:$0xf]
        %v2350 = vld [vmem:[%s2346 + $0xc] sm:$0xf]
        %v2351 = vld [vmem:[%s2346 + $0x10] sm:$0xf]
        %v2352 = vld [vmem:[%s2346 + $0x14] sm:$0xf]
        %v2353 = vld [vmem:[%s2346 + $0x18] sm:$0xf]
        %v2354 = vld [vmem:[%s2346 + $0x1c] sm:$0xf]
        %v2363 = vunpack.c.l.b16 %v2347
        %v2364 = vunpack.c.l.b16 %v2348
        %v2365 = vunpack.c.l.b16 %v2349
        %v2366 = vunpack.c.l.b16 %v2350
        %v2367 = vunpack.c.l.b16 %v2351
        %v2368 = vunpack.c.l.b16 %v2352
        %v2369 = vunpack.c.l.b16 %v2353
        %v2370 = vunpack.c.l.b16 %v2354
        %v2371 = vpack.c.b16 %v2364, %v2363
        %v2372 = vpack.c.b16 %v2366, %v2365
        %v2373 = vpack.c.b16 %v2368, %v2367
        %v2374 = vpack.c.b16 %v2370, %v2369
        %2379 = vmatprep.subr.bf16.mxu0 0
        %2380 = vmatpush1.bf16.msra.mxu0 %v2371
        %2381 = vmatprep.subr.bf16.mxu0 0
        %2382 = vmatpush1.bf16.msra.mxu0 %v2372
        %2383 = vmatprep.subr.bf16.mxu0 0
        %2384 = vmatpush1.bf16.msra.mxu0 %v2373
        %2385 = vmatprep.subr.bf16.mxu0 0
        %2386 = vmatpush1.bf16.msra.mxu0 %v2374
        %2387 = vmatprep.subr.bf16.mxu0 0
        %2388 = vmatpush1.bf16.msra.mxu0 0
        %2389 = vmatprep.subr.bf16.mxu0 0
        %2390 = vmatpush1.bf16.msra.mxu0 0
        %2391 = vmatprep.subr.bf16.mxu0 0
        %2392 = vmatpush1.bf16.msra.mxu0 0
        %2393 = vmatprep.subr.bf16.mxu0 0
        %2394 = vmatpush1.bf16.msra.mxu0 0
        %2395 = vmatprep.subr.bf16.mxu0 0
        %2396 = vmatpush1.bf16.msra.mxu0 0
        %2397 = vmatprep.subr.bf16.mxu0 0
        %2398 = vmatpush1.bf16.msra.mxu0 0
        %2399 = vmatprep.subr.bf16.mxu0 0
        %2400 = vmatpush1.bf16.msra.mxu0 0
        %2401 = vmatprep.subr.bf16.mxu0 0
        %2402 = vmatpush1.bf16.msra.mxu0 0
        %2403 = vmatprep.subr.bf16.mxu0 0
        %2404 = vmatpush1.bf16.msra.mxu0 0
        %2405 = vmatprep.subr.bf16.mxu0 0
        %2406 = vmatpush1.bf16.msra.mxu0 0
        %2407 = vmatprep.subr.bf16.mxu0 0
        %2408 = vmatpush1.bf16.msra.mxu0 0
        %2409 = vmatprep.subr.bf16.mxu0 0
        %2410 = vmatpush1.bf16.msra.mxu0 0
        %2411 = vmatprep.mubr.bf16.mxu0 0
        %2412 = vmatmul.mubr.bf16.gmra.mrb[0].mxu0 %v1114
        %v2413 = vpop.f32.mrb[0].mxu0
        %v2414 = vadd.f32 0.0, %v2413
        %v2415 = vpop.f32.mrb[0].mxu0
        %v2416 = vpop.f32.mrb[0].mxu0
        %v2417 = vadd.f32 0.0, %v2416
        %v2418 = vpop.f32.mrb[0].mxu0
        %2419 = vmatprep.mubr.bf16.mxu0 0
        %2420 = vmatmul.mubr.bf16.gmra.mrb[0].mxu0 %v1117
        %v2421 = vpop.f32.mrb[0].mxu0
        %v2422 = vadd.f32 0.0, %v2421
        %v2423 = vpop.f32.mrb[0].mxu0
        %v2424 = vpop.f32.mrb[0].mxu0
        %v2425 = vadd.f32 0.0, %v2424
        %v2426 = vpop.f32.mrb[0].mxu0
        %2427 = vdwg.mxu0
        %v2428 = vpack.c.bf16 %v2417, %v2414
        %v2429 = vpack.c.bf16 %v2425, %v2422
        %v2430 = vld [vmem:[%s6] sm:$0xff]
        %v2431 = vld [vmem:[%s6 + $0x8] sm:$0xff]
        %v2432 = vld [vmem:[%s6 + $0x10] sm:$0xff]
        %v2433 = vld [vmem:[%s6 + $0x18] sm:$0xff]
        %v2434 = vld [vmem:[%s6 + $0x20] sm:$0xff]
        %v2435 = vld [vmem:[%s6 + $0x28] sm:$0xff]
        %v2436 = vld [vmem:[%s6 + $0x30] sm:$0xff]
        %v2437 = vld [vmem:[%s6 + $0x38] sm:$0xff]
        %v2438 = vld [vmem:[%s6 + $0x40] sm:$0xff]
        %v2439 = vld [vmem:[%s6 + $0x48] sm:$0xff]
        %v2440 = vld [vmem:[%s6 + $0x50] sm:$0xff]
        %v2441 = vld [vmem:[%s6 + $0x58] sm:$0xff]
        %v2442 = vld [vmem:[%s6 + $0x60] sm:$0xff]
        %v2443 = vld [vmem:[%s6 + $0x68] sm:$0xff]
        %v2444 = vld [vmem:[%s6 + $0x70] sm:$0xff]
        %v2445 = vld [vmem:[%s6 + $0x78] sm:$0xff]
        %v2446 = vld [vmem:[%s7] sm:$0xff]
        %v2447 = vld [vmem:[%s7 + $0x8] sm:$0xff]
        %v2448 = vld [vmem:[%s7 + $0x10] sm:$0xff]
        %v2449 = vld [vmem:[%s7 + $0x18] sm:$0xff]
        %v2450 = vld [vmem:[%s7 + $0x20] sm:$0xff]
        %v2451 = vld [vmem:[%s7 + $0x28] sm:$0xff]
        %v2452 = vld [vmem:[%s7 + $0x30] sm:$0xff]
        %v2453 = vld [vmem:[%s7 + $0x38] sm:$0xff]
        %2455 = vset.pattern.permute.xlu0 0
        %2456 = vperm.xlu0 %2455, %v2446
        %v2457 = vpop.permute.xlu0 %2456
        %2460 = vset.pattern.permute.xlu0 0
        %2461 = vperm.xlu0 %2460, %v2447
        %v2462 = vpop.permute.xlu0 %2461
        %2465 = vset.pattern.permute.xlu0 0
        %2466 = vperm.xlu0 %2465, %v2448
        %v2467 = vpop.permute.xlu0 %2466
        %2470 = vset.pattern.permute.xlu0 0
        %2471 = vperm.xlu0 %2470, %v2449
        %v2472 = vpop.permute.xlu0 %2471
        %2475 = vset.pattern.permute.xlu0 0
        %2476 = vperm.xlu0 %2475, %v2450
        %v2477 = vpop.permute.xlu0 %2476
        %2480 = vset.pattern.permute.xlu0 0
        %2481 = vperm.xlu0 %2480, %v2451
        %v2482 = vpop.permute.xlu0 %2481
        %2485 = vset.pattern.permute.xlu0 0
        %2486 = vperm.xlu0 %2485, %v2452
        %v2487 = vpop.permute.xlu0 %2486
        %2490 = vset.pattern.permute.xlu0 0
        %2491 = vperm.xlu0 %2490, %v2453
        %v2492 = vpop.permute.xlu0 %2491
        %v2510 = vunpack.c.l.b16 %v2430
        %v2511 = vunpack.c.h.b16 %v2430
        %v2512 = vunpack.c.l.b16 %v2431
        %v2513 = vunpack.c.h.b16 %v2431
        %v2514 = vunpack.c.l.b16 %v2432
        %v2515 = vunpack.c.h.b16 %v2432
        %v2516 = vunpack.c.l.b16 %v2433
        %v2517 = vunpack.c.h.b16 %v2433
        %v2518 = vunpack.c.l.b16 %v2434
        %v2519 = vunpack.c.h.b16 %v2434
        %v2520 = vunpack.c.l.b16 %v2435
        %v2521 = vunpack.c.h.b16 %v2435
        %v2522 = vunpack.c.l.b16 %v2436
        %v2523 = vunpack.c.h.b16 %v2436
        %v2524 = vunpack.c.l.b16 %v2437
        %v2525 = vunpack.c.h.b16 %v2437
        %v2526 = vunpack.c.l.b16 %v2438
        %v2527 = vunpack.c.h.b16 %v2438
        %v2528 = vunpack.c.l.b16 %v2439
        %v2529 = vunpack.c.h.b16 %v2439
        %v2530 = vunpack.c.l.b16 %v2440
        %v2531 = vunpack.c.h.b16 %v2440
        %v2532 = vunpack.c.l.b16 %v2441
        %v2533 = vunpack.c.h.b16 %v2441
        %v2534 = vunpack.c.l.b16 %v2442
        %v2535 = vunpack.c.h.b16 %v2442
        %v2536 = vunpack.c.l.b16 %v2443
        %v2537 = vunpack.c.h.b16 %v2443
        %v2538 = vunpack.c.l.b16 %v2444
        %v2539 = vunpack.c.h.b16 %v2444
        %v2540 = vunpack.c.l.b16 %v2445
        %v2541 = vunpack.c.h.b16 %v2445
        %v2542 = vpack.c.b16 %v2514, %v2510
        %v2543 = vpack.c.b16 %v2515, %v2511
        %v2544 = vpack.c.b16 %v2516, %v2512
        %v2545 = vpack.c.b16 %v2517, %v2513
        %v2546 = vpack.c.b16 %v2522, %v2518
        %v2547 = vpack.c.b16 %v2523, %v2519
        %v2548 = vpack.c.b16 %v2524, %v2520
        %v2549 = vpack.c.b16 %v2525, %v2521
        %v2550 = vpack.c.b16 %v2530, %v2526
        %v2551 = vpack.c.b16 %v2531, %v2527
        %v2552 = vpack.c.b16 %v2532, %v2528
        %v2553 = vpack.c.b16 %v2533, %v2529
        %v2554 = vpack.c.b16 %v2538, %v2534
        %v2555 = vpack.c.b16 %v2539, %v2535
        %v2556 = vpack.c.b16 %v2540, %v2536
        %v2557 = vpack.c.b16 %v2541, %v2537
        %2574 = vmatprep.subr.bf16.mxu0 0
        %2575 = vmatpush1.bf16.msra.mxu0 %v1168
        %2576 = vmatprep.subr.bf16.mxu0 0
        %2577 = vmatpush1.bf16.msra.mxu0 %v1169
        %2578 = vmatprep.subr.bf16.mxu0 0
        %2579 = vmatpush1.bf16.msra.mxu0 %v1252
        %2580 = vmatprep.subr.bf16.mxu0 0
        %2581 = vmatpush1.bf16.msra.mxu0 %v1253
        %2582 = vmatprep.subr.bf16.mxu0 0
        %2583 = vmatpush1.bf16.msra.mxu0 %v1336
        %2584 = vmatprep.subr.bf16.mxu0 0
        %2585 = vmatpush1.bf16.msra.mxu0 %v1337
        %2586 = vmatprep.subr.bf16.mxu0 0
        %2587 = vmatpush1.bf16.msra.mxu0 %v1420
        %2588 = vmatprep.subr.bf16.mxu0 0
        %2589 = vmatpush1.bf16.msra.mxu0 %v1421
        %2590 = vmatprep.subr.bf16.mxu0 0
        %2591 = vmatpush1.bf16.msra.mxu0 %v1504
        %2592 = vmatprep.subr.bf16.mxu0 0
        %2593 = vmatpush1.bf16.msra.mxu0 %v1505
        %2594 = vmatprep.subr.bf16.mxu0 0
        %2595 = vmatpush1.bf16.msra.mxu0 %v1588
        %2596 = vmatprep.subr.bf16.mxu0 0
        %2597 = vmatpush1.bf16.msra.mxu0 %v1589
        %2598 = vmatprep.subr.bf16.mxu0 0
        %2599 = vmatpush1.bf16.msra.mxu0 %v1672
        %2600 = vmatprep.subr.bf16.mxu0 0
        %2601 = vmatpush1.bf16.msra.mxu0 %v1673
        %2602 = vmatprep.subr.bf16.mxu0 0
        %2603 = vmatpush1.bf16.msra.mxu0 %v1756
        %2604 = vmatprep.subr.bf16.mxu0 0
        %2605 = vmatpush1.bf16.msra.mxu0 %v1757
        %2606 = vmatprep.mubr.bf16.mxu0 %v2543
        %2607 = vmatmul.mubr.bf16.gmra.mrb[0].mxu0 %v2542
        %v2608 = vpop.f32.mrb[0].mxu0
        %v2609 = vadd.f32 %v2457, %v2608
        %v2610 = vpop.f32.mrb[0].mxu0
        %v2611 = vpop.f32.mrb[0].mxu0
        %v2612 = vadd.f32 %v2462, %v2611
        %v2613 = vpop.f32.mrb[0].mxu0
        %2614 = vmatprep.mubr.bf16.mxu0 %v2547
        %2615 = vmatmul.mubr.bf16.gmra.mrb[0].mxu0 %v2546
        %v2616 = vpop.f32.mrb[0].mxu0
        %v2617 = vadd.f32 %v2467, %v2616
        %v2618 = vpop.f32.mrb[0].mxu0
        %v2619 = vpop.f32.mrb[0].mxu0
        %v2620 = vadd.f32 %v2472, %v2619
        %v2621 = vpop.f32.mrb[0].mxu0
        %2622 = vmatprep.mubr.bf16.mxu0 %v2551
        %2623 = vmatmul.mubr.bf16.gmra.mrb[0].mxu0 %v2550
        %v2624 = vpop.f32.mrb[0].mxu0
        %v2625 = vadd.f32 %v2477, %v2624
        %v2626 = vpop.f32.mrb[0].mxu0
        %v2627 = vpop.f32.mrb[0].mxu0
        %v2628 = vadd.f32 %v2482, %v2627
        %v2629 = vpop.f32.mrb[0].mxu0
        %2630 = vmatprep.mubr.bf16.mxu0 %v2555
        %2631 = vmatmul.mubr.bf16.gmra.mrb[0].mxu0 %v2554
        %v2632 = vpop.f32.mrb[0].mxu0
        %v2633 = vadd.f32 %v2487, %v2632
        %v2634 = vpop.f32.mrb[0].mxu0
        %v2635 = vpop.f32.mrb[0].mxu0
        %v2636 = vadd.f32 %v2492, %v2635
        %v2637 = vpop.f32.mrb[0].mxu0
        %2638 = vdwg.mxu0
        %2639 = vmatprep.subr.bf16.mxu0 0
        %2640 = vmatpush1.bf16.msra.mxu0 %v1840
        %2641 = vmatprep.subr.bf16.mxu0 0
        %2642 = vmatpush1.bf16.msra.mxu0 %v1841
        %2643 = vmatprep.subr.bf16.mxu0 0
        %2644 = vmatpush1.bf16.msra.mxu0 %v1924
        %2645 = vmatprep.subr.bf16.mxu0 0
        %2646 = vmatpush1.bf16.msra.mxu0 %v1925
        %2647 = vmatprep.subr.bf16.mxu0 0
        %2648 = vmatpush1.bf16.msra.mxu0 %v2008
        %2649 = vmatprep.subr.bf16.mxu0 0
        %2650 = vmatpush1.bf16.msra.mxu0 %v2009
        %2651 = vmatprep.subr.bf16.mxu0 0
        %2652 = vmatpush1.bf16.msra.mxu0 %v2092
        %2653 = vmatprep.subr.bf16.mxu0 0
        %2654 = vmatpush1.bf16.msra.mxu0 %v2093
        %2655 = vmatprep.subr.bf16.mxu0 0
        %2656 = vmatpush1.bf16.msra.mxu0 %v2176
        %2657 = vmatprep.subr.bf16.mxu0 0
        %2658 = vmatpush1.bf16.msra.mxu0 %v2177
        %2659 = vmatprep.subr.bf16.mxu0 0
        %2660 = vmatpush1.bf16.msra.mxu0 %v2260
        %2661 = vmatprep.subr.bf16.mxu0 0
        %2662 = vmatpush1.bf16.msra.mxu0 %v2261
        %2663 = vmatprep.subr.bf16.mxu0 0
        %2664 = vmatpush1.bf16.msra.mxu0 %v2344
        %2665 = vmatprep.subr.bf16.mxu0 0
        %2666 = vmatpush1.bf16.msra.mxu0 %v2345
        %2667 = vmatprep.subr.bf16.mxu0 0
        %2668 = vmatpush1.bf16.msra.mxu0 %v2428
        %2669 = vmatprep.subr.bf16.mxu0 0
        %2670 = vmatpush1.bf16.msra.mxu0 %v2429
        %2671 = vmatprep.mubr.bf16.mxu0 %v2545
        %2672 = vmatmul.mubr.bf16.gmra.mrb[0].mxu0 %v2544
        %v2673 = vpop.f32.mrb[0].mxu0
        %v2674 = vadd.f32 %v2609, %v2673
        %v2675 = vpop.f32.mrb[0].mxu0
        %v2676 = vpop.f32.mrb[0].mxu0
        %v2677 = vadd.f32 %v2612, %v2676
        %v2678 = vpop.f32.mrb[0].mxu0
        %2679 = vmatprep.mubr.bf16.mxu0 %v2549
        %2680 = vmatmul.mubr.bf16.gmra.mrb[0].mxu0 %v2548
        %v2681 = vpop.f32.mrb[0].mxu0
        %v2682 = vadd.f32 %v2617, %v2681
        %v2683 = vpop.f32.mrb[0].mxu0
        %v2684 = vpop.f32.mrb[0].mxu0
        %v2685 = vadd.f32 %v2620, %v2684
        %v2686 = vpop.f32.mrb[0].mxu0
        %2687 = vmatprep.mubr.bf16.mxu0 %v2553
        %2688 = vmatmul.mubr.bf16.gmra.mrb[0].mxu0 %v2552
        %v2689 = vpop.f32.mrb[0].mxu0
        %v2690 = vadd.f32 %v2625, %v2689
        %v2691 = vpop.f32.mrb[0].mxu0
        %v2692 = vpop.f32.mrb[0].mxu0
        %v2693 = vadd.f32 %v2628, %v2692
        %v2694 = vpop.f32.mrb[0].mxu0
        %2695 = vmatprep.mubr.bf16.mxu0 %v2557
        %2696 = vmatmul.mubr.bf16.gmra.mrb[0].mxu0 %v2556
        %v2697 = vpop.f32.mrb[0].mxu0
        %v2698 = vadd.f32 %v2633, %v2697
        %v2699 = vpop.f32.mrb[0].mxu0
        %v2700 = vpop.f32.mrb[0].mxu0
        %v2701 = vadd.f32 %v2636, %v2700
        %v2702 = vpop.f32.mrb[0].mxu0
        %2703 = vdwg.mxu0
        %v2704 = vmax.f32 %v2674, 0.0
        %v2705 = vmax.f32 %v2677, 0.0
        %v2706 = vmax.f32 %v2682, 0.0
        %v2707 = vmax.f32 %v2685, 0.0
        %v2708 = vmax.f32 %v2690, 0.0
        %v2709 = vmax.f32 %v2693, 0.0
        %v2710 = vmax.f32 %v2698, 0.0
        %v2711 = vmax.f32 %v2701, 0.0
        %v2712 = vpack.c.bf16 %v2705, %v2704
        %v2713 = vpack.c.bf16 %v2707, %v2706
        %v2714 = vpack.c.bf16 %v2709, %v2708
        %v2715 = vpack.c.bf16 %v2711, %v2710
        %v2716 = vld [vmem:[%s3] sm:$0xf]
        %v2717 = vld [vmem:[%s3 + $0x4] sm:$0x1]
        %v2720 = vunpack.c.l.b16 %v2716
        %v2721 = vunpack.c.l.b16 %v2717
        %v2722 = vpack.c.b16 %v2721, %v2720
        %vm2723 = vcmask 72704
        %v2725 = vsel %vm2723, %v2712, 0
        %v2728 = vsel %vm2723, %v2713, 0
        %v2731 = vsel %vm2723, %v2714, 0
        %v2734 = vsel %vm2723, %v2715, 0
        %vm2736 = vcmask 1043456
        %vm2737 = vcmask 1044480
        %v2738 = vsel %vm2736, 4294967295, 65535
        %v2739 = vsel %vm2737, %v2738, 0
        %v2741 = vand.u32 %v2722, %v2739
        %2743 = vmatprep.subr.bf16.mxu0 0
        %2744 = vmatpush1.bf16.msra.mxu0 %v2741
        %2745 = vmatprep.subr.bf16.mxu0 0
        %2746 = vmatpush1.bf16.msra.mxu0 0
        %2747 = vmatprep.subr.bf16.mxu0 0
        %2748 = vmatpush1.bf16.msra.mxu0 0
        %2749 = vmatprep.subr.bf16.mxu0 0
        %2750 = vmatpush1.bf16.msra.mxu0 0
        %2751 = vmatprep.subr.bf16.mxu0 0
        %2752 = vmatpush1.bf16.msra.mxu0 0
        %2753 = vmatprep.subr.bf16.mxu0 0
        %2754 = vmatpush1.bf16.msra.mxu0 0
        %2755 = vmatprep.subr.bf16.mxu0 0
        %2756 = vmatpush1.bf16.msra.mxu0 0
        %2757 = vmatprep.subr.bf16.mxu0 0
        %2758 = vmatpush1.bf16.msra.mxu0 0
        %2759 = vmatprep.subr.bf16.mxu0 0
        %2760 = vmatpush1.bf16.msra.mxu0 0
        %2761 = vmatprep.subr.bf16.mxu0 0
        %2762 = vmatpush1.bf16.msra.mxu0 0
        %2763 = vmatprep.subr.bf16.mxu0 0
        %2764 = vmatpush1.bf16.msra.mxu0 0
        %2765 = vmatprep.subr.bf16.mxu0 0
        %2766 = vmatpush1.bf16.msra.mxu0 0
        %2767 = vmatprep.subr.bf16.mxu0 0
        %2768 = vmatpush1.bf16.msra.mxu0 0
        %2769 = vmatprep.subr.bf16.mxu0 0
        %2770 = vmatpush1.bf16.msra.mxu0 0
        %2771 = vmatprep.subr.bf16.mxu0 0
        %2772 = vmatpush1.bf16.msra.mxu0 0
        %2773 = vmatprep.subr.bf16.mxu0 0
        %2774 = vmatpush1.bf16.msra.mxu0 0
        %2775 = vmatprep.mubr.bf16.mxu0 0
        %2776 = vmatmul.mubr.bf16.gmra.mrb[0].mxu0 %v2725
        %v2777 = vpop.f32.mrb[0].mxu0
        %v2778 = vadd.f32 0.0, %v2777
        %v2779 = vpop.f32.mrb[0].mxu0
        %v2780 = vpop.f32.mrb[0].mxu0
        %v2781 = vadd.f32 0.0, %v2780
        %v2782 = vpop.f32.mrb[0].mxu0
        %2783 = vmatprep.mubr.bf16.mxu0 0
        %2784 = vmatmul.mubr.bf16.gmra.mrb[0].mxu0 %v2728
        %v2785 = vpop.f32.mrb[0].mxu0
        %v2786 = vadd.f32 0.0, %v2785
        %v2787 = vpop.f32.mrb[0].mxu0
        %v2788 = vpop.f32.mrb[0].mxu0
        %v2789 = vadd.f32 0.0, %v2788
        %v2790 = vpop.f32.mrb[0].mxu0
        %2791 = vmatprep.mubr.bf16.mxu0 0
        %2792 = vmatmul.mubr.bf16.gmra.mrb[0].mxu0 %v2731
        %v2793 = vpop.f32.mrb[0].mxu0
        %v2794 = vadd.f32 0.0, %v2793
        %v2795 = vpop.f32.mrb[0].mxu0
        %v2796 = vpop.f32.mrb[0].mxu0
        %v2797 = vadd.f32 0.0, %v2796
        %v2798 = vpop.f32.mrb[0].mxu0
        %2799 = vmatprep.mubr.bf16.mxu0 0
        %2800 = vmatmul.mubr.bf16.gmra.mrb[0].mxu0 %v2734
        %v2801 = vpop.f32.mrb[0].mxu0
        %v2802 = vadd.f32 0.0, %v2801
        %v2803 = vpop.f32.mrb[0].mxu0
        %v2804 = vpop.f32.mrb[0].mxu0
        %v2805 = vadd.f32 0.0, %v2804
        %v2806 = vpop.f32.mrb[0].mxu0
        %2807 = vdwg.mxu0
        %v2808 = vpack.c.bf16 %v2781, %v2778
        %v2809 = vpack.c.bf16 %v2789, %v2786
        %v2810 = vpack.c.bf16 %v2797, %v2794
        %v2811 = vpack.c.bf16 %v2805, %v2802
        %s2812 = scalar_lea.vmem %s3, 8
        %v2813 = vld [vmem:[%s2812] sm:$0xf]
        %v2814 = vld [vmem:[%s2812 + $0x4] sm:$0x1]
        %v2817 = vunpack.c.l.b16 %v2813
        %v2818 = vunpack.c.l.b16 %v2814
        %v2819 = vpack.c.b16 %v2818, %v2817
        %v2821 = vand.u32 %v2819, %v2739
        %2823 = vmatprep.subr.bf16.mxu0 0
        %2824 = vmatpush1.bf16.msra.mxu0 %v2821
        %2825 = vmatprep.subr.bf16.mxu0 0
        %2826 = vmatpush1.bf16.msra.mxu0 0
        %2827 = vmatprep.subr.bf16.mxu0 0
        %2828 = vmatpush1.bf16.msra.mxu0 0
        %2829 = vmatprep.subr.bf16.mxu0 0
        %2830 = vmatpush1.bf16.msra.mxu0 0
        %2831 = vmatprep.subr.bf16.mxu0 0
        %2832 = vmatpush1.bf16.msra.mxu0 0
        %2833 = vmatprep.subr.bf16.mxu0 0
        %2834 = vmatpush1.bf16.msra.mxu0 0
        %2835 = vmatprep.subr.bf16.mxu0 0
        %2836 = vmatpush1.bf16.msra.mxu0 0
        %2837 = vmatprep.subr.bf16.mxu0 0
        %2838 = vmatpush1.bf16.msra.mxu0 0
        %2839 = vmatprep.subr.bf16.mxu0 0
        %2840 = vmatpush1.bf16.msra.mxu0 0
        %2841 = vmatprep.subr.bf16.mxu0 0
        %2842 = vmatpush1.bf16.msra.mxu0 0
        %2843 = vmatprep.subr.bf16.mxu0 0
        %2844 = vmatpush1.bf16.msra.mxu0 0
        %2845 = vmatprep.subr.bf16.mxu0 0
        %2846 = vmatpush1.bf16.msra.mxu0 0
        %2847 = vmatprep.subr.bf16.mxu0 0
        %2848 = vmatpush1.bf16.msra.mxu0 0
        %2849 = vmatprep.subr.bf16.mxu0 0
        %2850 = vmatpush1.bf16.msra.mxu0 0
        %2851 = vmatprep.subr.bf16.mxu0 0
        %2852 = vmatpush1.bf16.msra.mxu0 0
        %2853 = vmatprep.subr.bf16.mxu0 0
        %2854 = vmatpush1.bf16.msra.mxu0 0
        %2855 = vmatprep.mubr.bf16.mxu0 0
        %2856 = vmatmul.mubr.bf16.gmra.mrb[0].mxu0 %v2725
        %v2857 = vpop.f32.mrb[0].mxu0
        %v2858 = vadd.f32 0.0, %v2857
        %v2859 = vpop.f32.mrb[0].mxu0
        %v2860 = vpop.f32.mrb[0].mxu0
        %v2861 = vadd.f32 0.0, %v2860
        %v2862 = vpop.f32.mrb[0].mxu0
        %2863 = vmatprep.mubr.bf16.mxu0 0
        %2864 = vmatmul.mubr.bf16.gmra.mrb[0].mxu0 %v2728
        %v2865 = vpop.f32.mrb[0].mxu0
        %v2866 = vadd.f32 0.0, %v2865
        %v2867 = vpop.f32.mrb[0].mxu0
        %v2868 = vpop.f32.mrb[0].mxu0
        %v2869 = vadd.f32 0.0, %v2868
        %v2870 = vpop.f32.mrb[0].mxu0
        %2871 = vmatprep.mubr.bf16.mxu0 0
        %2872 = vmatmul.mubr.bf16.gmra.mrb[0].mxu0 %v2731
        %v2873 = vpop.f32.mrb[0].mxu0
        %v2874 = vadd.f32 0.0, %v2873
        %v2875 = vpop.f32.mrb[0].mxu0
        %v2876 = vpop.f32.mrb[0].mxu0
        %v2877 = vadd.f32 0.0, %v2876
        %v2878 = vpop.f32.mrb[0].mxu0
        %2879 = vmatprep.mubr.bf16.mxu0 0
        %2880 = vmatmul.mubr.bf16.gmra.mrb[0].mxu0 %v2734
        %v2881 = vpop.f32.mrb[0].mxu0
        %v2882 = vadd.f32 0.0, %v2881
        %v2883 = vpop.f32.mrb[0].mxu0
        %v2884 = vpop.f32.mrb[0].mxu0
        %v2885 = vadd.f32 0.0, %v2884
        %v2886 = vpop.f32.mrb[0].mxu0
        %2887 = vdwg.mxu0
        %v2888 = vpack.c.bf16 %v2861, %v2858
        %v2889 = vpack.c.bf16 %v2869, %v2866
        %v2890 = vpack.c.bf16 %v2877, %v2874
        %v2891 = vpack.c.bf16 %v2885, %v2882
        %s2892 = scalar_lea.vmem %s3, 16
        %v2893 = vld [vmem:[%s2892] sm:$0xf]
        %v2894 = vld [vmem:[%s2892 + $0x4] sm:$0x1]
        %v2897 = vunpack.c.l.b16 %v2893
        %v2898 = vunpack.c.l.b16 %v2894
        %v2899 = vpack.c.b16 %v2898, %v2897
        %v2901 = vand.u32 %v2899, %v2739
        %2903 = vmatprep.subr.bf16.mxu0 0
        %2904 = vmatpush1.bf16.msra.mxu0 %v2901
        %2905 = vmatprep.subr.bf16.mxu0 0
        %2906 = vmatpush1.bf16.msra.mxu0 0
        %2907 = vmatprep.subr.bf16.mxu0 0
        %2908 = vmatpush1.bf16.msra.mxu0 0
        %2909 = vmatprep.subr.bf16.mxu0 0
        %2910 = vmatpush1.bf16.msra.mxu0 0
        %2911 = vmatprep.subr.bf16.mxu0 0
        %2912 = vmatpush1.bf16.msra.mxu0 0
        %2913 = vmatprep.subr.bf16.mxu0 0
        %2914 = vmatpush1.bf16.msra.mxu0 0
        %2915 = vmatprep.subr.bf16.mxu0 0
        %2916 = vmatpush1.bf16.msra.mxu0 0
        %2917 = vmatprep.subr.bf16.mxu0 0
        %2918 = vmatpush1.bf16.msra.mxu0 0
        %2919 = vmatprep.subr.bf16.mxu0 0
        %2920 = vmatpush1.bf16.msra.mxu0 0
        %2921 = vmatprep.subr.bf16.mxu0 0
        %2922 = vmatpush1.bf16.msra.mxu0 0
        %2923 = vmatprep.subr.bf16.mxu0 0
        %2924 = vmatpush1.bf16.msra.mxu0 0
        %2925 = vmatprep.subr.bf16.mxu0 0
        %2926 = vmatpush1.bf16.msra.mxu0 0
        %2927 = vmatprep.subr.bf16.mxu0 0
        %2928 = vmatpush1.bf16.msra.mxu0 0
        %2929 = vmatprep.subr.bf16.mxu0 0
        %2930 = vmatpush1.bf16.msra.mxu0 0
        %2931 = vmatprep.subr.bf16.mxu0 0
        %2932 = vmatpush1.bf16.msra.mxu0 0
        %2933 = vmatprep.subr.bf16.mxu0 0
        %2934 = vmatpush1.bf16.msra.mxu0 0
        %2935 = vmatprep.mubr.bf16.mxu0 0
        %2936 = vmatmul.mubr.bf16.gmra.mrb[0].mxu0 %v2725
        %v2937 = vpop.f32.mrb[0].mxu0
        %v2938 = vadd.f32 0.0, %v2937
        %v2939 = vpop.f32.mrb[0].mxu0
        %v2940 = vpop.f32.mrb[0].mxu0
        %v2941 = vadd.f32 0.0, %v2940
        %v2942 = vpop.f32.mrb[0].mxu0
        %2943 = vmatprep.mubr.bf16.mxu0 0
        %2944 = vmatmul.mubr.bf16.gmra.mrb[0].mxu0 %v2728
        %v2945 = vpop.f32.mrb[0].mxu0
        %v2946 = vadd.f32 0.0, %v2945
        %v2947 = vpop.f32.mrb[0].mxu0
        %v2948 = vpop.f32.mrb[0].mxu0
        %v2949 = vadd.f32 0.0, %v2948
        %v2950 = vpop.f32.mrb[0].mxu0
        %2951 = vmatprep.mubr.bf16.mxu0 0
        %2952 = vmatmul.mubr.bf16.gmra.mrb[0].mxu0 %v2731
        %v2953 = vpop.f32.mrb[0].mxu0
        %v2954 = vadd.f32 0.0, %v2953
        %v2955 = vpop.f32.mrb[0].mxu0
        %v2956 = vpop.f32.mrb[0].mxu0
        %v2957 = vadd.f32 0.0, %v2956
        %v2958 = vpop.f32.mrb[0].mxu0
        %2959 = vmatprep.mubr.bf16.mxu0 0
        %2960 = vmatmul.mubr.bf16.gmra.mrb[0].mxu0 %v2734
        %v2961 = vpop.f32.mrb[0].mxu0
        %v2962 = vadd.f32 0.0, %v2961
        %v2963 = vpop.f32.mrb[0].mxu0
        %v2964 = vpop.f32.mrb[0].mxu0
        %v2965 = vadd.f32 0.0, %v2964
        %v2966 = vpop.f32.mrb[0].mxu0
        %2967 = vdwg.mxu0
        %v2968 = vpack.c.bf16 %v2941, %v2938
        %v2969 = vpack.c.bf16 %v2949, %v2946
        %v2970 = vpack.c.bf16 %v2957, %v2954
        %v2971 = vpack.c.bf16 %v2965, %v2962
        %s2972 = scalar_lea.vmem %s3, 24
        %v2973 = vld [vmem:[%s2972] sm:$0xf]
        %v2974 = vld [vmem:[%s2972 + $0x4] sm:$0x1]
        %v2977 = vunpack.c.l.b16 %v2973
        %v2978 = vunpack.c.l.b16 %v2974
        %v2979 = vpack.c.b16 %v2978, %v2977
        %v2981 = vand.u32 %v2979, %v2739
        %2983 = vmatprep.subr.bf16.mxu0 0
        %2984 = vmatpush1.bf16.msra.mxu0 %v2981
        %2985 = vmatprep.subr.bf16.mxu0 0
        %2986 = vmatpush1.bf16.msra.mxu0 0
        %2987 = vmatprep.subr.bf16.mxu0 0
        %2988 = vmatpush1.bf16.msra.mxu0 0
        %2989 = vmatprep.subr.bf16.mxu0 0
        %2990 = vmatpush1.bf16.msra.mxu0 0
        %2991 = vmatprep.subr.bf16.mxu0 0
        %2992 = vmatpush1.bf16.msra.mxu0 0
        %2993 = vmatprep.subr.bf16.mxu0 0
        %2994 = vmatpush1.bf16.msra.mxu0 0
        %2995 = vmatprep.subr.bf16.mxu0 0
        %2996 = vmatpush1.bf16.msra.mxu0 0
        %2997 = vmatprep.subr.bf16.mxu0 0
        %2998 = vmatpush1.bf16.msra.mxu0 0
        %2999 = vmatprep.subr.bf16.mxu0 0
        %3000 = vmatpush1.bf16.msra.mxu0 0
        %3001 = vmatprep.subr.bf16.mxu0 0
        %3002 = vmatpush1.bf16.msra.mxu0 0
        %3003 = vmatprep.subr.bf16.mxu0 0
        %3004 = vmatpush1.bf16.msra.mxu0 0
        %3005 = vmatprep.subr.bf16.mxu0 0
        %3006 = vmatpush1.bf16.msra.mxu0 0
        %3007 = vmatprep.subr.bf16.mxu0 0
        %3008 = vmatpush1.bf16.msra.mxu0 0
        %3009 = vmatprep.subr.bf16.mxu0 0
        %3010 = vmatpush1.bf16.msra.mxu0 0
        %3011 = vmatprep.subr.bf16.mxu0 0
        %3012 = vmatpush1.bf16.msra.mxu0 0
        %3013 = vmatprep.subr.bf16.mxu0 0
        %3014 = vmatpush1.bf16.msra.mxu0 0
        %3015 = vmatprep.mubr.bf16.mxu0 0
        %3016 = vmatmul.mubr.bf16.gmra.mrb[0].mxu0 %v2725
        %v3017 = vpop.f32.mrb[0].mxu0
        %v3018 = vadd.f32 0.0, %v3017
        %v3019 = vpop.f32.mrb[0].mxu0
        %v3020 = vpop.f32.mrb[0].mxu0
        %v3021 = vadd.f32 0.0, %v3020
        %v3022 = vpop.f32.mrb[0].mxu0
        %3023 = vmatprep.mubr.bf16.mxu0 0
        %3024 = vmatmul.mubr.bf16.gmra.mrb[0].mxu0 %v2728
        %v3025 = vpop.f32.mrb[0].mxu0
        %v3026 = vadd.f32 0.0, %v3025
        %v3027 = vpop.f32.mrb[0].mxu0
        %v3028 = vpop.f32.mrb[0].mxu0
        %v3029 = vadd.f32 0.0, %v3028
        %v3030 = vpop.f32.mrb[0].mxu0
        %3031 = vmatprep.mubr.bf16.mxu0 0
        %3032 = vmatmul.mubr.bf16.gmra.mrb[0].mxu0 %v2731
        %v3033 = vpop.f32.mrb[0].mxu0
        %v3034 = vadd.f32 0.0, %v3033
        %v3035 = vpop.f32.mrb[0].mxu0
        %v3036 = vpop.f32.mrb[0].mxu0
        %v3037 = vadd.f32 0.0, %v3036
        %v3038 = vpop.f32.mrb[0].mxu0
        %3039 = vmatprep.mubr.bf16.mxu0 0
        %3040 = vmatmul.mubr.bf16.gmra.mrb[0].mxu0 %v2734
        %v3041 = vpop.f32.mrb[0].mxu0
        %v3042 = vadd.f32 0.0, %v3041
        %v3043 = vpop.f32.mrb[0].mxu0
        %v3044 = vpop.f32.mrb[0].mxu0
        %v3045 = vadd.f32 0.0, %v3044
        %v3046 = vpop.f32.mrb[0].mxu0
        %3047 = vdwg.mxu0
        %v3048 = vpack.c.bf16 %v3021, %v3018
        %v3049 = vpack.c.bf16 %v3029, %v3026
        %v3050 = vpack.c.bf16 %v3037, %v3034
        %v3051 = vpack.c.bf16 %v3045, %v3042
        %s3052 = scalar_lea.vmem %s3, 32
        %v3053 = vld [vmem:[%s3052] sm:$0xf]
        %v3054 = vld [vmem:[%s3052 + $0x4] sm:$0x1]
        %v3057 = vunpack.c.l.b16 %v3053
        %v3058 = vunpack.c.l.b16 %v3054
        %v3059 = vpack.c.b16 %v3058, %v3057
        %v3061 = vand.u32 %v3059, %v2739
        %3063 = vmatprep.subr.bf16.mxu0 0
        %3064 = vmatpush1.bf16.msra.mxu0 %v3061
        %3065 = vmatprep.subr.bf16.mxu0 0
        %3066 = vmatpush1.bf16.msra.mxu0 0
        %3067 = vmatprep.subr.bf16.mxu0 0
        %3068 = vmatpush1.bf16.msra.mxu0 0
        %3069 = vmatprep.subr.bf16.mxu0 0
        %3070 = vmatpush1.bf16.msra.mxu0 0
        %3071 = vmatprep.subr.bf16.mxu0 0
        %3072 = vmatpush1.bf16.msra.mxu0 0
        %3073 = vmatprep.subr.bf16.mxu0 0
        %3074 = vmatpush1.bf16.msra.mxu0 0
        %3075 = vmatprep.subr.bf16.mxu0 0
        %3076 = vmatpush1.bf16.msra.mxu0 0
        %3077 = vmatprep.subr.bf16.mxu0 0
        %3078 = vmatpush1.bf16.msra.mxu0 0
        %3079 = vmatprep.subr.bf16.mxu0 0
        %3080 = vmatpush1.bf16.msra.mxu0 0
        %3081 = vmatprep.subr.bf16.mxu0 0
        %3082 = vmatpush1.bf16.msra.mxu0 0
        %3083 = vmatprep.subr.bf16.mxu0 0
        %3084 = vmatpush1.bf16.msra.mxu0 0
        %3085 = vmatprep.subr.bf16.mxu0 0
        %3086 = vmatpush1.bf16.msra.mxu0 0
        %3087 = vmatprep.subr.bf16.mxu0 0
        %3088 = vmatpush1.bf16.msra.mxu0 0
        %3089 = vmatprep.subr.bf16.mxu0 0
        %3090 = vmatpush1.bf16.msra.mxu0 0
        %3091 = vmatprep.subr.bf16.mxu0 0
        %3092 = vmatpush1.bf16.msra.mxu0 0
        %3093 = vmatprep.subr.bf16.mxu0 0
        %3094 = vmatpush1.bf16.msra.mxu0 0
        %3095 = vmatprep.mubr.bf16.mxu0 0
        %3096 = vmatmul.mubr.bf16.gmra.mrb[0].mxu0 %v2725
        %v3097 = vpop.f32.mrb[0].mxu0
        %v3098 = vadd.f32 0.0, %v3097
        %v3099 = vpop.f32.mrb[0].mxu0
        %v3100 = vpop.f32.mrb[0].mxu0
        %v3101 = vadd.f32 0.0, %v3100
        %v3102 = vpop.f32.mrb[0].mxu0
        %3103 = vmatprep.mubr.bf16.mxu0 0
        %3104 = vmatmul.mubr.bf16.gmra.mrb[0].mxu0 %v2728
        %v3105 = vpop.f32.mrb[0].mxu0
        %v3106 = vadd.f32 0.0, %v3105
        %v3107 = vpop.f32.mrb[0].mxu0
        %v3108 = vpop.f32.mrb[0].mxu0
        %v3109 = vadd.f32 0.0, %v3108
        %v3110 = vpop.f32.mrb[0].mxu0
        %3111 = vmatprep.mubr.bf16.mxu0 0
        %3112 = vmatmul.mubr.bf16.gmra.mrb[0].mxu0 %v2731
        %v3113 = vpop.f32.mrb[0].mxu0
        %v3114 = vadd.f32 0.0, %v3113
        %v3115 = vpop.f32.mrb[0].mxu0
        %v3116 = vpop.f32.mrb[0].mxu0
        %v3117 = vadd.f32 0.0, %v3116
        %v3118 = vpop.f32.mrb[0].mxu0
        %3119 = vmatprep.mubr.bf16.mxu0 0
        %3120 = vmatmul.mubr.bf16.gmra.mrb[0].mxu0 %v2734
        %v3121 = vpop.f32.mrb[0].mxu0
        %v3122 = vadd.f32 0.0, %v3121
        %v3123 = vpop.f32.mrb[0].mxu0
        %v3124 = vpop.f32.mrb[0].mxu0
        %v3125 = vadd.f32 0.0, %v3124
        %v3126 = vpop.f32.mrb[0].mxu0
        %3127 = vdwg.mxu0
        %v3128 = vpack.c.bf16 %v3101, %v3098
        %v3129 = vpack.c.bf16 %v3109, %v3106
        %v3130 = vpack.c.bf16 %v3117, %v3114
        %v3131 = vpack.c.bf16 %v3125, %v3122
        %s3132 = scalar_lea.vmem %s3, 40
        %v3133 = vld [vmem:[%s3132] sm:$0xf]
        %v3134 = vld [vmem:[%s3132 + $0x4] sm:$0x1]
        %v3137 = vunpack.c.l.b16 %v3133
        %v3138 = vunpack.c.l.b16 %v3134
        %v3139 = vpack.c.b16 %v3138, %v3137
        %v3141 = vand.u32 %v3139, %v2739
        %3143 = vmatprep.subr.bf16.mxu0 0
        %3144 = vmatpush1.bf16.msra.mxu0 %v3141
        %3145 = vmatprep.subr.bf16.mxu0 0
        %3146 = vmatpush1.bf16.msra.mxu0 0
        %3147 = vmatprep.subr.bf16.mxu0 0
        %3148 = vmatpush1.bf16.msra.mxu0 0
        %3149 = vmatprep.subr.bf16.mxu0 0
        %3150 = vmatpush1.bf16.msra.mxu0 0
        %3151 = vmatprep.subr.bf16.mxu0 0
        %3152 = vmatpush1.bf16.msra.mxu0 0
        %3153 = vmatprep.subr.bf16.mxu0 0
        %3154 = vmatpush1.bf16.msra.mxu0 0
        %3155 = vmatprep.subr.bf16.mxu0 0
        %3156 = vmatpush1.bf16.msra.mxu0 0
        %3157 = vmatprep.subr.bf16.mxu0 0
        %3158 = vmatpush1.bf16.msra.mxu0 0
        %3159 = vmatprep.subr.bf16.mxu0 0
        %3160 = vmatpush1.bf16.msra.mxu0 0
        %3161 = vmatprep.subr.bf16.mxu0 0
        %3162 = vmatpush1.bf16.msra.mxu0 0
        %3163 = vmatprep.subr.bf16.mxu0 0
        %3164 = vmatpush1.bf16.msra.mxu0 0
        %3165 = vmatprep.subr.bf16.mxu0 0
        %3166 = vmatpush1.bf16.msra.mxu0 0
        %3167 = vmatprep.subr.bf16.mxu0 0
        %3168 = vmatpush1.bf16.msra.mxu0 0
        %3169 = vmatprep.subr.bf16.mxu0 0
        %3170 = vmatpush1.bf16.msra.mxu0 0
        %3171 = vmatprep.subr.bf16.mxu0 0
        %3172 = vmatpush1.bf16.msra.mxu0 0
        %3173 = vmatprep.subr.bf16.mxu0 0
        %3174 = vmatpush1.bf16.msra.mxu0 0
        %3175 = vmatprep.mubr.bf16.mxu0 0
        %3176 = vmatmul.mubr.bf16.gmra.mrb[0].mxu0 %v2725
        %v3177 = vpop.f32.mrb[0].mxu0
        %v3178 = vadd.f32 0.0, %v3177
        %v3179 = vpop.f32.mrb[0].mxu0
        %v3180 = vpop.f32.mrb[0].mxu0
        %v3181 = vadd.f32 0.0, %v3180
        %v3182 = vpop.f32.mrb[0].mxu0
        %3183 = vmatprep.mubr.bf16.mxu0 0
        %3184 = vmatmul.mubr.bf16.gmra.mrb[0].mxu0 %v2728
        %v3185 = vpop.f32.mrb[0].mxu0
        %v3186 = vadd.f32 0.0, %v3185
        %v3187 = vpop.f32.mrb[0].mxu0
        %v3188 = vpop.f32.mrb[0].mxu0
        %v3189 = vadd.f32 0.0, %v3188
        %v3190 = vpop.f32.mrb[0].mxu0
        %3191 = vmatprep.mubr.bf16.mxu0 0
        %3192 = vmatmul.mubr.bf16.gmra.mrb[0].mxu0 %v2731
        %v3193 = vpop.f32.mrb[0].mxu0
        %v3194 = vadd.f32 0.0, %v3193
        %v3195 = vpop.f32.mrb[0].mxu0
        %v3196 = vpop.f32.mrb[0].mxu0
        %v3197 = vadd.f32 0.0, %v3196
        %v3198 = vpop.f32.mrb[0].mxu0
        %3199 = vmatprep.mubr.bf16.mxu0 0
        %3200 = vmatmul.mubr.bf16.gmra.mrb[0].mxu0 %v2734
        %v3201 = vpop.f32.mrb[0].mxu0
        %v3202 = vadd.f32 0.0, %v3201
        %v3203 = vpop.f32.mrb[0].mxu0
        %v3204 = vpop.f32.mrb[0].mxu0
        %v3205 = vadd.f32 0.0, %v3204
        %v3206 = vpop.f32.mrb[0].mxu0
        %3207 = vdwg.mxu0
        %v3208 = vpack.c.bf16 %v3181, %v3178
        %v3209 = vpack.c.bf16 %v3189, %v3186
        %v3210 = vpack.c.bf16 %v3197, %v3194
        %v3211 = vpack.c.bf16 %v3205, %v3202
        %s3212 = scalar_lea.vmem %s3, 48
        %v3213 = vld [vmem:[%s3212] sm:$0xf]
        %v3214 = vld [vmem:[%s3212 + $0x4] sm:$0x1]
        %v3217 = vunpack.c.l.b16 %v3213
        %v3218 = vunpack.c.l.b16 %v3214
        %v3219 = vpack.c.b16 %v3218, %v3217
        %v3221 = vand.u32 %v3219, %v2739
        %3223 = vmatprep.subr.bf16.mxu0 0
        %3224 = vmatpush1.bf16.msra.mxu0 %v3221
        %3225 = vmatprep.subr.bf16.mxu0 0
        %3226 = vmatpush1.bf16.msra.mxu0 0
        %3227 = vmatprep.subr.bf16.mxu0 0
        %3228 = vmatpush1.bf16.msra.mxu0 0
        %3229 = vmatprep.subr.bf16.mxu0 0
        %3230 = vmatpush1.bf16.msra.mxu0 0
        %3231 = vmatprep.subr.bf16.mxu0 0
        %3232 = vmatpush1.bf16.msra.mxu0 0
        %3233 = vmatprep.subr.bf16.mxu0 0
        %3234 = vmatpush1.bf16.msra.mxu0 0
        %3235 = vmatprep.subr.bf16.mxu0 0
        %3236 = vmatpush1.bf16.msra.mxu0 0
        %3237 = vmatprep.subr.bf16.mxu0 0
        %3238 = vmatpush1.bf16.msra.mxu0 0
        %3239 = vmatprep.subr.bf16.mxu0 0
        %3240 = vmatpush1.bf16.msra.mxu0 0
        %3241 = vmatprep.subr.bf16.mxu0 0
        %3242 = vmatpush1.bf16.msra.mxu0 0
        %3243 = vmatprep.subr.bf16.mxu0 0
        %3244 = vmatpush1.bf16.msra.mxu0 0
        %3245 = vmatprep.subr.bf16.mxu0 0
        %3246 = vmatpush1.bf16.msra.mxu0 0
        %3247 = vmatprep.subr.bf16.mxu0 0
        %3248 = vmatpush1.bf16.msra.mxu0 0
        %3249 = vmatprep.subr.bf16.mxu0 0
        %3250 = vmatpush1.bf16.msra.mxu0 0
        %3251 = vmatprep.subr.bf16.mxu0 0
        %3252 = vmatpush1.bf16.msra.mxu0 0
        %3253 = vmatprep.subr.bf16.mxu0 0
        %3254 = vmatpush1.bf16.msra.mxu0 0
        %3255 = vmatprep.mubr.bf16.mxu0 0
        %3256 = vmatmul.mubr.bf16.gmra.mrb[0].mxu0 %v2725
        %v3257 = vpop.f32.mrb[0].mxu0
        %v3258 = vadd.f32 0.0, %v3257
        %v3259 = vpop.f32.mrb[0].mxu0
        %v3260 = vpop.f32.mrb[0].mxu0
        %v3261 = vadd.f32 0.0, %v3260
        %v3262 = vpop.f32.mrb[0].mxu0
        %3263 = vmatprep.mubr.bf16.mxu0 0
        %3264 = vmatmul.mubr.bf16.gmra.mrb[0].mxu0 %v2728
        %v3265 = vpop.f32.mrb[0].mxu0
        %v3266 = vadd.f32 0.0, %v3265
        %v3267 = vpop.f32.mrb[0].mxu0
        %v3268 = vpop.f32.mrb[0].mxu0
        %v3269 = vadd.f32 0.0, %v3268
        %v3270 = vpop.f32.mrb[0].mxu0
        %3271 = vmatprep.mubr.bf16.mxu0 0
        %3272 = vmatmul.mubr.bf16.gmra.mrb[0].mxu0 %v2731
        %v3273 = vpop.f32.mrb[0].mxu0
        %v3274 = vadd.f32 0.0, %v3273
        %v3275 = vpop.f32.mrb[0].mxu0
        %v3276 = vpop.f32.mrb[0].mxu0
        %v3277 = vadd.f32 0.0, %v3276
        %v3278 = vpop.f32.mrb[0].mxu0
        %3279 = vmatprep.mubr.bf16.mxu0 0
        %3280 = vmatmul.mubr.bf16.gmra.mrb[0].mxu0 %v2734
        %v3281 = vpop.f32.mrb[0].mxu0
        %v3282 = vadd.f32 0.0, %v3281
        %v3283 = vpop.f32.mrb[0].mxu0
        %v3284 = vpop.f32.mrb[0].mxu0
        %v3285 = vadd.f32 0.0, %v3284
        %v3286 = vpop.f32.mrb[0].mxu0
        %3287 = vdwg.mxu0
        %v3288 = vpack.c.bf16 %v3261, %v3258
        %v3289 = vpack.c.bf16 %v3269, %v3266
        %v3290 = vpack.c.bf16 %v3277, %v3274
        %v3291 = vpack.c.bf16 %v3285, %v3282
        %s3292 = scalar_lea.vmem %s3, 56
        %v3293 = vld [vmem:[%s3292] sm:$0xf]
        %v3294 = vld [vmem:[%s3292 + $0x4] sm:$0x1]
        %v3297 = vunpack.c.l.b16 %v3293
        %v3298 = vunpack.c.l.b16 %v3294
        %v3299 = vpack.c.b16 %v3298, %v3297
        %v3301 = vand.u32 %v3299, %v2739
        %3303 = vmatprep.subr.bf16.mxu0 0
        %3304 = vmatpush1.bf16.msra.mxu0 %v3301
        %3305 = vmatprep.subr.bf16.mxu0 0
        %3306 = vmatpush1.bf16.msra.mxu0 0
        %3307 = vmatprep.subr.bf16.mxu0 0
        %3308 = vmatpush1.bf16.msra.mxu0 0
        %3309 = vmatprep.subr.bf16.mxu0 0
        %3310 = vmatpush1.bf16.msra.mxu0 0
        %3311 = vmatprep.subr.bf16.mxu0 0
        %3312 = vmatpush1.bf16.msra.mxu0 0
        %3313 = vmatprep.subr.bf16.mxu0 0
        %3314 = vmatpush1.bf16.msra.mxu0 0
        %3315 = vmatprep.subr.bf16.mxu0 0
        %3316 = vmatpush1.bf16.msra.mxu0 0
        %3317 = vmatprep.subr.bf16.mxu0 0
        %3318 = vmatpush1.bf16.msra.mxu0 0
        %3319 = vmatprep.subr.bf16.mxu0 0
        %3320 = vmatpush1.bf16.msra.mxu0 0
        %3321 = vmatprep.subr.bf16.mxu0 0
        %3322 = vmatpush1.bf16.msra.mxu0 0
        %3323 = vmatprep.subr.bf16.mxu0 0
        %3324 = vmatpush1.bf16.msra.mxu0 0
        %3325 = vmatprep.subr.bf16.mxu0 0
        %3326 = vmatpush1.bf16.msra.mxu0 0
        %3327 = vmatprep.subr.bf16.mxu0 0
        %3328 = vmatpush1.bf16.msra.mxu0 0
        %3329 = vmatprep.subr.bf16.mxu0 0
        %3330 = vmatpush1.bf16.msra.mxu0 0
        %3331 = vmatprep.subr.bf16.mxu0 0
        %3332 = vmatpush1.bf16.msra.mxu0 0
        %3333 = vmatprep.subr.bf16.mxu0 0
        %3334 = vmatpush1.bf16.msra.mxu0 0
        %3335 = vmatprep.mubr.bf16.mxu0 0
        %3336 = vmatmul.mubr.bf16.gmra.mrb[0].mxu0 %v2725
        %v3337 = vpop.f32.mrb[0].mxu0
        %v3338 = vadd.f32 0.0, %v3337
        %v3339 = vpop.f32.mrb[0].mxu0
        %v3340 = vpop.f32.mrb[0].mxu0
        %v3341 = vadd.f32 0.0, %v3340
        %v3342 = vpop.f32.mrb[0].mxu0
        %3343 = vmatprep.mubr.bf16.mxu0 0
        %3344 = vmatmul.mubr.bf16.gmra.mrb[0].mxu0 %v2728
        %v3345 = vpop.f32.mrb[0].mxu0
        %v3346 = vadd.f32 0.0, %v3345
        %v3347 = vpop.f32.mrb[0].mxu0
        %v3348 = vpop.f32.mrb[0].mxu0
        %v3349 = vadd.f32 0.0, %v3348
        %v3350 = vpop.f32.mrb[0].mxu0
        %3351 = vmatprep.mubr.bf16.mxu0 0
        %3352 = vmatmul.mubr.bf16.gmra.mrb[0].mxu0 %v2731
        %v3353 = vpop.f32.mrb[0].mxu0
        %v3354 = vadd.f32 0.0, %v3353
        %v3355 = vpop.f32.mrb[0].mxu0
        %v3356 = vpop.f32.mrb[0].mxu0
        %v3357 = vadd.f32 0.0, %v3356
        %v3358 = vpop.f32.mrb[0].mxu0
        %3359 = vmatprep.mubr.bf16.mxu0 0
        %3360 = vmatmul.mubr.bf16.gmra.mrb[0].mxu0 %v2734
        %v3361 = vpop.f32.mrb[0].mxu0
        %v3362 = vadd.f32 0.0, %v3361
        %v3363 = vpop.f32.mrb[0].mxu0
        %v3364 = vpop.f32.mrb[0].mxu0
        %v3365 = vadd.f32 0.0, %v3364
        %v3366 = vpop.f32.mrb[0].mxu0
        %3367 = vdwg.mxu0
        %v3368 = vpack.c.bf16 %v3341, %v3338
        %v3369 = vpack.c.bf16 %v3349, %v3346
        %v3370 = vpack.c.bf16 %v3357, %v3354
        %v3371 = vpack.c.bf16 %v3365, %v3362
        %s3372 = scalar_lea.vmem %s3, 64
        %v3373 = vld [vmem:[%s3372] sm:$0xf]
        %v3374 = vld [vmem:[%s3372 + $0x4] sm:$0x1]
        %v3377 = vunpack.c.l.b16 %v3373
        %v3378 = vunpack.c.l.b16 %v3374
        %v3379 = vpack.c.b16 %v3378, %v3377
        %v3381 = vand.u32 %v3379, %v2739
        %3383 = vmatprep.subr.bf16.mxu0 0
        %3384 = vmatpush1.bf16.msra.mxu0 %v3381
        %3385 = vmatprep.subr.bf16.mxu0 0
        %3386 = vmatpush1.bf16.msra.mxu0 0
        %3387 = vmatprep.subr.bf16.mxu0 0
        %3388 = vmatpush1.bf16.msra.mxu0 0
        %3389 = vmatprep.subr.bf16.mxu0 0
        %3390 = vmatpush1.bf16.msra.mxu0 0
        %3391 = vmatprep.subr.bf16.mxu0 0
        %3392 = vmatpush1.bf16.msra.mxu0 0
        %3393 = vmatprep.subr.bf16.mxu0 0
        %3394 = vmatpush1.bf16.msra.mxu0 0
        %3395 = vmatprep.subr.bf16.mxu0 0
        %3396 = vmatpush1.bf16.msra.mxu0 0
        %3397 = vmatprep.subr.bf16.mxu0 0
        %3398 = vmatpush1.bf16.msra.mxu0 0
        %3399 = vmatprep.subr.bf16.mxu0 0
        %3400 = vmatpush1.bf16.msra.mxu0 0
        %3401 = vmatprep.subr.bf16.mxu0 0
        %3402 = vmatpush1.bf16.msra.mxu0 0
        %3403 = vmatprep.subr.bf16.mxu0 0
        %3404 = vmatpush1.bf16.msra.mxu0 0
        %3405 = vmatprep.subr.bf16.mxu0 0
        %3406 = vmatpush1.bf16.msra.mxu0 0
        %3407 = vmatprep.subr.bf16.mxu0 0
        %3408 = vmatpush1.bf16.msra.mxu0 0
        %3409 = vmatprep.subr.bf16.mxu0 0
        %3410 = vmatpush1.bf16.msra.mxu0 0
        %3411 = vmatprep.subr.bf16.mxu0 0
        %3412 = vmatpush1.bf16.msra.mxu0 0
        %3413 = vmatprep.subr.bf16.mxu0 0
        %3414 = vmatpush1.bf16.msra.mxu0 0
        %3415 = vmatprep.mubr.bf16.mxu0 0
        %3416 = vmatmul.mubr.bf16.gmra.mrb[0].mxu0 %v2725
        %v3417 = vpop.f32.mrb[0].mxu0
        %v3418 = vadd.f32 0.0, %v3417
        %v3419 = vpop.f32.mrb[0].mxu0
        %v3420 = vpop.f32.mrb[0].mxu0
        %v3421 = vadd.f32 0.0, %v3420
        %v3422 = vpop.f32.mrb[0].mxu0
        %3423 = vmatprep.mubr.bf16.mxu0 0
        %3424 = vmatmul.mubr.bf16.gmra.mrb[0].mxu0 %v2728
        %v3425 = vpop.f32.mrb[0].mxu0
        %v3426 = vadd.f32 0.0, %v3425
        %v3427 = vpop.f32.mrb[0].mxu0
        %v3428 = vpop.f32.mrb[0].mxu0
        %v3429 = vadd.f32 0.0, %v3428
        %v3430 = vpop.f32.mrb[0].mxu0
        %3431 = vmatprep.mubr.bf16.mxu0 0
        %3432 = vmatmul.mubr.bf16.gmra.mrb[0].mxu0 %v2731
        %v3433 = vpop.f32.mrb[0].mxu0
        %v3434 = vadd.f32 0.0, %v3433
        %v3435 = vpop.f32.mrb[0].mxu0
        %v3436 = vpop.f32.mrb[0].mxu0
        %v3437 = vadd.f32 0.0, %v3436
        %v3438 = vpop.f32.mrb[0].mxu0
        %3439 = vmatprep.mubr.bf16.mxu0 0
        %3440 = vmatmul.mubr.bf16.gmra.mrb[0].mxu0 %v2734
        %v3441 = vpop.f32.mrb[0].mxu0
        %v3442 = vadd.f32 0.0, %v3441
        %v3443 = vpop.f32.mrb[0].mxu0
        %v3444 = vpop.f32.mrb[0].mxu0
        %v3445 = vadd.f32 0.0, %v3444
        %v3446 = vpop.f32.mrb[0].mxu0
        %3447 = vdwg.mxu0
        %v3448 = vpack.c.bf16 %v3421, %v3418
        %v3449 = vpack.c.bf16 %v3429, %v3426
        %v3450 = vpack.c.bf16 %v3437, %v3434
        %v3451 = vpack.c.bf16 %v3445, %v3442
        %v3452 = vld [vmem:[%s8] sm:$0xff]
        %v3453 = vld [vmem:[%s8 + $0x8] sm:$0xff]
        %v3454 = vld [vmem:[%s8 + $0x10] sm:$0xf]
        %v3455 = vld [vmem:[%s8 + $0x14] sm:$0xff]
        %v3456 = vld [vmem:[%s8 + $0x1c] sm:$0xff]
        %v3457 = vld [vmem:[%s8 + $0x24] sm:$0xf]
        %v3458 = vld [vmem:[%s8 + $0x28] sm:$0xff]
        %v3459 = vld [vmem:[%s8 + $0x30] sm:$0xff]
        %v3460 = vld [vmem:[%s8 + $0x38] sm:$0xf]
        %v3461 = vld [vmem:[%s8 + $0x3c] sm:$0xff]
        %v3462 = vld [vmem:[%s8 + $0x44] sm:$0xff]
        %v3463 = vld [vmem:[%s8 + $0x4c] sm:$0xf]
        %v3464 = vld [vmem:[%s8 + $0x50] sm:$0xff]
        %v3465 = vld [vmem:[%s8 + $0x58] sm:$0xff]
        %v3466 = vld [vmem:[%s8 + $0x60] sm:$0xf]
        %v3467 = vld [vmem:[%s8 + $0x64] sm:$0xff]
        %v3468 = vld [vmem:[%s8 + $0x6c] sm:$0xff]
        %v3469 = vld [vmem:[%s8 + $0x74] sm:$0xf]
        %v3470 = vld [vmem:[%s8 + $0x78] sm:$0xff]
        %v3471 = vld [vmem:[%s8 + $0x80] sm:$0xff]
        %v3472 = vld [vmem:[%s8 + $0x88] sm:$0xf]
        %v3473 = vld [vmem:[%s8 + $0x8c] sm:$0xff]
        %v3474 = vld [vmem:[%s8 + $0x94] sm:$0xff]
        %v3475 = vld [vmem:[%s8 + $0x9c] sm:$0xf]
        %v3476 = vld [vmem:[%s9] sm:$0xff]
        %v3477 = vld [vmem:[%s9 + $0x8] sm:$0xff]
        %v3478 = vld [vmem:[%s9 + $0x10] sm:$0xff]
        %v3479 = vld [vmem:[%s9 + $0x18] sm:$0xff]
        %v3480 = vld [vmem:[%s9 + $0x20] sm:$0xff]
        %v3481 = vld [vmem:[%s9 + $0x28] sm:$0xff]
        %v3482 = vld [vmem:[%s9 + $0x30] sm:$0xff]
        %v3483 = vld [vmem:[%s9 + $0x38] sm:$0xff]
        %v3508 = vunpack.c.l.b16 %v3452
        %v3509 = vunpack.c.h.b16 %v3452
        %v3510 = vunpack.c.l.b16 %v3453
        %v3511 = vunpack.c.h.b16 %v3453
        %v3512 = vunpack.c.l.b16 %v3454
        %v3513 = vunpack.c.l.b16 %v3455
        %v3514 = vunpack.c.h.b16 %v3455
        %v3515 = vunpack.c.l.b16 %v3456
        %v3516 = vunpack.c.h.b16 %v3456
        %v3517 = vunpack.c.l.b16 %v3457
        %v3518 = vunpack.c.l.b16 %v3458
        %v3519 = vunpack.c.h.b16 %v3458
        %v3520 = vunpack.c.l.b16 %v3459
        %v3521 = vunpack.c.h.b16 %v3459
        %v3522 = vunpack.c.l.b16 %v3460
        %v3523 = vunpack.c.l.b16 %v3461
        %v3524 = vunpack.c.h.b16 %v3461
        %v3525 = vunpack.c.l.b16 %v3462
        %v3526 = vunpack.c.h.b16 %v3462
        %v3527 = vunpack.c.l.b16 %v3463
        %v3528 = vunpack.c.l.b16 %v3464
        %v3529 = vunpack.c.h.b16 %v3464
        %v3530 = vunpack.c.l.b16 %v3465
        %v3531 = vunpack.c.h.b16 %v3465
        %v3532 = vunpack.c.l.b16 %v3466
        %v3533 = vunpack.c.l.b16 %v3467
        %v3534 = vunpack.c.h.b16 %v3467
        %v3535 = vunpack.c.l.b16 %v3468
        %v3536 = vunpack.c.h.b16 %v3468
        %v3537 = vunpack.c.l.b16 %v3469
        %v3538 = vunpack.c.l.b16 %v3470
        %v3539 = vunpack.c.h.b16 %v3470
        %v3540 = vunpack.c.l.b16 %v3471
        %v3541 = vunpack.c.h.b16 %v3471
        %v3542 = vunpack.c.l.b16 %v3472
        %v3543 = vunpack.c.l.b16 %v3473
        %v3544 = vunpack.c.h.b16 %v3473
        %v3545 = vunpack.c.l.b16 %v3474
        %v3546 = vunpack.c.h.b16 %v3474
        %v3547 = vunpack.c.l.b16 %v3475
        %v3548 = vpack.c.b16 %v3513, %v3508
        %v3549 = vpack.c.b16 %v3514, %v3509
        %v3550 = vpack.c.b16 %v3515, %v3510
        %v3551 = vpack.c.b16 %v3516, %v3511
        %v3552 = vpack.c.b16 %v3517, %v3512
        %v3553 = vpack.c.b16 %v3523, %v3518
        %v3554 = vpack.c.b16 %v3524, %v3519
        %v3555 = vpack.c.b16 %v3525, %v3520
        %v3556 = vpack.c.b16 %v3526, %v3521
        %v3557 = vpack.c.b16 %v3527, %v3522
        %v3558 = vpack.c.b16 %v3533, %v3528
        %v3559 = vpack.c.b16 %v3534, %v3529
        %v3560 = vpack.c.b16 %v3535, %v3530
        %v3561 = vpack.c.b16 %v3536, %v3531
        %v3562 = vpack.c.b16 %v3537, %v3532
        %v3563 = vpack.c.b16 %v3543, %v3538
        %v3564 = vpack.c.b16 %v3544, %v3539
        %v3565 = vpack.c.b16 %v3545, %v3540
        %v3566 = vpack.c.b16 %v3546, %v3541
        %v3567 = vpack.c.b16 %v3547, %v3542
        %v3585 = vsel %vm1112, %v3552, 0
        %v3588 = vsel %vm1112, %v3557, 0
        %v3591 = vsel %vm1112, %v3562, 0
        %v3594 = vsel %vm1112, %v3567, 0
        %3596 = vmatprep.subr.bf16.mxu0 0
        %3597 = vmatpush1.bf16.msra.mxu0 %v2808
        %3598 = vmatprep.subr.bf16.mxu0 0
        %3599 = vmatpush1.bf16.msra.mxu0 %v2809
        %3600 = vmatprep.subr.bf16.mxu0 0
        %3601 = vmatpush1.bf16.msra.mxu0 %v2810
        %3602 = vmatprep.subr.bf16.mxu0 0
        %3603 = vmatpush1.bf16.msra.mxu0 %v2811
        %3604 = vmatprep.subr.bf16.mxu0 0
        %3605 = vmatpush1.bf16.msra.mxu0 %v2888
        %3606 = vmatprep.subr.bf16.mxu0 0
        %3607 = vmatpush1.bf16.msra.mxu0 %v2889
        %3608 = vmatprep.subr.bf16.mxu0 0
        %3609 = vmatpush1.bf16.msra.mxu0 %v2890
        %3610 = vmatprep.subr.bf16.mxu0 0
        %3611 = vmatpush1.bf16.msra.mxu0 %v2891
        %3612 = vmatprep.subr.bf16.mxu0 0
        %3613 = vmatpush1.bf16.msra.mxu0 %v2968
        %3614 = vmatprep.subr.bf16.mxu0 0
        %3615 = vmatpush1.bf16.msra.mxu0 %v2969
        %3616 = vmatprep.subr.bf16.mxu0 0
        %3617 = vmatpush1.bf16.msra.mxu0 %v2970
        %3618 = vmatprep.subr.bf16.mxu0 0
        %3619 = vmatpush1.bf16.msra.mxu0 %v2971
        %3620 = vmatprep.subr.bf16.mxu0 0
        %3621 = vmatpush1.bf16.msra.mxu0 %v3048
        %3622 = vmatprep.subr.bf16.mxu0 0
        %3623 = vmatpush1.bf16.msra.mxu0 %v3049
        %3624 = vmatprep.subr.bf16.mxu0 0
        %3625 = vmatpush1.bf16.msra.mxu0 %v3050
        %3626 = vmatprep.subr.bf16.mxu0 0
        %3627 = vmatpush1.bf16.msra.mxu0 %v3051
        %3628 = vmatprep.mubr.bf16.mxu0 %v3549
        %3629 = vmatmul.mubr.bf16.gmra.mrb[0].mxu0 %v3548
        %v3630 = vpop.f32.mrb[0].mxu0
        %v3631 = vadd.f32 %v3476, %v3630
        %v3632 = vpop.f32.mrb[0].mxu0
        %v3633 = vpop.f32.mrb[0].mxu0
        %v3634 = vadd.f32 %v3477, %v3633
        %v3635 = vpop.f32.mrb[0].mxu0
        %3636 = vmatprep.mubr.bf16.mxu0 %v3554
        %3637 = vmatmul.mubr.bf16.gmra.mrb[0].mxu0 %v3553
        %v3638 = vpop.f32.mrb[0].mxu0
        %v3639 = vadd.f32 %v3478, %v3638
        %v3640 = vpop.f32.mrb[0].mxu0
        %v3641 = vpop.f32.mrb[0].mxu0
        %v3642 = vadd.f32 %v3479, %v3641
        %v3643 = vpop.f32.mrb[0].mxu0
        %3644 = vmatprep.mubr.bf16.mxu0 %v3559
        %3645 = vmatmul.mubr.bf16.gmra.mrb[0].mxu0 %v3558
        %v3646 = vpop.f32.mrb[0].mxu0
        %v3647 = vadd.f32 %v3480, %v3646
        %v3648 = vpop.f32.mrb[0].mxu0
        %v3649 = vpop.f32.mrb[0].mxu0
        %v3650 = vadd.f32 %v3481, %v3649
        %v3651 = vpop.f32.mrb[0].mxu0
        %3652 = vmatprep.mubr.bf16.mxu0 %v3564
        %3653 = vmatmul.mubr.bf16.gmra.mrb[0].mxu0 %v3563
        %v3654 = vpop.f32.mrb[0].mxu0
        %v3655 = vadd.f32 %v3482, %v3654
        %v3656 = vpop.f32.mrb[0].mxu0
        %v3657 = vpop.f32.mrb[0].mxu0
        %v3658 = vadd.f32 %v3483, %v3657
        %v3659 = vpop.f32.mrb[0].mxu0
        %3660 = vdwg.mxu0
        %3661 = vmatprep.subr.bf16.mxu0 0
        %3662 = vmatpush1.bf16.msra.mxu0 %v3128
        %3663 = vmatprep.subr.bf16.mxu0 0
        %3664 = vmatpush1.bf16.msra.mxu0 %v3129
        %3665 = vmatprep.subr.bf16.mxu0 0
        %3666 = vmatpush1.bf16.msra.mxu0 %v3130
        %3667 = vmatprep.subr.bf16.mxu0 0
        %3668 = vmatpush1.bf16.msra.mxu0 %v3131
        %3669 = vmatprep.subr.bf16.mxu0 0
        %3670 = vmatpush1.bf16.msra.mxu0 %v3208
        %3671 = vmatprep.subr.bf16.mxu0 0
        %3672 = vmatpush1.bf16.msra.mxu0 %v3209
        %3673 = vmatprep.subr.bf16.mxu0 0
        %3674 = vmatpush1.bf16.msra.mxu0 %v3210
        %3675 = vmatprep.subr.bf16.mxu0 0
        %3676 = vmatpush1.bf16.msra.mxu0 %v3211
        %3677 = vmatprep.subr.bf16.mxu0 0
        %3678 = vmatpush1.bf16.msra.mxu0 %v3288
        %3679 = vmatprep.subr.bf16.mxu0 0
        %3680 = vmatpush1.bf16.msra.mxu0 %v3289
        %3681 = vmatprep.subr.bf16.mxu0 0
        %3682 = vmatpush1.bf16.msra.mxu0 %v3290
        %3683 = vmatprep.subr.bf16.mxu0 0
        %3684 = vmatpush1.bf16.msra.mxu0 %v3291
        %3685 = vmatprep.subr.bf16.mxu0 0
        %3686 = vmatpush1.bf16.msra.mxu0 %v3368
        %3687 = vmatprep.subr.bf16.mxu0 0
        %3688 = vmatpush1.bf16.msra.mxu0 %v3369
        %3689 = vmatprep.subr.bf16.mxu0 0
        %3690 = vmatpush1.bf16.msra.mxu0 %v3370
        %3691 = vmatprep.subr.bf16.mxu0 0
        %3692 = vmatpush1.bf16.msra.mxu0 %v3371
        %3693 = vmatprep.mubr.bf16.mxu0 %v3551
        %3694 = vmatmul.mubr.bf16.gmra.mrb[0].mxu0 %v3550
        %v3695 = vpop.f32.mrb[0].mxu0
        %v3696 = vadd.f32 %v3631, %v3695
        %v3697 = vpop.f32.mrb[0].mxu0
        %v3698 = vpop.f32.mrb[0].mxu0
        %v3699 = vadd.f32 %v3634, %v3698
        %v3700 = vpop.f32.mrb[0].mxu0
        %3701 = vmatprep.mubr.bf16.mxu0 %v3556
        %3702 = vmatmul.mubr.bf16.gmra.mrb[0].mxu0 %v3555
        %v3703 = vpop.f32.mrb[0].mxu0
        %v3704 = vadd.f32 %v3639, %v3703
        %v3705 = vpop.f32.mrb[0].mxu0
        %v3706 = vpop.f32.mrb[0].mxu0
        %v3707 = vadd.f32 %v3642, %v3706
        %v3708 = vpop.f32.mrb[0].mxu0
        %3709 = vmatprep.mubr.bf16.mxu0 %v3561
        %3710 = vmatmul.mubr.bf16.gmra.mrb[0].mxu0 %v3560
        %v3711 = vpop.f32.mrb[0].mxu0
        %v3712 = vadd.f32 %v3647, %v3711
        %v3713 = vpop.f32.mrb[0].mxu0
        %v3714 = vpop.f32.mrb[0].mxu0
        %v3715 = vadd.f32 %v3650, %v3714
        %v3716 = vpop.f32.mrb[0].mxu0
        %3717 = vmatprep.mubr.bf16.mxu0 %v3566
        %3718 = vmatmul.mubr.bf16.gmra.mrb[0].mxu0 %v3565
        %v3719 = vpop.f32.mrb[0].mxu0
        %v3720 = vadd.f32 %v3655, %v3719
        %v3721 = vpop.f32.mrb[0].mxu0
        %v3722 = vpop.f32.mrb[0].mxu0
        %v3723 = vadd.f32 %v3658, %v3722
        %v3724 = vpop.f32.mrb[0].mxu0
        %3725 = vdwg.mxu0
        %3726 = vmatprep.subr.bf16.mxu0 0
        %3727 = vmatpush1.bf16.msra.mxu0 %v3448
        %3728 = vmatprep.subr.bf16.mxu0 0
        %3729 = vmatpush1.bf16.msra.mxu0 %v3449
        %3730 = vmatprep.subr.bf16.mxu0 0
        %3731 = vmatpush1.bf16.msra.mxu0 %v3450
        %3732 = vmatprep.subr.bf16.mxu0 0
        %3733 = vmatpush1.bf16.msra.mxu0 %v3451
        %3734 = vmatprep.subr.bf16.mxu0 0
        %3735 = vmatpush1.bf16.msra.mxu0 0
        %3736 = vmatprep.subr.bf16.mxu0 0
        %3737 = vmatpush1.bf16.msra.mxu0 0
        %3738 = vmatprep.subr.bf16.mxu0 0
        %3739 = vmatpush1.bf16.msra.mxu0 0
        %3740 = vmatprep.subr.bf16.mxu0 0
        %3741 = vmatpush1.bf16.msra.mxu0 0
        %3742 = vmatprep.subr.bf16.mxu0 0
        %3743 = vmatpush1.bf16.msra.mxu0 0
        %3744 = vmatprep.subr.bf16.mxu0 0
        %3745 = vmatpush1.bf16.msra.mxu0 0
        %3746 = vmatprep.subr.bf16.mxu0 0
        %3747 = vmatpush1.bf16.msra.mxu0 0
        %3748 = vmatprep.subr.bf16.mxu0 0
        %3749 = vmatpush1.bf16.msra.mxu0 0
        %3750 = vmatprep.subr.bf16.mxu0 0
        %3751 = vmatpush1.bf16.msra.mxu0 0
        %3752 = vmatprep.subr.bf16.mxu0 0
        %3753 = vmatpush1.bf16.msra.mxu0 0
        %3754 = vmatprep.subr.bf16.mxu0 0
        %3755 = vmatpush1.bf16.msra.mxu0 0
        %3756 = vmatprep.subr.bf16.mxu0 0
        %3757 = vmatpush1.bf16.msra.mxu0 0
        %3758 = vmatprep.mubr.bf16.mxu0 0
        %3759 = vmatmul.mubr.bf16.gmra.mrb[0].mxu0 %v3585
        %v3760 = vpop.f32.mrb[0].mxu0
        %v3761 = vadd.f32 %v3696, %v3760
        %v3762 = vpop.f32.mrb[0].mxu0
        %v3763 = vpop.f32.mrb[0].mxu0
        %v3764 = vadd.f32 %v3699, %v3763
        %v3765 = vpop.f32.mrb[0].mxu0
        %3766 = vmatprep.mubr.bf16.mxu0 0
        %3767 = vmatmul.mubr.bf16.gmra.mrb[0].mxu0 %v3588
        %v3768 = vpop.f32.mrb[0].mxu0
        %v3769 = vadd.f32 %v3704, %v3768
        %v3770 = vpop.f32.mrb[0].mxu0
        %v3771 = vpop.f32.mrb[0].mxu0
        %v3772 = vadd.f32 %v3707, %v3771
        %v3773 = vpop.f32.mrb[0].mxu0
        %3774 = vmatprep.mubr.bf16.mxu0 0
        %3775 = vmatmul.mubr.bf16.gmra.mrb[0].mxu0 %v3591
        %v3776 = vpop.f32.mrb[0].mxu0
        %v3777 = vadd.f32 %v3712, %v3776
        %v3778 = vpop.f32.mrb[0].mxu0
        %v3779 = vpop.f32.mrb[0].mxu0
        %v3780 = vadd.f32 %v3715, %v3779
        %v3781 = vpop.f32.mrb[0].mxu0
        %3782 = vmatprep.mubr.bf16.mxu0 0
        %3783 = vmatmul.mubr.bf16.gmra.mrb[0].mxu0 %v3594
        %v3784 = vpop.f32.mrb[0].mxu0
        %v3785 = vadd.f32 %v3720, %v3784
        %v3786 = vpop.f32.mrb[0].mxu0
        %v3787 = vpop.f32.mrb[0].mxu0
        %v3788 = vadd.f32 %v3723, %v3787
        %v3789 = vpop.f32.mrb[0].mxu0
        %3790 = vdwg.mxu0
        %v3791 = vmax.f32 %v3761, 0.0
        %v3792 = vmax.f32 %v3764, 0.0
        %v3793 = vmax.f32 %v3769, 0.0
        %v3794 = vmax.f32 %v3772, 0.0
        %v3795 = vmax.f32 %v3777, 0.0
        %v3796 = vmax.f32 %v3780, 0.0
        %v3797 = vmax.f32 %v3785, 0.0
        %v3798 = vmax.f32 %v3788, 0.0
        %v3799 = vpack.c.bf16 %v3792, %v3791
        %v3800 = vpack.c.bf16 %v3794, %v3793
        %v3801 = vpack.c.bf16 %v3796, %v3795
        %v3802 = vpack.c.bf16 %v3798, %v3797
        %v3803 = vld [vmem:[%s10] sm:$0xf]
        %v3804 = vld [vmem:[%s10 + $0x4] sm:$0xf]
        %v3805 = vld [vmem:[%s10 + $0x8] sm:$0xf]
        %v3806 = vld [vmem:[%s10 + $0xc] sm:$0xf]
        %v3807 = vld [vmem:[%s10 + $0x10] sm:$0xf]
        %v3808 = vld [vmem:[%s10 + $0x14] sm:$0xf]
        %v3809 = vld [vmem:[%s10 + $0x18] sm:$0xf]
        %v3810 = vld [vmem:[%s10 + $0x1c] sm:$0xf]
        %v3811 = vld [vmem:[%s10 + $0x20] sm:$0xf]
        %v3812 = vld [vmem:[%s10 + $0x24] sm:$0xf]
        %v3813 = vld [vmem:[%s10 + $0x28] sm:$0xf]
        %v3814 = vld [vmem:[%s10 + $0x2c] sm:$0xf]
        %v3815 = vld [vmem:[%s10 + $0x30] sm:$0xf]
        %v3816 = vld [vmem:[%s10 + $0x34] sm:$0xf]
        %v3817 = vld [vmem:[%s10 + $0x38] sm:$0xf]
        %v3818 = vld [vmem:[%s10 + $0x3c] sm:$0xf]
        %v3819 = vld [vmem:[%s10 + $0x40] sm:$0xf]
        %v3820 = vld [vmem:[%s10 + $0x44] sm:$0xf]
        %v3821 = vld [vmem:[%s10 + $0x48] sm:$0xf]
        %v3822 = vld [vmem:[%s10 + $0x4c] sm:$0xf]
        %v3823 = vld [vmem:[%s10 + $0x50] sm:$0xf]
        %v3824 = vld [vmem:[%s10 + $0x54] sm:$0xf]
        %v3825 = vld [vmem:[%s10 + $0x58] sm:$0xf]
        %v3826 = vld [vmem:[%s10 + $0x5c] sm:$0xf]
        %v3827 = vld [vmem:[%s10 + $0x60] sm:$0xf]
        %v3828 = vld [vmem:[%s10 + $0x64] sm:$0xf]
        %v3829 = vld [vmem:[%s10 + $0x68] sm:$0xf]
        %v3830 = vld [vmem:[%s10 + $0x6c] sm:$0xf]
        %v3831 = vld [vmem:[%s10 + $0x70] sm:$0xf]
        %v3832 = vld [vmem:[%s10 + $0x74] sm:$0xf]
        %v3833 = vld [vmem:[%s10 + $0x78] sm:$0xf]
        %v3834 = vld [vmem:[%s10 + $0x7c] sm:$0xf]
        %v3835 = vld [vmem:[%s10 + $0x80] sm:$0xf]
        %v3836 = vld [vmem:[%s10 + $0x84] sm:$0xf]
        %v3837 = vld [vmem:[%s10 + $0x88] sm:$0xf]
        %v3838 = vld [vmem:[%s10 + $0x8c] sm:$0xf]
        %v3839 = vld [vmem:[%s10 + $0x90] sm:$0xf]
        %v3840 = vld [vmem:[%s10 + $0x94] sm:$0xf]
        %v3841 = vld [vmem:[%s10 + $0x98] sm:$0xf]
        %v3842 = vld [vmem:[%s10 + $0x9c] sm:$0xf]
        %v3843 = vld [vmem:[%s10 + $0xa0] sm:$0xf]
        %v3844 = vld [vmem:[%s10 + $0xa4] sm:$0xf]
        %v3845 = vld [vmem:[%s10 + $0xa8] sm:$0xf]
        %v3846 = vld [vmem:[%s10 + $0xac] sm:$0xf]
        %v3847 = vld [vmem:[%s10 + $0xb0] sm:$0xf]
        %v3848 = vld [vmem:[%s10 + $0xb4] sm:$0xf]
        %v3849 = vld [vmem:[%s10 + $0xb8] sm:$0xf]
        %v3850 = vld [vmem:[%s10 + $0xbc] sm:$0xf]
        %v3851 = vld [vmem:[%s10 + $0xc0] sm:$0xf]
        %v3852 = vld [vmem:[%s10 + $0xc4] sm:$0xf]
        %v3853 = vld [vmem:[%s10 + $0xc8] sm:$0xf]
        %v3854 = vld [vmem:[%s10 + $0xcc] sm:$0xf]
        %v3855 = vld [vmem:[%s10 + $0xd0] sm:$0xf]
        %v3856 = vld [vmem:[%s10 + $0xd4] sm:$0xf]
        %v3857 = vld [vmem:[%s10 + $0xd8] sm:$0xf]
        %v3858 = vld [vmem:[%s10 + $0xdc] sm:$0xf]
        %v3859 = vld [vmem:[%s10 + $0xe0] sm:$0xf]
        %v3860 = vld [vmem:[%s10 + $0xe4] sm:$0xf]
        %v3861 = vld [vmem:[%s10 + $0xe8] sm:$0xf]
        %v3862 = vld [vmem:[%s10 + $0xec] sm:$0xf]
        %v3863 = vld [vmem:[%s10 + $0xf0] sm:$0xf]
        %v3864 = vld [vmem:[%s10 + $0xf4] sm:$0xf]
        %v3865 = vld [vmem:[%s10 + $0xf8] sm:$0xf]
        %v3866 = vld [vmem:[%s10 + $0xfc] sm:$0xf]
        %v3867 = vld [vmem:[%s11] sm:$0xff]
        %v3868 = vld [vmem:[%s11 + $0x8] sm:$0xff]
        %v3869 = vld [vmem:[%s11 + $0x10] sm:$0xff]
        %v3870 = vld [vmem:[%s11 + $0x18] sm:$0xff]
        %v3871 = vld [vmem:[%s11 + $0x20] sm:$0xff]
        %v3872 = vld [vmem:[%s11 + $0x28] sm:$0xff]
        %v3873 = vld [vmem:[%s11 + $0x30] sm:$0xff]
        %v3874 = vld [vmem:[%s11 + $0x38] sm:$0xff]
        %v3875 = vld [vmem:[%s11 + $0x40] sm:$0xff]
        %v3876 = vld [vmem:[%s11 + $0x48] sm:$0xff]
        %v3877 = vld [vmem:[%s11 + $0x50] sm:$0xff]
        %v3878 = vld [vmem:[%s11 + $0x58] sm:$0xff]
        %v3879 = vld [vmem:[%s11 + $0x60] sm:$0xff]
        %v3880 = vld [vmem:[%s11 + $0x68] sm:$0xff]
        %v3881 = vld [vmem:[%s11 + $0x70] sm:$0xff]
        %v3882 = vld [vmem:[%s11 + $0x78] sm:$0xff]
        %v3883 = vld [vmem:[%s11 + $0x80] sm:$0xff]
        %v3884 = vld [vmem:[%s11 + $0x88] sm:$0xff]
        %v3885 = vld [vmem:[%s11 + $0x90] sm:$0xff]
        %v3886 = vld [vmem:[%s11 + $0x98] sm:$0xff]
        %v3887 = vld [vmem:[%s11 + $0xa0] sm:$0xff]
        %v3888 = vld [vmem:[%s11 + $0xa8] sm:$0xff]
        %v3889 = vld [vmem:[%s11 + $0xb0] sm:$0xff]
        %v3890 = vld [vmem:[%s11 + $0xb8] sm:$0xff]
        %v3891 = vld [vmem:[%s11 + $0xc0] sm:$0xff]
        %v3892 = vld [vmem:[%s11 + $0xc8] sm:$0xff]
        %v3893 = vld [vmem:[%s11 + $0xd0] sm:$0xff]
        %v3894 = vld [vmem:[%s11 + $0xd8] sm:$0xff]
        %v3895 = vld [vmem:[%s11 + $0xe0] sm:$0xff]
        %v3896 = vld [vmem:[%s11 + $0xe8] sm:$0xff]
        %v3897 = vld [vmem:[%s11 + $0xf0] sm:$0xff]
        %v3898 = vld [vmem:[%s11 + $0xf8] sm:$0xff]
        %v3899 = vld [vmem:[%s11 + $0x100] sm:$0xff]
        %v3900 = vld [vmem:[%s11 + $0x108] sm:$0xff]
        %v3901 = vld [vmem:[%s11 + $0x110] sm:$0xff]
        %v3902 = vld [vmem:[%s11 + $0x118] sm:$0xff]
        %v3903 = vld [vmem:[%s11 + $0x120] sm:$0xff]
        %v3904 = vld [vmem:[%s11 + $0x128] sm:$0xff]
        %v3905 = vld [vmem:[%s11 + $0x130] sm:$0xff]
        %v3906 = vld [vmem:[%s11 + $0x138] sm:$0xff]
        %v3907 = vld [vmem:[%s11 + $0x140] sm:$0xff]
        %v3908 = vld [vmem:[%s11 + $0x148] sm:$0xff]
        %v3909 = vld [vmem:[%s11 + $0x150] sm:$0xff]
        %v3910 = vld [vmem:[%s11 + $0x158] sm:$0xff]
        %v3911 = vld [vmem:[%s11 + $0x160] sm:$0xff]
        %v3912 = vld [vmem:[%s11 + $0x168] sm:$0xff]
        %v3913 = vld [vmem:[%s11 + $0x170] sm:$0xff]
        %v3914 = vld [vmem:[%s11 + $0x178] sm:$0xff]
        %v3915 = vld [vmem:[%s11 + $0x180] sm:$0xff]
        %v3916 = vld [vmem:[%s11 + $0x188] sm:$0xff]
        %v3917 = vld [vmem:[%s11 + $0x190] sm:$0xff]
        %v3918 = vld [vmem:[%s11 + $0x198] sm:$0xff]
        %v3919 = vld [vmem:[%s11 + $0x1a0] sm:$0xff]
        %v3920 = vld [vmem:[%s11 + $0x1a8] sm:$0xff]
        %v3921 = vld [vmem:[%s11 + $0x1b0] sm:$0xff]
        %v3922 = vld [vmem:[%s11 + $0x1b8] sm:$0xff]
        %v3923 = vld [vmem:[%s11 + $0x1c0] sm:$0xff]
        %v3924 = vld [vmem:[%s11 + $0x1c8] sm:$0xff]
        %v3925 = vld [vmem:[%s11 + $0x1d0] sm:$0xff]
        %v3926 = vld [vmem:[%s11 + $0x1d8] sm:$0xff]
        %v3927 = vld [vmem:[%s11 + $0x1e0] sm:$0xff]
        %v3928 = vld [vmem:[%s11 + $0x1e8] sm:$0xff]
        %v3929 = vld [vmem:[%s11 + $0x1f0] sm:$0xff]
        %v3930 = vld [vmem:[%s11 + $0x1f8] sm:$0xff]
        %v3995 = vunpack.c.l.b16 %v3803
        %v3996 = vunpack.c.l.b16 %v3804
        %v3997 = vunpack.c.l.b16 %v3805
        %v3998 = vunpack.c.l.b16 %v3806
        %v3999 = vunpack.c.l.b16 %v3807
        %v4000 = vunpack.c.l.b16 %v3808
        %v4001 = vunpack.c.l.b16 %v3809
        %v4002 = vunpack.c.l.b16 %v3810
        %v4003 = vunpack.c.l.b16 %v3811
        %v4004 = vunpack.c.l.b16 %v3812
        %v4005 = vunpack.c.l.b16 %v3813
        %v4006 = vunpack.c.l.b16 %v3814
        %v4007 = vunpack.c.l.b16 %v3815
        %v4008 = vunpack.c.l.b16 %v3816
        %v4009 = vunpack.c.l.b16 %v3817
        %v4010 = vunpack.c.l.b16 %v3818
        %v4011 = vunpack.c.l.b16 %v3819
        %v4012 = vunpack.c.l.b16 %v3820
        %v4013 = vunpack.c.l.b16 %v3821
        %v4014 = vunpack.c.l.b16 %v3822
        %v4015 = vunpack.c.l.b16 %v3823
        %v4016 = vunpack.c.l.b16 %v3824
        %v4017 = vunpack.c.l.b16 %v3825
        %v4018 = vunpack.c.l.b16 %v3826
        %v4019 = vunpack.c.l.b16 %v3827
        %v4020 = vunpack.c.l.b16 %v3828
        %v4021 = vunpack.c.l.b16 %v3829
        %v4022 = vunpack.c.l.b16 %v3830
        %v4023 = vunpack.c.l.b16 %v3831
        %v4024 = vunpack.c.l.b16 %v3832
        %v4025 = vunpack.c.l.b16 %v3833
        %v4026 = vunpack.c.l.b16 %v3834
        %v4027 = vunpack.c.l.b16 %v3835
        %v4028 = vunpack.c.l.b16 %v3836
        %v4029 = vunpack.c.l.b16 %v3837
        %v4030 = vunpack.c.l.b16 %v3838
        %v4031 = vunpack.c.l.b16 %v3839
        %v4032 = vunpack.c.l.b16 %v3840
        %v4033 = vunpack.c.l.b16 %v3841
        %v4034 = vunpack.c.l.b16 %v3842
        %v4035 = vunpack.c.l.b16 %v3843
        %v4036 = vunpack.c.l.b16 %v3844
        %v4037 = vunpack.c.l.b16 %v3845
        %v4038 = vunpack.c.l.b16 %v3846
        %v4039 = vunpack.c.l.b16 %v3847
        %v4040 = vunpack.c.l.b16 %v3848
        %v4041 = vunpack.c.l.b16 %v3849
        %v4042 = vunpack.c.l.b16 %v3850
        %v4043 = vunpack.c.l.b16 %v3851
        %v4044 = vunpack.c.l.b16 %v3852
        %v4045 = vunpack.c.l.b16 %v3853
        %v4046 = vunpack.c.l.b16 %v3854
        %v4047 = vunpack.c.l.b16 %v3855
        %v4048 = vunpack.c.l.b16 %v3856
        %v4049 = vunpack.c.l.b16 %v3857
        %v4050 = vunpack.c.l.b16 %v3858
        %v4051 = vunpack.c.l.b16 %v3859
        %v4052 = vunpack.c.l.b16 %v3860
        %v4053 = vunpack.c.l.b16 %v3861
        %v4054 = vunpack.c.l.b16 %v3862
        %v4055 = vunpack.c.l.b16 %v3863
        %v4056 = vunpack.c.l.b16 %v3864
        %v4057 = vunpack.c.l.b16 %v3865
        %v4058 = vunpack.c.l.b16 %v3866
        %v4059 = vpack.c.b16 %v3996, %v3995
        %v4060 = vpack.c.b16 %v3998, %v3997
        %v4061 = vpack.c.b16 %v4000, %v3999
        %v4062 = vpack.c.b16 %v4002, %v4001
        %v4063 = vpack.c.b16 %v4004, %v4003
        %v4064 = vpack.c.b16 %v4006, %v4005
        %v4065 = vpack.c.b16 %v4008, %v4007
        %v4066 = vpack.c.b16 %v4010, %v4009
        %v4067 = vpack.c.b16 %v4012, %v4011
        %v4068 = vpack.c.b16 %v4014, %v4013
        %v4069 = vpack.c.b16 %v4016, %v4015
        %v4070 = vpack.c.b16 %v4018, %v4017
        %v4071 = vpack.c.b16 %v4020, %v4019
        %v4072 = vpack.c.b16 %v4022, %v4021
        %v4073 = vpack.c.b16 %v4024, %v4023
        %v4074 = vpack.c.b16 %v4026, %v4025
        %v4075 = vpack.c.b16 %v4028, %v4027
        %v4076 = vpack.c.b16 %v4030, %v4029
        %v4077 = vpack.c.b16 %v4032, %v4031
        %v4078 = vpack.c.b16 %v4034, %v4033
        %v4079 = vpack.c.b16 %v4036, %v4035
        %v4080 = vpack.c.b16 %v4038, %v4037
        %v4081 = vpack.c.b16 %v4040, %v4039
        %v4082 = vpack.c.b16 %v4042, %v4041
        %v4083 = vpack.c.b16 %v4044, %v4043
        %v4084 = vpack.c.b16 %v4046, %v4045
        %v4085 = vpack.c.b16 %v4048, %v4047
        %v4086 = vpack.c.b16 %v4050, %v4049
        %v4087 = vpack.c.b16 %v4052, %v4051
        %v4088 = vpack.c.b16 %v4054, %v4053
        %v4089 = vpack.c.b16 %v4056, %v4055
        %v4090 = vpack.c.b16 %v4058, %v4057
        %v4092 = vsel %vm1112, %v4059, 0
        %v4095 = vsel %vm1112, %v4060, 0
        %v4098 = vsel %vm1112, %v4061, 0
        %v4101 = vsel %vm1112, %v4062, 0
        %v4104 = vsel %vm1112, %v4063, 0
        %v4107 = vsel %vm1112, %v4064, 0
        %v4110 = vsel %vm1112, %v4065, 0
        %v4113 = vsel %vm1112, %v4066, 0
        %v4116 = vsel %vm1112, %v4067, 0
        %v4119 = vsel %vm1112, %v4068, 0
        %v4122 = vsel %vm1112, %v4069, 0
        %v4125 = vsel %vm1112, %v4070, 0
        %v4128 = vsel %vm1112, %v4071, 0
        %v4131 = vsel %vm1112, %v4072, 0
        %v4134 = vsel %vm1112, %v4073, 0
        %v4137 = vsel %vm1112, %v4074, 0
        %v4140 = vsel %vm1112, %v4075, 0
        %v4143 = vsel %vm1112, %v4076, 0
        %v4146 = vsel %vm1112, %v4077, 0
        %v4149 = vsel %vm1112, %v4078, 0
        %v4152 = vsel %vm1112, %v4079, 0
        %v4155 = vsel %vm1112, %v4080, 0
        %v4158 = vsel %vm1112, %v4081, 0
        %v4161 = vsel %vm1112, %v4082, 0
        %v4164 = vsel %vm1112, %v4083, 0
        %v4167 = vsel %vm1112, %v4084, 0
        %v4170 = vsel %vm1112, %v4085, 0
        %v4173 = vsel %vm1112, %v4086, 0
        %v4176 = vsel %vm1112, %v4087, 0
        %v4179 = vsel %vm1112, %v4088, 0
        %v4182 = vsel %vm1112, %v4089, 0
        %v4185 = vsel %vm1112, %v4090, 0
        %4187 = vmatprep.subr.bf16.mxu0 0
        %4188 = vmatpush1.bf16.msra.mxu0 %v3799
        %4189 = vmatprep.subr.bf16.mxu0 0
        %4190 = vmatpush1.bf16.msra.mxu0 %v3800
        %4191 = vmatprep.subr.bf16.mxu0 0
        %4192 = vmatpush1.bf16.msra.mxu0 %v3801
        %4193 = vmatprep.subr.bf16.mxu0 0
        %4194 = vmatpush1.bf16.msra.mxu0 %v3802
        %4195 = vmatprep.subr.bf16.mxu0 0
        %4196 = vmatpush1.bf16.msra.mxu0 0
        %4197 = vmatprep.subr.bf16.mxu0 0
        %4198 = vmatpush1.bf16.msra.mxu0 0
        %4199 = vmatprep.subr.bf16.mxu0 0
        %4200 = vmatpush1.bf16.msra.mxu0 0
        %4201 = vmatprep.subr.bf16.mxu0 0
        %4202 = vmatpush1.bf16.msra.mxu0 0
        %4203 = vmatprep.subr.bf16.mxu0 0
        %4204 = vmatpush1.bf16.msra.mxu0 0
        %4205 = vmatprep.subr.bf16.mxu0 0
        %4206 = vmatpush1.bf16.msra.mxu0 0
        %4207 = vmatprep.subr.bf16.mxu0 0
        %4208 = vmatpush1.bf16.msra.mxu0 0
        %4209 = vmatprep.subr.bf16.mxu0 0
        %4210 = vmatpush1.bf16.msra.mxu0 0
        %4211 = vmatprep.subr.bf16.mxu0 0
        %4212 = vmatpush1.bf16.msra.mxu0 0
        %4213 = vmatprep.subr.bf16.mxu0 0
        %4214 = vmatpush1.bf16.msra.mxu0 0
        %4215 = vmatprep.subr.bf16.mxu0 0
        %4216 = vmatpush1.bf16.msra.mxu0 0
        %4217 = vmatprep.subr.bf16.mxu0 0
        %4218 = vmatpush1.bf16.msra.mxu0 0
        %4219 = vmatprep.mubr.bf16.mxu0 0
        %4220 = vmatmul.mubr.bf16.gmra.mrb[0].mxu0 %v4092
        %v4221 = vpop.f32.mrb[0].mxu0
        %v4222 = vadd.f32 %v3867, %v4221
        %v4223 = vpop.f32.mrb[0].mxu0
        %v4224 = vpop.f32.mrb[0].mxu0
        %v4225 = vadd.f32 %v3868, %v4224
        %v4226 = vpop.f32.mrb[0].mxu0
        %4227 = vmatprep.mubr.bf16.mxu0 0
        %4228 = vmatmul.mubr.bf16.gmra.mrb[0].mxu0 %v4095
        %v4229 = vpop.f32.mrb[0].mxu0
        %v4230 = vadd.f32 %v3869, %v4229
        %v4231 = vpop.f32.mrb[0].mxu0
        %v4232 = vpop.f32.mrb[0].mxu0
        %v4233 = vadd.f32 %v3870, %v4232
        %v4234 = vpop.f32.mrb[0].mxu0
        %4235 = vmatprep.mubr.bf16.mxu0 0
        %4236 = vmatmul.mubr.bf16.gmra.mrb[0].mxu0 %v4098
        %v4237 = vpop.f32.mrb[0].mxu0
        %v4238 = vadd.f32 %v3871, %v4237
        %v4239 = vpop.f32.mrb[0].mxu0
        %v4240 = vpop.f32.mrb[0].mxu0
        %v4241 = vadd.f32 %v3872, %v4240
        %v4242 = vpop.f32.mrb[0].mxu0
        %4243 = vmatprep.mubr.bf16.mxu0 0
        %4244 = vmatmul.mubr.bf16.gmra.mrb[0].mxu0 %v4101
        %v4245 = vpop.f32.mrb[0].mxu0
        %v4246 = vadd.f32 %v3873, %v4245
        %v4247 = vpop.f32.mrb[0].mxu0
        %v4248 = vpop.f32.mrb[0].mxu0
        %v4249 = vadd.f32 %v3874, %v4248
        %v4250 = vpop.f32.mrb[0].mxu0
        %4251 = vmatprep.mubr.bf16.mxu0 0
        %4252 = vmatmul.mubr.bf16.gmra.mrb[0].mxu0 %v4104
        %v4253 = vpop.f32.mrb[0].mxu0
        %v4254 = vadd.f32 %v3875, %v4253
        %v4255 = vpop.f32.mrb[0].mxu0
        %v4256 = vpop.f32.mrb[0].mxu0
        %v4257 = vadd.f32 %v3876, %v4256
        %v4258 = vpop.f32.mrb[0].mxu0
        %4259 = vmatprep.mubr.bf16.mxu0 0
        %4260 = vmatmul.mubr.bf16.gmra.mrb[0].mxu0 %v4107
        %v4261 = vpop.f32.mrb[0].mxu0
        %v4262 = vadd.f32 %v3877, %v4261
        %v4263 = vpop.f32.mrb[0].mxu0
        %v4264 = vpop.f32.mrb[0].mxu0
        %v4265 = vadd.f32 %v3878, %v4264
        %v4266 = vpop.f32.mrb[0].mxu0
        %4267 = vmatprep.mubr.bf16.mxu0 0
        %4268 = vmatmul.mubr.bf16.gmra.mrb[0].mxu0 %v4110
        %v4269 = vpop.f32.mrb[0].mxu0
        %v4270 = vadd.f32 %v3879, %v4269
        %v4271 = vpop.f32.mrb[0].mxu0
        %v4272 = vpop.f32.mrb[0].mxu0
        %v4273 = vadd.f32 %v3880, %v4272
        %v4274 = vpop.f32.mrb[0].mxu0
        %4275 = vmatprep.mubr.bf16.mxu0 0
        %4276 = vmatmul.mubr.bf16.gmra.mrb[0].mxu0 %v4113
        %v4277 = vpop.f32.mrb[0].mxu0
        %v4278 = vadd.f32 %v3881, %v4277
        %v4279 = vpop.f32.mrb[0].mxu0
        %v4280 = vpop.f32.mrb[0].mxu0
        %v4281 = vadd.f32 %v3882, %v4280
        %v4282 = vpop.f32.mrb[0].mxu0
        %4283 = vmatprep.mubr.bf16.mxu0 0
        %4284 = vmatmul.mubr.bf16.gmra.mrb[0].mxu0 %v4116
        %v4285 = vpop.f32.mrb[0].mxu0
        %v4286 = vadd.f32 %v3883, %v4285
        %v4287 = vpop.f32.mrb[0].mxu0
        %v4288 = vpop.f32.mrb[0].mxu0
        %v4289 = vadd.f32 %v3884, %v4288
        %v4290 = vpop.f32.mrb[0].mxu0
        %4291 = vmatprep.mubr.bf16.mxu0 0
        %4292 = vmatmul.mubr.bf16.gmra.mrb[0].mxu0 %v4119
        %v4293 = vpop.f32.mrb[0].mxu0
        %v4294 = vadd.f32 %v3885, %v4293
        %v4295 = vpop.f32.mrb[0].mxu0
        %v4296 = vpop.f32.mrb[0].mxu0
        %v4297 = vadd.f32 %v3886, %v4296
        %v4298 = vpop.f32.mrb[0].mxu0
        %4299 = vmatprep.mubr.bf16.mxu0 0
        %4300 = vmatmul.mubr.bf16.gmra.mrb[0].mxu0 %v4122
        %v4301 = vpop.f32.mrb[0].mxu0
        %v4302 = vadd.f32 %v3887, %v4301
        %v4303 = vpop.f32.mrb[0].mxu0
        %v4304 = vpop.f32.mrb[0].mxu0
        %v4305 = vadd.f32 %v3888, %v4304
        %v4306 = vpop.f32.mrb[0].mxu0
        %4307 = vmatprep.mubr.bf16.mxu0 0
        %4308 = vmatmul.mubr.bf16.gmra.mrb[0].mxu0 %v4125
        %v4309 = vpop.f32.mrb[0].mxu0
        %v4310 = vadd.f32 %v3889, %v4309
        %v4311 = vpop.f32.mrb[0].mxu0
        %v4312 = vpop.f32.mrb[0].mxu0
        %v4313 = vadd.f32 %v3890, %v4312
        %v4314 = vpop.f32.mrb[0].mxu0
        %4315 = vmatprep.mubr.bf16.mxu0 0
        %4316 = vmatmul.mubr.bf16.gmra.mrb[0].mxu0 %v4128
        %v4317 = vpop.f32.mrb[0].mxu0
        %v4318 = vadd.f32 %v3891, %v4317
        %v4319 = vpop.f32.mrb[0].mxu0
        %v4320 = vpop.f32.mrb[0].mxu0
        %v4321 = vadd.f32 %v3892, %v4320
        %v4322 = vpop.f32.mrb[0].mxu0
        %4323 = vmatprep.mubr.bf16.mxu0 0
        %4324 = vmatmul.mubr.bf16.gmra.mrb[0].mxu0 %v4131
        %v4325 = vpop.f32.mrb[0].mxu0
        %v4326 = vadd.f32 %v3893, %v4325
        %v4327 = vpop.f32.mrb[0].mxu0
        %v4328 = vpop.f32.mrb[0].mxu0
        %v4329 = vadd.f32 %v3894, %v4328
        %v4330 = vpop.f32.mrb[0].mxu0
        %4331 = vmatprep.mubr.bf16.mxu0 0
        %4332 = vmatmul.mubr.bf16.gmra.mrb[0].mxu0 %v4134
        %v4333 = vpop.f32.mrb[0].mxu0
        %v4334 = vadd.f32 %v3895, %v4333
        %v4335 = vpop.f32.mrb[0].mxu0
        %v4336 = vpop.f32.mrb[0].mxu0
        %v4337 = vadd.f32 %v3896, %v4336
        %v4338 = vpop.f32.mrb[0].mxu0
        %4339 = vmatprep.mubr.bf16.mxu0 0
        %4340 = vmatmul.mubr.bf16.gmra.mrb[0].mxu0 %v4137
        %v4341 = vpop.f32.mrb[0].mxu0
        %v4342 = vadd.f32 %v3897, %v4341
        %v4343 = vpop.f32.mrb[0].mxu0
        %v4344 = vpop.f32.mrb[0].mxu0
        %v4345 = vadd.f32 %v3898, %v4344
        %v4346 = vpop.f32.mrb[0].mxu0
        %4347 = vmatprep.mubr.bf16.mxu0 0
        %4348 = vmatmul.mubr.bf16.gmra.mrb[0].mxu0 %v4140
        %v4349 = vpop.f32.mrb[0].mxu0
        %v4350 = vadd.f32 %v3899, %v4349
        %v4351 = vpop.f32.mrb[0].mxu0
        %v4352 = vpop.f32.mrb[0].mxu0
        %v4353 = vadd.f32 %v3900, %v4352
        %v4354 = vpop.f32.mrb[0].mxu0
        %4355 = vmatprep.mubr.bf16.mxu0 0
        %4356 = vmatmul.mubr.bf16.gmra.mrb[0].mxu0 %v4143
        %v4357 = vpop.f32.mrb[0].mxu0
        %v4358 = vadd.f32 %v3901, %v4357
        %v4359 = vpop.f32.mrb[0].mxu0
        %v4360 = vpop.f32.mrb[0].mxu0
        %v4361 = vadd.f32 %v3902, %v4360
        %v4362 = vpop.f32.mrb[0].mxu0
        %4363 = vmatprep.mubr.bf16.mxu0 0
        %4364 = vmatmul.mubr.bf16.gmra.mrb[0].mxu0 %v4146
        %v4365 = vpop.f32.mrb[0].mxu0
        %v4366 = vadd.f32 %v3903, %v4365
        %v4367 = vpop.f32.mrb[0].mxu0
        %v4368 = vpop.f32.mrb[0].mxu0
        %v4369 = vadd.f32 %v3904, %v4368
        %v4370 = vpop.f32.mrb[0].mxu0
        %4371 = vmatprep.mubr.bf16.mxu0 0
        %4372 = vmatmul.mubr.bf16.gmra.mrb[0].mxu0 %v4149
        %v4373 = vpop.f32.mrb[0].mxu0
        %v4374 = vadd.f32 %v3905, %v4373
        %v4375 = vpop.f32.mrb[0].mxu0
        %v4376 = vpop.f32.mrb[0].mxu0
        %v4377 = vadd.f32 %v3906, %v4376
        %v4378 = vpop.f32.mrb[0].mxu0
        %4379 = vmatprep.mubr.bf16.mxu0 0
        %4380 = vmatmul.mubr.bf16.gmra.mrb[0].mxu0 %v4152
        %v4381 = vpop.f32.mrb[0].mxu0
        %v4382 = vadd.f32 %v3907, %v4381
        %v4383 = vpop.f32.mrb[0].mxu0
        %v4384 = vpop.f32.mrb[0].mxu0
        %v4385 = vadd.f32 %v3908, %v4384
        %v4386 = vpop.f32.mrb[0].mxu0
        %4387 = vmatprep.mubr.bf16.mxu0 0
        %4388 = vmatmul.mubr.bf16.gmra.mrb[0].mxu0 %v4155
        %v4389 = vpop.f32.mrb[0].mxu0
        %v4390 = vadd.f32 %v3909, %v4389
        %v4391 = vpop.f32.mrb[0].mxu0
        %v4392 = vpop.f32.mrb[0].mxu0
        %v4393 = vadd.f32 %v3910, %v4392
        %v4394 = vpop.f32.mrb[0].mxu0
        %4395 = vmatprep.mubr.bf16.mxu0 0
        %4396 = vmatmul.mubr.bf16.gmra.mrb[0].mxu0 %v4158
        %v4397 = vpop.f32.mrb[0].mxu0
        %v4398 = vadd.f32 %v3911, %v4397
        %v4399 = vpop.f32.mrb[0].mxu0
        %v4400 = vpop.f32.mrb[0].mxu0
        %v4401 = vadd.f32 %v3912, %v4400
        %v4402 = vpop.f32.mrb[0].mxu0
        %4403 = vmatprep.mubr.bf16.mxu0 0
        %4404 = vmatmul.mubr.bf16.gmra.mrb[0].mxu0 %v4161
        %v4405 = vpop.f32.mrb[0].mxu0
        %v4406 = vadd.f32 %v3913, %v4405
        %v4407 = vpop.f32.mrb[0].mxu0
        %v4408 = vpop.f32.mrb[0].mxu0
        %v4409 = vadd.f32 %v3914, %v4408
        %v4410 = vpop.f32.mrb[0].mxu0
        %4411 = vmatprep.mubr.bf16.mxu0 0
        %4412 = vmatmul.mubr.bf16.gmra.mrb[0].mxu0 %v4164
        %v4413 = vpop.f32.mrb[0].mxu0
        %v4414 = vadd.f32 %v3915, %v4413
        %v4415 = vpop.f32.mrb[0].mxu0
        %v4416 = vpop.f32.mrb[0].mxu0
        %v4417 = vadd.f32 %v3916, %v4416
        %v4418 = vpop.f32.mrb[0].mxu0
        %4419 = vmatprep.mubr.bf16.mxu0 0
        %4420 = vmatmul.mubr.bf16.gmra.mrb[0].mxu0 %v4167
        %v4421 = vpop.f32.mrb[0].mxu0
        %v4422 = vadd.f32 %v3917, %v4421
        %v4423 = vpop.f32.mrb[0].mxu0
        %v4424 = vpop.f32.mrb[0].mxu0
        %v4425 = vadd.f32 %v3918, %v4424
        %v4426 = vpop.f32.mrb[0].mxu0
        %4427 = vmatprep.mubr.bf16.mxu0 0
        %4428 = vmatmul.mubr.bf16.gmra.mrb[0].mxu0 %v4170
        %v4429 = vpop.f32.mrb[0].mxu0
        %v4430 = vadd.f32 %v3919, %v4429
        %v4431 = vpop.f32.mrb[0].mxu0
        %v4432 = vpop.f32.mrb[0].mxu0
        %v4433 = vadd.f32 %v3920, %v4432
        %v4434 = vpop.f32.mrb[0].mxu0
        %4435 = vmatprep.mubr.bf16.mxu0 0
        %4436 = vmatmul.mubr.bf16.gmra.mrb[0].mxu0 %v4173
        %v4437 = vpop.f32.mrb[0].mxu0
        %v4438 = vadd.f32 %v3921, %v4437
        %v4439 = vpop.f32.mrb[0].mxu0
        %v4440 = vpop.f32.mrb[0].mxu0
        %v4441 = vadd.f32 %v3922, %v4440
        %v4442 = vpop.f32.mrb[0].mxu0
        %4443 = vmatprep.mubr.bf16.mxu0 0
        %4444 = vmatmul.mubr.bf16.gmra.mrb[0].mxu0 %v4176
        %v4445 = vpop.f32.mrb[0].mxu0
        %v4446 = vadd.f32 %v3923, %v4445
        %v4447 = vpop.f32.mrb[0].mxu0
        %v4448 = vpop.f32.mrb[0].mxu0
        %v4449 = vadd.f32 %v3924, %v4448
        %v4450 = vpop.f32.mrb[0].mxu0
        %4451 = vmatprep.mubr.bf16.mxu0 0
        %4452 = vmatmul.mubr.bf16.gmra.mrb[0].mxu0 %v4179
        %v4453 = vpop.f32.mrb[0].mxu0
        %v4454 = vadd.f32 %v3925, %v4453
        %v4455 = vpop.f32.mrb[0].mxu0
        %v4456 = vpop.f32.mrb[0].mxu0
        %v4457 = vadd.f32 %v3926, %v4456
        %v4458 = vpop.f32.mrb[0].mxu0
        %4459 = vmatprep.mubr.bf16.mxu0 0
        %4460 = vmatmul.mubr.bf16.gmra.mrb[0].mxu0 %v4182
        %v4461 = vpop.f32.mrb[0].mxu0
        %v4462 = vadd.f32 %v3927, %v4461
        %v4463 = vpop.f32.mrb[0].mxu0
        %v4464 = vpop.f32.mrb[0].mxu0
        %v4465 = vadd.f32 %v3928, %v4464
        %v4466 = vpop.f32.mrb[0].mxu0
        %4467 = vmatprep.mubr.bf16.mxu0 0
        %4468 = vmatmul.mubr.bf16.gmra.mrb[0].mxu0 %v4185
        %v4469 = vpop.f32.mrb[0].mxu0
        %v4470 = vadd.f32 %v3929, %v4469
        %v4471 = vpop.f32.mrb[0].mxu0
        %v4472 = vpop.f32.mrb[0].mxu0
        %v4473 = vadd.f32 %v3930, %v4472
        %v4474 = vpop.f32.mrb[0].mxu0
        %4475 = vdwg.mxu0
        %v4476 = vmax.f32 %v4222, 0.0
        %v4477 = vmax.f32 %v4225, 0.0
        %v4478 = vmax.f32 %v4230, 0.0
        %v4479 = vmax.f32 %v4233, 0.0
        %v4480 = vmax.f32 %v4238, 0.0
        %v4481 = vmax.f32 %v4241, 0.0
        %v4482 = vmax.f32 %v4246, 0.0
        %v4483 = vmax.f32 %v4249, 0.0
        %v4484 = vmax.f32 %v4254, 0.0
        %v4485 = vmax.f32 %v4257, 0.0
        %v4486 = vmax.f32 %v4262, 0.0
        %v4487 = vmax.f32 %v4265, 0.0
        %v4488 = vmax.f32 %v4270, 0.0
        %v4489 = vmax.f32 %v4273, 0.0
        %v4490 = vmax.f32 %v4278, 0.0
        %v4491 = vmax.f32 %v4281, 0.0
        %v4492 = vmax.f32 %v4286, 0.0
        %v4493 = vmax.f32 %v4289, 0.0
        %v4494 = vmax.f32 %v4294, 0.0
        %v4495 = vmax.f32 %v4297, 0.0
        %v4496 = vmax.f32 %v4302, 0.0
        %v4497 = vmax.f32 %v4305, 0.0
        %v4498 = vmax.f32 %v4310, 0.0
        %v4499 = vmax.f32 %v4313, 0.0
        %v4500 = vmax.f32 %v4318, 0.0
        %v4501 = vmax.f32 %v4321, 0.0
        %v4502 = vmax.f32 %v4326, 0.0
        %v4503 = vmax.f32 %v4329, 0.0
        %v4504 = vmax.f32 %v4334, 0.0
        %v4505 = vmax.f32 %v4337, 0.0
        %v4506 = vmax.f32 %v4342, 0.0
        %v4507 = vmax.f32 %v4345, 0.0
        %v4508 = vmax.f32 %v4350, 0.0
        %v4509 = vmax.f32 %v4353, 0.0
        %v4510 = vmax.f32 %v4358, 0.0
        %v4511 = vmax.f32 %v4361, 0.0
        %v4512 = vmax.f32 %v4366, 0.0
        %v4513 = vmax.f32 %v4369, 0.0
        %v4514 = vmax.f32 %v4374, 0.0
        %v4515 = vmax.f32 %v4377, 0.0
        %v4516 = vmax.f32 %v4382, 0.0
        %v4517 = vmax.f32 %v4385, 0.0
        %v4518 = vmax.f32 %v4390, 0.0
        %v4519 = vmax.f32 %v4393, 0.0
        %v4520 = vmax.f32 %v4398, 0.0
        %v4521 = vmax.f32 %v4401, 0.0
        %v4522 = vmax.f32 %v4406, 0.0
        %v4523 = vmax.f32 %v4409, 0.0
        %v4524 = vmax.f32 %v4414, 0.0
        %v4525 = vmax.f32 %v4417, 0.0
        %v4526 = vmax.f32 %v4422, 0.0
        %v4527 = vmax.f32 %v4425, 0.0
        %v4528 = vmax.f32 %v4430, 0.0
        %v4529 = vmax.f32 %v4433, 0.0
        %v4530 = vmax.f32 %v4438, 0.0
        %v4531 = vmax.f32 %v4441, 0.0
        %v4532 = vmax.f32 %v4446, 0.0
        %v4533 = vmax.f32 %v4449, 0.0
        %v4534 = vmax.f32 %v4454, 0.0
        %v4535 = vmax.f32 %v4457, 0.0
        %v4536 = vmax.f32 %v4462, 0.0
        %v4537 = vmax.f32 %v4465, 0.0
        %v4538 = vmax.f32 %v4470, 0.0
        %v4539 = vmax.f32 %v4473, 0.0
        %v4540 = vpack.c.bf16 %v4477, %v4476
        %v4541 = vpack.c.bf16 %v4479, %v4478
        %v4542 = vpack.c.bf16 %v4481, %v4480
        %v4543 = vpack.c.bf16 %v4483, %v4482
        %v4544 = vpack.c.bf16 %v4485, %v4484
        %v4545 = vpack.c.bf16 %v4487, %v4486
        %v4546 = vpack.c.bf16 %v4489, %v4488
        %v4547 = vpack.c.bf16 %v4491, %v4490
        %v4548 = vpack.c.bf16 %v4493, %v4492
        %v4549 = vpack.c.bf16 %v4495, %v4494
        %v4550 = vpack.c.bf16 %v4497, %v4496
        %v4551 = vpack.c.bf16 %v4499, %v4498
        %v4552 = vpack.c.bf16 %v4501, %v4500
        %v4553 = vpack.c.bf16 %v4503, %v4502
        %v4554 = vpack.c.bf16 %v4505, %v4504
        %v4555 = vpack.c.bf16 %v4507, %v4506
        %v4556 = vpack.c.bf16 %v4509, %v4508
        %v4557 = vpack.c.bf16 %v4511, %v4510
        %v4558 = vpack.c.bf16 %v4513, %v4512
        %v4559 = vpack.c.bf16 %v4515, %v4514
        %v4560 = vpack.c.bf16 %v4517, %v4516
        %v4561 = vpack.c.bf16 %v4519, %v4518
        %v4562 = vpack.c.bf16 %v4521, %v4520
        %v4563 = vpack.c.bf16 %v4523, %v4522
        %v4564 = vpack.c.bf16 %v4525, %v4524
        %v4565 = vpack.c.bf16 %v4527, %v4526
        %v4566 = vpack.c.bf16 %v4529, %v4528
        %v4567 = vpack.c.bf16 %v4531, %v4530
        %v4568 = vpack.c.bf16 %v4533, %v4532
        %v4569 = vpack.c.bf16 %v4535, %v4534
        %v4570 = vpack.c.bf16 %v4537, %v4536
        %v4571 = vpack.c.bf16 %v4539, %v4538
        %v4572 = vld [vmem:[%s12] sm:$0xff]
        %v4573 = vld [vmem:[%s12 + $0x8] sm:$0xff]
        %v4574 = vld [vmem:[%s12 + $0x10] sm:$0xff]
        %v4575 = vld [vmem:[%s12 + $0x18] sm:$0xff]
        %v4576 = vld [vmem:[%s12 + $0x20] sm:$0xff]
        %v4577 = vld [vmem:[%s12 + $0x28] sm:$0xff]
        %v4578 = vld [vmem:[%s12 + $0x30] sm:$0xff]
        %v4579 = vld [vmem:[%s12 + $0x38] sm:$0xff]
        %v4580 = vld [vmem:[%s12 + $0x40] sm:$0xff]
        %v4581 = vld [vmem:[%s12 + $0x48] sm:$0xff]
        %v4582 = vld [vmem:[%s12 + $0x50] sm:$0xff]
        %v4583 = vld [vmem:[%s12 + $0x58] sm:$0xff]
        %v4584 = vld [vmem:[%s12 + $0x60] sm:$0xff]
        %v4585 = vld [vmem:[%s12 + $0x68] sm:$0xff]
        %v4586 = vld [vmem:[%s12 + $0x70] sm:$0xff]
        %v4587 = vld [vmem:[%s12 + $0x78] sm:$0xff]
        %v4588 = vld [vmem:[%s12 + $0x80] sm:$0xff]
        %v4589 = vld [vmem:[%s12 + $0x88] sm:$0xff]
        %v4590 = vld [vmem:[%s12 + $0x90] sm:$0xff]
        %v4591 = vld [vmem:[%s12 + $0x98] sm:$0xff]
        %v4592 = vld [vmem:[%s12 + $0xa0] sm:$0xff]
        %v4593 = vld [vmem:[%s12 + $0xa8] sm:$0xff]
        %v4594 = vld [vmem:[%s12 + $0xb0] sm:$0xff]
        %v4595 = vld [vmem:[%s12 + $0xb8] sm:$0xff]
        %v4596 = vld [vmem:[%s12 + $0xc0] sm:$0xff]
        %v4597 = vld [vmem:[%s12 + $0xc8] sm:$0xff]
        %v4598 = vld [vmem:[%s12 + $0xd0] sm:$0xff]
        %v4599 = vld [vmem:[%s12 + $0xd8] sm:$0xff]
        %v4600 = vld [vmem:[%s12 + $0xe0] sm:$0xff]
        %v4601 = vld [vmem:[%s12 + $0xe8] sm:$0xff]
        %v4602 = vld [vmem:[%s12 + $0xf0] sm:$0xff]
        %v4603 = vld [vmem:[%s12 + $0xf8] sm:$0xff]
        %v4604 = vld [vmem:[%s13] sm:$0xff]
        %v4605 = vld [vmem:[%s13 + $0x8] sm:$0xff]
        %v4606 = vld [vmem:[%s13 + $0x10] sm:$0xff]
        %v4607 = vld [vmem:[%s13 + $0x18] sm:$0xff]
        %v4608 = vld [vmem:[%s13 + $0x20] sm:$0xff]
        %v4609 = vld [vmem:[%s13 + $0x28] sm:$0xff]
        %v4610 = vld [vmem:[%s13 + $0x30] sm:$0xff]
        %v4611 = vld [vmem:[%s13 + $0x38] sm:$0xff]
        %v4612 = vld [vmem:[%s13 + $0x40] sm:$0xff]
        %v4613 = vld [vmem:[%s13 + $0x48] sm:$0xff]
        %v4614 = vld [vmem:[%s13 + $0x50] sm:$0xff]
        %v4615 = vld [vmem:[%s13 + $0x58] sm:$0xff]
        %v4616 = vld [vmem:[%s13 + $0x60] sm:$0xff]
        %v4617 = vld [vmem:[%s13 + $0x68] sm:$0xff]
        %v4618 = vld [vmem:[%s13 + $0x70] sm:$0xff]
        %v4619 = vld [vmem:[%s13 + $0x78] sm:$0xff]
        %v4652 = vunpack.c.l.b16 %v4572
        %v4653 = vunpack.c.h.b16 %v4572
        %v4654 = vunpack.c.l.b16 %v4573
        %v4655 = vunpack.c.h.b16 %v4573
        %v4656 = vunpack.c.l.b16 %v4574
        %v4657 = vunpack.c.h.b16 %v4574
        %v4658 = vunpack.c.l.b16 %v4575
        %v4659 = vunpack.c.h.b16 %v4575
        %v4660 = vunpack.c.l.b16 %v4576
        %v4661 = vunpack.c.h.b16 %v4576
        %v4662 = vunpack.c.l.b16 %v4577
        %v4663 = vunpack.c.h.b16 %v4577
        %v4664 = vunpack.c.l.b16 %v4578
        %v4665 = vunpack.c.h.b16 %v4578
        %v4666 = vunpack.c.l.b16 %v4579
        %v4667 = vunpack.c.h.b16 %v4579
        %v4668 = vunpack.c.l.b16 %v4580
        %v4669 = vunpack.c.h.b16 %v4580
        %v4670 = vunpack.c.l.b16 %v4581
        %v4671 = vunpack.c.h.b16 %v4581
        %v4672 = vunpack.c.l.b16 %v4582
        %v4673 = vunpack.c.h.b16 %v4582
        %v4674 = vunpack.c.l.b16 %v4583
        %v4675 = vunpack.c.h.b16 %v4583
        %v4676 = vunpack.c.l.b16 %v4584
        %v4677 = vunpack.c.h.b16 %v4584
        %v4678 = vunpack.c.l.b16 %v4585
        %v4679 = vunpack.c.h.b16 %v4585
        %v4680 = vunpack.c.l.b16 %v4586
        %v4681 = vunpack.c.h.b16 %v4586
        %v4682 = vunpack.c.l.b16 %v4587
        %v4683 = vunpack.c.h.b16 %v4587
        %v4684 = vunpack.c.l.b16 %v4588
        %v4685 = vunpack.c.h.b16 %v4588
        %v4686 = vunpack.c.l.b16 %v4589
        %v4687 = vunpack.c.h.b16 %v4589
        %v4688 = vunpack.c.l.b16 %v4590
        %v4689 = vunpack.c.h.b16 %v4590
        %v4690 = vunpack.c.l.b16 %v4591
        %v4691 = vunpack.c.h.b16 %v4591
        %v4692 = vunpack.c.l.b16 %v4592
        %v4693 = vunpack.c.h.b16 %v4592
        %v4694 = vunpack.c.l.b16 %v4593
        %v4695 = vunpack.c.h.b16 %v4593
        %v4696 = vunpack.c.l.b16 %v4594
        %v4697 = vunpack.c.h.b16 %v4594
        %v4698 = vunpack.c.l.b16 %v4595
        %v4699 = vunpack.c.h.b16 %v4595
        %v4700 = vunpack.c.l.b16 %v4596
        %v4701 = vunpack.c.h.b16 %v4596
        %v4702 = vunpack.c.l.b16 %v4597
        %v4703 = vunpack.c.h.b16 %v4597
        %v4704 = vunpack.c.l.b16 %v4598
        %v4705 = vunpack.c.h.b16 %v4598
        %v4706 = vunpack.c.l.b16 %v4599
        %v4707 = vunpack.c.h.b16 %v4599
        %v4708 = vunpack.c.l.b16 %v4600
        %v4709 = vunpack.c.h.b16 %v4600
        %v4710 = vunpack.c.l.b16 %v4601
        %v4711 = vunpack.c.h.b16 %v4601
        %v4712 = vunpack.c.l.b16 %v4602
        %v4713 = vunpack.c.h.b16 %v4602
        %v4714 = vunpack.c.l.b16 %v4603
        %v4715 = vunpack.c.h.b16 %v4603
        %v4716 = vpack.c.b16 %v4656, %v4652
        %v4717 = vpack.c.b16 %v4657, %v4653
        %v4718 = vpack.c.b16 %v4658, %v4654
        %v4719 = vpack.c.b16 %v4659, %v4655
        %v4720 = vpack.c.b16 %v4664, %v4660
        %v4721 = vpack.c.b16 %v4665, %v4661
        %v4722 = vpack.c.b16 %v4666, %v4662
        %v4723 = vpack.c.b16 %v4667, %v4663
        %v4724 = vpack.c.b16 %v4672, %v4668
        %v4725 = vpack.c.b16 %v4673, %v4669
        %v4726 = vpack.c.b16 %v4674, %v4670
        %v4727 = vpack.c.b16 %v4675, %v4671
        %v4728 = vpack.c.b16 %v4680, %v4676
        %v4729 = vpack.c.b16 %v4681, %v4677
        %v4730 = vpack.c.b16 %v4682, %v4678
        %v4731 = vpack.c.b16 %v4683, %v4679
        %v4732 = vpack.c.b16 %v4688, %v4684
        %v4733 = vpack.c.b16 %v4689, %v4685
        %v4734 = vpack.c.b16 %v4690, %v4686
        %v4735 = vpack.c.b16 %v4691, %v4687
        %v4736 = vpack.c.b16 %v4696, %v4692
        %v4737 = vpack.c.b16 %v4697, %v4693
        %v4738 = vpack.c.b16 %v4698, %v4694
        %v4739 = vpack.c.b16 %v4699, %v4695
        %v4740 = vpack.c.b16 %v4704, %v4700
        %v4741 = vpack.c.b16 %v4705, %v4701
        %v4742 = vpack.c.b16 %v4706, %v4702
        %v4743 = vpack.c.b16 %v4707, %v4703
        %v4744 = vpack.c.b16 %v4712, %v4708
        %v4745 = vpack.c.b16 %v4713, %v4709
        %v4746 = vpack.c.b16 %v4714, %v4710
        %v4747 = vpack.c.b16 %v4715, %v4711
        %4780 = vmatprep.subr.bf16.mxu0 0
        %4781 = vmatpush1.bf16.msra.mxu0 %v4540
        %4782 = vmatprep.subr.bf16.mxu0 0
        %4783 = vmatpush1.bf16.msra.mxu0 %v4541
        %4784 = vmatprep.subr.bf16.mxu0 0
        %4785 = vmatpush1.bf16.msra.mxu0 %v4542
        %4786 = vmatprep.subr.bf16.mxu0 0
        %4787 = vmatpush1.bf16.msra.mxu0 %v4543
        %4788 = vmatprep.subr.bf16.mxu0 0
        %4789 = vmatpush1.bf16.msra.mxu0 %v4544
        %4790 = vmatprep.subr.bf16.mxu0 0
        %4791 = vmatpush1.bf16.msra.mxu0 %v4545
        %4792 = vmatprep.subr.bf16.mxu0 0
        %4793 = vmatpush1.bf16.msra.mxu0 %v4546
        %4794 = vmatprep.subr.bf16.mxu0 0
        %4795 = vmatpush1.bf16.msra.mxu0 %v4547
        %4796 = vmatprep.subr.bf16.mxu0 0
        %4797 = vmatpush1.bf16.msra.mxu0 %v4548
        %4798 = vmatprep.subr.bf16.mxu0 0
        %4799 = vmatpush1.bf16.msra.mxu0 %v4549
        %4800 = vmatprep.subr.bf16.mxu0 0
        %4801 = vmatpush1.bf16.msra.mxu0 %v4550
        %4802 = vmatprep.subr.bf16.mxu0 0
        %4803 = vmatpush1.bf16.msra.mxu0 %v4551
        %4804 = vmatprep.subr.bf16.mxu0 0
        %4805 = vmatpush1.bf16.msra.mxu0 %v4552
        %4806 = vmatprep.subr.bf16.mxu0 0
        %4807 = vmatpush1.bf16.msra.mxu0 %v4553
        %4808 = vmatprep.subr.bf16.mxu0 0
        %4809 = vmatpush1.bf16.msra.mxu0 %v4554
        %4810 = vmatprep.subr.bf16.mxu0 0
        %4811 = vmatpush1.bf16.msra.mxu0 %v4555
        %4812 = vmatprep.mubr.bf16.mxu0 %v4717
        %4813 = vmatmul.mubr.bf16.gmra.mrb[0].mxu0 %v4716
        %v4814 = vpop.f32.mrb[0].mxu0
        %v4815 = vadd.f32 %v4604, %v4814
        %v4816 = vpop.f32.mrb[0].mxu0
        %v4817 = vpop.f32.mrb[0].mxu0
        %v4818 = vadd.f32 %v4605, %v4817
        %v4819 = vpop.f32.mrb[0].mxu0
        %4820 = vmatprep.mubr.bf16.mxu0 %v4721
        %4821 = vmatmul.mubr.bf16.gmra.mrb[0].mxu0 %v4720
        %v4822 = vpop.f32.mrb[0].mxu0
        %v4823 = vadd.f32 %v4606, %v4822
        %v4824 = vpop.f32.mrb[0].mxu0
        %v4825 = vpop.f32.mrb[0].mxu0
        %v4826 = vadd.f32 %v4607, %v4825
        %v4827 = vpop.f32.mrb[0].mxu0
        %4828 = vmatprep.mubr.bf16.mxu0 %v4725
        %4829 = vmatmul.mubr.bf16.gmra.mrb[0].mxu0 %v4724
        %v4830 = vpop.f32.mrb[0].mxu0
        %v4831 = vadd.f32 %v4608, %v4830
        %v4832 = vpop.f32.mrb[0].mxu0
        %v4833 = vpop.f32.mrb[0].mxu0
        %v4834 = vadd.f32 %v4609, %v4833
        %v4835 = vpop.f32.mrb[0].mxu0
        %4836 = vmatprep.mubr.bf16.mxu0 %v4729
        %4837 = vmatmul.mubr.bf16.gmra.mrb[0].mxu0 %v4728
        %v4838 = vpop.f32.mrb[0].mxu0
        %v4839 = vadd.f32 %v4610, %v4838
        %v4840 = vpop.f32.mrb[0].mxu0
        %v4841 = vpop.f32.mrb[0].mxu0
        %v4842 = vadd.f32 %v4611, %v4841
        %v4843 = vpop.f32.mrb[0].mxu0
        %4844 = vmatprep.mubr.bf16.mxu0 %v4733
        %4845 = vmatmul.mubr.bf16.gmra.mrb[0].mxu0 %v4732
        %v4846 = vpop.f32.mrb[0].mxu0
        %v4847 = vadd.f32 %v4612, %v4846
        %v4848 = vpop.f32.mrb[0].mxu0
        %v4849 = vpop.f32.mrb[0].mxu0
        %v4850 = vadd.f32 %v4613, %v4849
        %v4851 = vpop.f32.mrb[0].mxu0
        %4852 = vmatprep.mubr.bf16.mxu0 %v4737
        %4853 = vmatmul.mubr.bf16.gmra.mrb[0].mxu0 %v4736
        %v4854 = vpop.f32.mrb[0].mxu0
        %v4855 = vadd.f32 %v4614, %v4854
        %v4856 = vpop.f32.mrb[0].mxu0
        %v4857 = vpop.f32.mrb[0].mxu0
        %v4858 = vadd.f32 %v4615, %v4857
        %v4859 = vpop.f32.mrb[0].mxu0
        %4860 = vmatprep.mubr.bf16.mxu0 %v4741
        %4861 = vmatmul.mubr.bf16.gmra.mrb[0].mxu0 %v4740
        %v4862 = vpop.f32.mrb[0].mxu0
        %v4863 = vadd.f32 %v4616, %v4862
        %v4864 = vpop.f32.mrb[0].mxu0
        %v4865 = vpop.f32.mrb[0].mxu0
        %v4866 = vadd.f32 %v4617, %v4865
        %v4867 = vpop.f32.mrb[0].mxu0
        %4868 = vmatprep.mubr.bf16.mxu0 %v4745
        %4869 = vmatmul.mubr.bf16.gmra.mrb[0].mxu0 %v4744
        %v4870 = vpop.f32.mrb[0].mxu0
        %v4871 = vadd.f32 %v4618, %v4870
        %v4872 = vpop.f32.mrb[0].mxu0
        %v4873 = vpop.f32.mrb[0].mxu0
        %v4874 = vadd.f32 %v4619, %v4873
        %v4875 = vpop.f32.mrb[0].mxu0
        %4876 = vdwg.mxu0
        %4877 = vmatprep.subr.bf16.mxu0 0
        %4878 = vmatpush1.bf16.msra.mxu0 %v4556
        %4879 = vmatprep.subr.bf16.mxu0 0
        %4880 = vmatpush1.bf16.msra.mxu0 %v4557
        %4881 = vmatprep.subr.bf16.mxu0 0
        %4882 = vmatpush1.bf16.msra.mxu0 %v4558
        %4883 = vmatprep.subr.bf16.mxu0 0
        %4884 = vmatpush1.bf16.msra.mxu0 %v4559
        %4885 = vmatprep.subr.bf16.mxu0 0
        %4886 = vmatpush1.bf16.msra.mxu0 %v4560
        %4887 = vmatprep.subr.bf16.mxu0 0
        %4888 = vmatpush1.bf16.msra.mxu0 %v4561
        %4889 = vmatprep.subr.bf16.mxu0 0
        %4890 = vmatpush1.bf16.msra.mxu0 %v4562
        %4891 = vmatprep.subr.bf16.mxu0 0
        %4892 = vmatpush1.bf16.msra.mxu0 %v4563
        %4893 = vmatprep.subr.bf16.mxu0 0
        %4894 = vmatpush1.bf16.msra.mxu0 %v4564
        %4895 = vmatprep.subr.bf16.mxu0 0
        %4896 = vmatpush1.bf16.msra.mxu0 %v4565
        %4897 = vmatprep.subr.bf16.mxu0 0
        %4898 = vmatpush1.bf16.msra.mxu0 %v4566
        %4899 = vmatprep.subr.bf16.mxu0 0
        %4900 = vmatpush1.bf16.msra.mxu0 %v4567
        %4901 = vmatprep.subr.bf16.mxu0 0
        %4902 = vmatpush1.bf16.msra.mxu0 %v4568
        %4903 = vmatprep.subr.bf16.mxu0 0
        %4904 = vmatpush1.bf16.msra.mxu0 %v4569
        %4905 = vmatprep.subr.bf16.mxu0 0
        %4906 = vmatpush1.bf16.msra.mxu0 %v4570
        %4907 = vmatprep.subr.bf16.mxu0 0
        %4908 = vmatpush1.bf16.msra.mxu0 %v4571
        %4909 = vmatprep.mubr.bf16.mxu0 %v4719
        %4910 = vmatmul.mubr.bf16.gmra.mrb[0].mxu0 %v4718
        %v4911 = vpop.f32.mrb[0].mxu0
        %v4912 = vadd.f32 %v4815, %v4911
        %v4913 = vpop.f32.mrb[0].mxu0
        %v4914 = vpop.f32.mrb[0].mxu0
        %v4915 = vadd.f32 %v4818, %v4914
        %v4916 = vpop.f32.mrb[0].mxu0
        %4917 = vmatprep.mubr.bf16.mxu0 %v4723
        %4918 = vmatmul.mubr.bf16.gmra.mrb[0].mxu0 %v4722
        %v4919 = vpop.f32.mrb[0].mxu0
        %v4920 = vadd.f32 %v4823, %v4919
        %v4921 = vpop.f32.mrb[0].mxu0
        %v4922 = vpop.f32.mrb[0].mxu0
        %v4923 = vadd.f32 %v4826, %v4922
        %v4924 = vpop.f32.mrb[0].mxu0
        %4925 = vmatprep.mubr.bf16.mxu0 %v4727
        %4926 = vmatmul.mubr.bf16.gmra.mrb[0].mxu0 %v4726
        %v4927 = vpop.f32.mrb[0].mxu0
        %v4928 = vadd.f32 %v4831, %v4927
        %v4929 = vpop.f32.mrb[0].mxu0
        %v4930 = vpop.f32.mrb[0].mxu0
        %v4931 = vadd.f32 %v4834, %v4930
        %v4932 = vpop.f32.mrb[0].mxu0
        %4933 = vmatprep.mubr.bf16.mxu0 %v4731
        %4934 = vmatmul.mubr.bf16.gmra.mrb[0].mxu0 %v4730
        %v4935 = vpop.f32.mrb[0].mxu0
        %v4936 = vadd.f32 %v4839, %v4935
        %v4937 = vpop.f32.mrb[0].mxu0
        %v4938 = vpop.f32.mrb[0].mxu0
        %v4939 = vadd.f32 %v4842, %v4938
        %v4940 = vpop.f32.mrb[0].mxu0
        %4941 = vmatprep.mubr.bf16.mxu0 %v4735
        %4942 = vmatmul.mubr.bf16.gmra.mrb[0].mxu0 %v4734
        %v4943 = vpop.f32.mrb[0].mxu0
        %v4944 = vadd.f32 %v4847, %v4943
        %v4945 = vpop.f32.mrb[0].mxu0
        %v4946 = vpop.f32.mrb[0].mxu0
        %v4947 = vadd.f32 %v4850, %v4946
        %v4948 = vpop.f32.mrb[0].mxu0
        %4949 = vmatprep.mubr.bf16.mxu0 %v4739
        %4950 = vmatmul.mubr.bf16.gmra.mrb[0].mxu0 %v4738
        %v4951 = vpop.f32.mrb[0].mxu0
        %v4952 = vadd.f32 %v4855, %v4951
        %v4953 = vpop.f32.mrb[0].mxu0
        %v4954 = vpop.f32.mrb[0].mxu0
        %v4955 = vadd.f32 %v4858, %v4954
        %v4956 = vpop.f32.mrb[0].mxu0
        %4957 = vmatprep.mubr.bf16.mxu0 %v4743
        %4958 = vmatmul.mubr.bf16.gmra.mrb[0].mxu0 %v4742
        %v4959 = vpop.f32.mrb[0].mxu0
        %v4960 = vadd.f32 %v4863, %v4959
        %v4961 = vpop.f32.mrb[0].mxu0
        %v4962 = vpop.f32.mrb[0].mxu0
        %v4963 = vadd.f32 %v4866, %v4962
        %v4964 = vpop.f32.mrb[0].mxu0
        %4965 = vmatprep.mubr.bf16.mxu0 %v4747
        %4966 = vmatmul.mubr.bf16.gmra.mrb[0].mxu0 %v4746
        %v4967 = vpop.f32.mrb[0].mxu0
        %v4968 = vadd.f32 %v4871, %v4967
        %v4969 = vpop.f32.mrb[0].mxu0
        %v4970 = vpop.f32.mrb[0].mxu0
        %v4971 = vadd.f32 %v4874, %v4970
        %v4972 = vpop.f32.mrb[0].mxu0
        %4973 = vdwg.mxu0
        %4974 = vxpose.xlu0.b32.start [1/16] %v4912, 128
        %4975 = vxpose.xlu0.b32.cont [2/16] %v4915, 128
        %4976 = vxpose.xlu0.b32.cont [3/16] %v4920, 128
        %4977 = vxpose.xlu0.b32.cont [4/16] %v4923, 128
        %4978 = vxpose.xlu0.b32.cont [5/16] %v4928, 128
        %4979 = vxpose.xlu0.b32.cont [6/16] %v4931, 128
        %4980 = vxpose.xlu0.b32.cont [7/16] %v4936, 128
        %4981 = vxpose.xlu0.b32.cont [8/16] %v4939, 128
        %4982 = vxpose.xlu0.b32.cont [9/16] %v4944, 128
        %4983 = vxpose.xlu0.b32.cont [10/16] %v4947, 128
        %4984 = vxpose.xlu0.b32.cont [11/16] %v4952, 128
        %4985 = vxpose.xlu0.b32.cont [12/16] %v4955, 128
        %4986 = vxpose.xlu0.b32.cont [13/16] %v4960, 128
        %4987 = vxpose.xlu0.b32.cont [14/16] %v4963, 128
        %4988 = vxpose.xlu0.b32.cont [15/16] %v4968, 128
        %4989 = vxpose.xlu0.b32.end [16/16] %v4971, 128
        %v4990 = vpop.trf.xlu0
        %v4991 = vpop.trf.xlu0
        %v4992 = vpop.trf.xlu0
        %v4993 = vpop.trf.xlu0
        %v4994 = vpop.trf.xlu0
        %v4995 = vpop.trf.xlu0
        %v4996 = vpop.trf.xlu0
        %v4997 = vpop.trf.xlu0
        %v4998 = vpop.trf.xlu0
        %v4999 = vpop.trf.xlu0
        %v5000 = vpop.trf.xlu0
        %v5001 = vpop.trf.xlu0
        %v5002 = vpop.trf.xlu0
        %v5003 = vpop.trf.xlu0
        %v5004 = vpop.trf.xlu0
        %v5005 = vpop.trf.xlu0
        %v5006 = vsel %vm551, %v4990, -inf
        %5007 = vmax.xlane.f32.xlu0 %v5006
        %v5008 = vpop.xlane.xlu0 %5007
        %v5009 = vsub.f32 %v4990, %v5008
        %v5010 = vmul.f32 %v5009, 1.442695
        %v5011 = vpow.pop %v5010
        %v5012 = vsel %vm551, %v5011, 0.0
        %5013 = vadd.xlane.f32.xlu0 %v5012
        %v5014 = vpop.xlane.xlu0 %5013
        %v5015 = vrcp.pop %v5014
        %v5016 = vmul.f32 %v5011, %v5015
        %5017 = vst [vmem:[%s459] sm:$0x1] %v5016
        %s5018 = sand.u32 %s335, 1
        %s5019 = scalar_lea.sflag [#allocation3], %s5018
        %s5020 = sand.u32 %s335, 1
        %s5021 = scalar_lea.vmem [#allocation2], %s5020
        // Predicated region
        $region77: #{actor_forward.1} parent=75 // pred_check
          %p5022 = pneg %p345
        $region78: #{actor_forward.1} parent=75 // pred_check_branch
          %5024 = sbr.rel (%p5022) target = $region80
        $region79: #{actor_forward.1} parent=75 // pred_region
          %s5026 = ssub.s32 16, 16
          %5027 = vsyncadd %s5019, %s5026
          %s5028 = smul.addr %s28, 16
          %s5029 = scalar_lea.hbm %s14, %s5028
          %s5031 = sshll.u32 %s5021, 4
          %s5032 = int_to_ptr.vmem [resolvable:$true] %s5031
          %5034 = dma.vmem_to_hbm [thread:$0]  %s5032, 16, %s5029, %s5019
        $region80: #{actor_forward.1} parent=75 // pred_fallthru
          _
      $region76: #{actor_forward.1} parent=5 // pred_fallthru
        _
      %p5035 = scmp.le.s32.totalorder 2, %s23
      // Predicated region
      $region81: #{actor_forward.1} parent=5 // pred_check
        %p5036 = pneg %p5035
      $region82: #{actor_forward.1} parent=5 // pred_check_branch
        %5038 = sbr.rel (%p5036) target = $region84
      $region83: #{actor_forward.1} parent=5 // pred_region
        %s5039 = ssub.s32 %s23, 2
        // Predicated region
        $region85: #{actor_forward.1} parent=83 // pred_check
          %p5040 = pneg %p351
        $region86: #{actor_forward.1} parent=83 // pred_check_branch
          %5042 = sbr.rel (%p5040) target = $region88
        $region87: #{actor_forward.1} parent=83 // pred_region
          %s5043 = sand.u32 %s336, 1
          %s5044 = scalar_lea.sflag [#allocation3], %s5043
          %s5045 = sand.u32 %s336, 1
          %s5046 = scalar_lea.vmem [#allocation2], %s5045
          %5047 = dma.done %s5044, 16
        $region88: #{actor_forward.1} parent=83 // pred_fallthru
          _
      $region84: #{actor_forward.1} parent=5 // pred_fallthru
        _
    $region6: #{actor_forward.1} parent=1 // loop_footer
      %s27 = sadd.s32 1, %s23
    $region7: #{actor_forward.1} parent=1 // loop_footer_branch
      %22 = sbr.rel target = $region3
    $region8: #{actor_forward.1} parent=1 // loop_exit
      _
    %5048 = vsyncpa [#allocation3], 1
    %s5049 = scalar_lea.sflag [#allocation3], 1
    %5050 = vsyncpa %s5049, 1

</llo_original>
